<compile_context>
chip_gen: v7x
topology: tpu7x:2x2x1
jax: 0.10.0
libtpu: 0.0.40
codegen_flags: <defaults>
</compile_context>

<pallas_src>
import functools
import math

import jax
import jax.numpy as jnp
from jax.experimental import pallas as pl
from jax.experimental.pallas import tpu as pltpu


LANE = 128  # TPU lane width; outputs are padded to this for lane-dense stores.


# ---------------------------------------------------------------------------
# Fused Pallas kernel: one grid step == one bag (batch element)
# ---------------------------------------------------------------------------

def _fused_mil_kernel(
    x_ref,                                   # (1, S, Din)  row 0 is a zero pad row
    w_enc_ref, b_enc_ref,                    # (Din, F), (1, F)
    w_proj_ref, b_proj_ref,                  # (F, E), (1, E)
    cls_ref, pos_ref,                        # (1, E), (S, E)
    ln1_g_ref, ln1_b_ref,
    wq_ref, bq_ref, wk_ref, bk_ref, wv_ref, bv_ref, wo_ref, bo_ref,
    ln2_g_ref, ln2_b_ref, w1_ref, b1_ref, w2_ref, b2_ref,
    lnf_g_ref, lnf_b_ref, wcls_ref, bcls_ref,  # classifier padded to LANE classes
    logits_ref,                              # (1, 1, LANE)
    attn_ref,                                # (1, H*S, LANE)
    ctx_scr,                                 # VMEM (S, E) scratch
    *, num_heads, head_dim, seq_len, eps,
):
    f32 = jnp.float32

    def layernorm(x, g_ref, b_ref):
        mu = jnp.mean(x, axis=-1, keepdims=True)
        xc = x - mu
        var = jnp.mean(xc * xc, axis=-1, keepdims=True)
        return xc * jax.lax.rsqrt(var + eps) * g_ref[...] + b_ref[...]

    # --- synthetic encoder (flatten + Linear + ReLU) + feature projector -------
    xp = x_ref[0].astype(f32)                                           # (S, Din)
    feats = jnp.maximum(
        jnp.dot(xp, w_enc_ref[...], preferred_element_type=f32) + b_enc_ref[...], 0.0)
    tok = jnp.maximum(
        jnp.dot(feats, w_proj_ref[...], preferred_element_type=f32) + b_proj_ref[...], 0.0)

    # --- [cls ; tokens] + sin-cos positional embedding (row 0 is the pad row) --
    row_ids = jax.lax.broadcasted_iota(jnp.int32, (seq_len, 1), 0)
    xseq = jnp.where(row_ids == 0, cls_ref[...], tok) + pos_ref[...]    # (S, E)

    # --- pre-norm multi-head self-attention, all heads in one invocation ------
    # TODO(synk): dropout (droprate_trans=0.1) omitted -- eval-mode forward.
    h = layernorm(xseq, ln1_g_ref, ln1_b_ref)
    q = jnp.dot(h, wq_ref[...], preferred_element_type=f32) + bq_ref[...]
    k = jnp.dot(h, wk_ref[...], preferred_element_type=f32) + bk_ref[...]
    v = jnp.dot(h, wv_ref[...], preferred_element_type=f32) + bv_ref[...]
    scale = 1.0 / math.sqrt(head_dim)

    # lane-dense zero fill of the attention slab, then per-head sub-writes
    attn_ref[...] = jnp.zeros(attn_ref.shape, attn_ref.dtype)
    for hd in range(num_heads):                                         # static unroll
        lo = hd * head_dim
        hi = lo + head_dim
        qh = q[:, lo:hi]
        kh = k[:, lo:hi]
        vh = v[:, lo:hi]
        s = jnp.dot(qh, kh.T, preferred_element_type=f32) * scale       # (S, S)
        s = s - jnp.max(s, axis=-1, keepdims=True)
        e = jnp.exp(s)
        p = e * pl.reciprocal(jnp.sum(e, axis=-1, keepdims=True), approx=True)
        attn_ref[0, hd * seq_len:(hd + 1) * seq_len, 0:seq_len] = p.astype(attn_ref.dtype)
        ctx_scr[:, lo:hi] = jnp.dot(p, vh, preferred_element_type=f32)

    x1 = xseq + jnp.dot(ctx_scr[...], wo_ref[...], preferred_element_type=f32) + bo_ref[...]

    # --- pre-norm MLP (GELU, tanh approximation) + residual --------------------
    # TODO(synk): PyTorch nn.GELU defaults to exact erf; tanh approx used here.
    h2 = layernorm(x1, ln2_g_ref, ln2_b_ref)
    m = jax.nn.gelu(jnp.dot(h2, w1_ref[...], preferred_element_type=f32) + b1_ref[...])
    x2 = x1 + jnp.dot(m, w2_ref[...], preferred_element_type=f32) + b2_ref[...]

    # --- final LayerNorm on the cls row only + classifier ----------------------
    cls_out = layernorm(x2[0:1, :], lnf_g_ref, lnf_b_ref)               # (1, E)
    logits_ref[0] = (jnp.dot(cls_out, wcls_ref[...], preferred_element_type=f32)
                     + bcls_ref[...]).astype(logits_ref.dtype)


# ---------------------------------------------------------------------------
# Parameter construction (deterministic, xavier_uniform like _init_weights)
# ---------------------------------------------------------------------------

def xavier_uniform(key, fan_in, fan_out):
    bound = math.sqrt(6.0 / (fan_in + fan_out))
    return jax.random.uniform(key, (fan_in, fan_out), jnp.float32, -bound, bound)


def sincos_pos_embed_1d(embed_dim, num_patches, cls_token=True):
    pos = jnp.arange(num_patches, dtype=jnp.float32)
    omega = jnp.arange(embed_dim // 2, dtype=jnp.float32) / (embed_dim / 2.0)
    omega = 1.0 / (10000.0 ** omega)
    out = pos[:, None] * omega[None, :]
    emb = jnp.concatenate([jnp.sin(out), jnp.cos(out)], axis=1)   # (num_patches, embed_dim)
    if cls_token:
        emb = jnp.concatenate([jnp.zeros((1, embed_dim), jnp.float32), emb], axis=0)
    return emb


def init_params(key, *, in_dim, feature_dim, embed_dim, num_patches, num_classes, mlp_ratio=4):
    keys = jax.random.split(key, 10)
    hidden = int(embed_dim * mlp_ratio)
    p = {
        # synthetic encoder (flatten + Linear + ReLU)
        "w_enc": xavier_uniform(keys[0], in_dim, feature_dim),
        "b_enc": jnp.zeros((feature_dim,), jnp.float32),
        # feature_projector
        "w_proj": xavier_uniform(keys[1], feature_dim, embed_dim),
        "b_proj": jnp.zeros((embed_dim,), jnp.float32),
        # cls token (zeros, as in the module) and sin-cos positional embedding
        "cls_token": jnp.zeros((1, 1, embed_dim), jnp.float32),
        "pos_embed": sincos_pos_embed_1d(embed_dim, num_patches, cls_token=True),
        # transformer encoder layer (pre-norm)
        "ln1_g": jnp.ones((embed_dim,), jnp.float32), "ln1_b": jnp.zeros((embed_dim,), jnp.float32),
        "wq": xavier_uniform(keys[2], embed_dim, embed_dim), "bq": jnp.zeros((embed_dim,), jnp.float32),
        "wk": xavier_uniform(keys[3], embed_dim, embed_dim), "bk": jnp.zeros((embed_dim,), jnp.float32),
        "wv": xavier_uniform(keys[4], embed_dim, embed_dim), "bv": jnp.zeros((embed_dim,), jnp.float32),
        "wo": xavier_uniform(keys[5], embed_dim, embed_dim), "bo": jnp.zeros((embed_dim,), jnp.float32),
        "ln2_g": jnp.ones((embed_dim,), jnp.float32), "ln2_b": jnp.zeros((embed_dim,), jnp.float32),
        "w1": xavier_uniform(keys[6], embed_dim, hidden), "b1": jnp.zeros((hidden,), jnp.float32),
        "w2": xavier_uniform(keys[7], hidden, embed_dim), "b2": jnp.zeros((embed_dim,), jnp.float32),
        # final norm + classifier
        "lnf_g": jnp.ones((embed_dim,), jnp.float32), "lnf_b": jnp.zeros((embed_dim,), jnp.float32),
        "w_cls": xavier_uniform(keys[8], embed_dim, num_classes),
        "b_cls": jnp.zeros((num_classes,), jnp.float32),
    }
    return p


# ---------------------------------------------------------------------------
# Forward pass (single fused pallas_call)
# ---------------------------------------------------------------------------

@functools.partial(jax.jit, static_argnames=("num_heads",))
def transformer_mil_forward(params, x, *, num_heads):
    """x: (B, N, C, H, W). Returns (logits (B, num_classes), attn_w (B, heads, N+1, N+1))."""
    B, N, C, H, W = x.shape
    E = params["cls_token"].shape[-1]
    Dh = E // num_heads
    S = N + 1
    Din = C * H * W
    num_classes = params["w_cls"].shape[1]

    # Input per bag, with a leading zero "dummy" row that becomes the cls slot
    # inside the kernel (avoids in-kernel concat; selected out via a row mask).
    x_in = jnp.pad(x.reshape(B, N, Din), ((0, 0), (1, 0), (0, 0)))      # (B, S, Din)

    # Lane-dense padded classifier; padding sliced off below.
    w_cls_p = jnp.pad(params["w_cls"], ((0, 0), (0, LANE - num_classes)))
    b_cls_p = jnp.pad(params["b_cls"], (0, LANE - num_classes)).reshape(1, LANE)

    def row(v):
        return v.reshape(1, -1)

    operands = [
        x_in,
        params["w_enc"], row(params["b_enc"]),
        params["w_proj"], row(params["b_proj"]),
        params["cls_token"].reshape(1, E), params["pos_embed"],
        row(params["ln1_g"]), row(params["ln1_b"]),
        params["wq"], row(params["bq"]),
        params["wk"], row(params["bk"]),
        params["wv"], row(params["bv"]),
        params["wo"], row(params["bo"]),
        row(params["ln2_g"]), row(params["ln2_b"]),
        params["w1"], row(params["b1"]),
        params["w2"], row(params["b2"]),
        row(params["lnf_g"]), row(params["lnf_b"]),
        w_cls_p, b_cls_p,
    ]

    def const_spec(shape):
        rank = len(shape)
        return pl.BlockSpec(shape, lambda b: (0,) * rank)

    in_specs = [pl.BlockSpec((1, S, Din), lambda b: (b, 0, 0))]
    in_specs += [const_spec(op.shape) for op in operands[1:]]

    kernel = functools.partial(
        _fused_mil_kernel,
        num_heads=num_heads, head_dim=Dh, seq_len=S, eps=1e-5)

    logits_pad, attn_pad = pl.pallas_call(
        kernel,
        out_shape=(jax.ShapeDtypeStruct((B, 1, LANE), jnp.float32),
                   jax.ShapeDtypeStruct((B, num_heads * S, LANE), jnp.float32)),
        grid=(B,),
        in_specs=in_specs,
        out_specs=(pl.BlockSpec((1, 1, LANE), lambda b: (b, 0, 0)),
                   pl.BlockSpec((1, num_heads * S, LANE), lambda b: (b, 0, 0))),
        scratch_shapes=[pltpu.VMEM((S, E), jnp.float32)],
        compiler_params=pltpu.CompilerParams(
            dimension_semantics=("parallel",)),
    )(*operands)

    logits = logits_pad[:, 0, :num_classes]                              # (B, num_classes)
    attn_w = attn_pad[:, :, :S].reshape(B, num_heads, S, S)              # (B, H, S, S)
    return logits, attn_w


# ---------------------------------------------------------------------------
# Main
# ---------------------------------------------------------------------------

if __name__ == "__main__":
    B, N, C, H, W = 2, 8, 3, 8, 8          # batch x instances x channels x height x width
    feature_dim = 64                        # encoder.feature_dim
    embed_dim = 48
    num_heads = 6
    num_classes = 2

    key = jax.random.PRNGKey(0)
    kx, kp = jax.random.split(key)
    x = jax.random.normal(kx, (B, N, C, H, W), jnp.float32)

    params = init_params(kp, in_dim=C * H * W, feature_dim=feature_dim,
                         embed_dim=embed_dim, num_patches=N, num_classes=num_classes)

    logits, attn_w = transformer_mil_forward(params, x, num_heads=num_heads)
    jax.block_until_ready((logits, attn_w))

    assert logits.shape == (B, num_classes)
    assert attn_w.shape == (B, num_heads, N + 1, N + 1)
    print("KERNEL_OK")
</pallas_src>

<mosaic_0001>
module attributes {stable_mosaic.version = 11 : i64} {
  func.func @_fused_mil_kernel(%arg0: i32, %arg1: memref<1x9x192xf32, #tpu.memory_space<vmem>>, %arg2: memref<192x64xf32, #tpu.memory_space<vmem>>, %arg3: memref<1x64xf32, #tpu.memory_space<vmem>>, %arg4: memref<64x48xf32, #tpu.memory_space<vmem>>, %arg5: memref<1x48xf32, #tpu.memory_space<vmem>>, %arg6: memref<1x48xf32, #tpu.memory_space<vmem>>, %arg7: memref<9x48xf32, #tpu.memory_space<vmem>>, %arg8: memref<1x48xf32, #tpu.memory_space<vmem>>, %arg9: memref<1x48xf32, #tpu.memory_space<vmem>>, %arg10: memref<48x48xf32, #tpu.memory_space<vmem>>, %arg11: memref<1x48xf32, #tpu.memory_space<vmem>>, %arg12: memref<48x48xf32, #tpu.memory_space<vmem>>, %arg13: memref<1x48xf32, #tpu.memory_space<vmem>>, %arg14: memref<48x48xf32, #tpu.memory_space<vmem>>, %arg15: memref<1x48xf32, #tpu.memory_space<vmem>>, %arg16: memref<48x48xf32, #tpu.memory_space<vmem>>, %arg17: memref<1x48xf32, #tpu.memory_space<vmem>>, %arg18: memref<1x48xf32, #tpu.memory_space<vmem>>, %arg19: memref<1x48xf32, #tpu.memory_space<vmem>>, %arg20: memref<48x192xf32, #tpu.memory_space<vmem>>, %arg21: memref<1x192xf32, #tpu.memory_space<vmem>>, %arg22: memref<192x48xf32, #tpu.memory_space<vmem>>, %arg23: memref<1x48xf32, #tpu.memory_space<vmem>>, %arg24: memref<1x48xf32, #tpu.memory_space<vmem>>, %arg25: memref<1x48xf32, #tpu.memory_space<vmem>>, %arg26: memref<48x128xf32, #tpu.memory_space<vmem>>, %arg27: memref<1x128xf32, #tpu.memory_space<vmem>>, %arg28: memref<1x1x128xf32, #tpu.memory_space<vmem>>, %arg29: memref<1x54x128xf32, #tpu.memory_space<vmem>>, %arg30: memref<9x48xf32, #tpu.memory_space<vmem>>) attributes {dimension_semantics = [#tpu.dimension_semantics<parallel>], iteration_bounds = array<i64: 2>, scalar_prefetch = 0 : i64, scratch_operands = 1 : i64, tpu.core_type = #tpu.core_type<tc>, window_params = [{transform_indices = @transform_0, window_bounds = array<i64: 1, 9, 192>}, {pipeline_mode = #tpu.pipeline_mode<synchronous>, transform_indices = @transform_1, window_bounds = array<i64: 192, 64>}, {pipeline_mode = #tpu.pipeline_mode<synchronous>, transform_indices = @transform_2, window_bounds = array<i64: 1, 64>}, {pipeline_mode = #tpu.pipeline_mode<synchronous>, transform_indices = @transform_3, window_bounds = array<i64: 64, 48>}, {pipeline_mode = #tpu.pipeline_mode<synchronous>, transform_indices = @transform_4, window_bounds = array<i64: 1, 48>}, {pipeline_mode = #tpu.pipeline_mode<synchronous>, transform_indices = @transform_5, window_bounds = array<i64: 1, 48>}, {pipeline_mode = #tpu.pipeline_mode<synchronous>, transform_indices = @transform_6, window_bounds = array<i64: 9, 48>}, {pipeline_mode = #tpu.pipeline_mode<synchronous>, transform_indices = @transform_7, window_bounds = array<i64: 1, 48>}, {pipeline_mode = #tpu.pipeline_mode<synchronous>, transform_indices = @transform_8, window_bounds = array<i64: 1, 48>}, {pipeline_mode = #tpu.pipeline_mode<synchronous>, transform_indices = @transform_9, window_bounds = array<i64: 48, 48>}, {pipeline_mode = #tpu.pipeline_mode<synchronous>, transform_indices = @transform_10, window_bounds = array<i64: 1, 48>}, {pipeline_mode = #tpu.pipeline_mode<synchronous>, transform_indices = @transform_11, window_bounds = array<i64: 48, 48>}, {pipeline_mode = #tpu.pipeline_mode<synchronous>, transform_indices = @transform_12, window_bounds = array<i64: 1, 48>}, {pipeline_mode = #tpu.pipeline_mode<synchronous>, transform_indices = @transform_13, window_bounds = array<i64: 48, 48>}, {pipeline_mode = #tpu.pipeline_mode<synchronous>, transform_indices = @transform_14, window_bounds = array<i64: 1, 48>}, {pipeline_mode = #tpu.pipeline_mode<synchronous>, transform_indices = @transform_15, window_bounds = array<i64: 48, 48>}, {pipeline_mode = #tpu.pipeline_mode<synchronous>, transform_indices = @transform_16, window_bounds = array<i64: 1, 48>}, {pipeline_mode = #tpu.pipeline_mode<synchronous>, transform_indices = @transform_17, window_bounds = array<i64: 1, 48>}, {pipeline_mode = #tpu.pipeline_mode<synchronous>, transform_indices = @transform_18, window_bounds = array<i64: 1, 48>}, {pipeline_mode = #tpu.pipeline_mode<synchronous>, transform_indices = @transform_19, window_bounds = array<i64: 48, 192>}, {pipeline_mode = #tpu.pipeline_mode<synchronous>, transform_indices = @transform_20, window_bounds = array<i64: 1, 192>}, {pipeline_mode = #tpu.pipeline_mode<synchronous>, transform_indices = @transform_21, window_bounds = array<i64: 192, 48>}, {pipeline_mode = #tpu.pipeline_mode<synchronous>, transform_indices = @transform_22, window_bounds = array<i64: 1, 48>}, {pipeline_mode = #tpu.pipeline_mode<synchronous>, transform_indices = @transform_23, window_bounds = array<i64: 1, 48>}, {pipeline_mode = #tpu.pipeline_mode<synchronous>, transform_indices = @transform_24, window_bounds = array<i64: 1, 48>}, {pipeline_mode = #tpu.pipeline_mode<synchronous>, transform_indices = @transform_25, window_bounds = array<i64: 48, 128>}, {pipeline_mode = #tpu.pipeline_mode<synchronous>, transform_indices = @transform_26, window_bounds = array<i64: 1, 128>}, {transform_indices = @transform_27, window_bounds = array<i64: 1, 1, 128>}, {transform_indices = @transform_28, window_bounds = array<i64: 1, 54, 128>}]} {
    %c0 = arith.constant 0 : index
    %c0_0 = arith.constant 0 : index
    %c0_1 = arith.constant 0 : index
    %0 = vector.load %arg1[%c0, %c0_0, %c0_1] : memref<1x9x192xf32, #tpu.memory_space<vmem>>, vector<1x9x192xf32>
    %1 = vector.shape_cast %0 : vector<1x9x192xf32> to vector<9x192xf32>
    %c0_2 = arith.constant 0 : index
    %c0_3 = arith.constant 0 : index
    %2 = vector.load %arg2[%c0_2, %c0_3] : memref<192x64xf32, #tpu.memory_space<vmem>>, vector<192x64xf32>
    %cst = arith.constant dense<0.000000e+00> : vector<9x64xf32>
    %3 = tpu.matmul %1, %2, %cst {dimension_numbers = #tpu.dot_dimension_numbers<[1], [0], [0], [1], [0, 0, 1, 1], [], []>} : vector<9x192xf32>, vector<192x64xf32>, vector<9x64xf32> -> vector<9x64xf32>
    %c0_4 = arith.constant 0 : index
    %c0_5 = arith.constant 0 : index
    %4 = vector.load %arg3[%c0_4, %c0_5] : memref<1x64xf32, #tpu.memory_space<vmem>>, vector<1x64xf32>
    %5 = vector.broadcast %4 : vector<1x64xf32> to vector<9x64xf32>
    %6 = arith.addf %3, %5 : vector<9x64xf32>
    %cst_6 = arith.constant 0.000000e+00 : f32
    %7 = vector.broadcast %cst_6 : f32 to vector<9x64xf32>
    %8 = arith.maximumf %6, %7 : vector<9x64xf32>
    %c0_7 = arith.constant 0 : index
    %c0_8 = arith.constant 0 : index
    %9 = vector.load %arg4[%c0_7, %c0_8] : memref<64x48xf32, #tpu.memory_space<vmem>>, vector<64x48xf32>
    %cst_9 = arith.constant dense<0.000000e+00> : vector<9x48xf32>
    %10 = tpu.matmul %8, %9, %cst_9 {dimension_numbers = #tpu.dot_dimension_numbers<[1], [0], [0], [1], [0, 0, 1, 1], [], []>} : vector<9x64xf32>, vector<64x48xf32>, vector<9x48xf32> -> vector<9x48xf32>
    %c0_10 = arith.constant 0 : index
    %c0_11 = arith.constant 0 : index
    %11 = vector.load %arg5[%c0_10, %c0_11] : memref<1x48xf32, #tpu.memory_space<vmem>>, vector<1x48xf32>
    %12 = vector.broadcast %11 : vector<1x48xf32> to vector<9x48xf32>
    %13 = arith.addf %10, %12 : vector<9x48xf32>
    %cst_12 = arith.constant 0.000000e+00 : f32
    %14 = vector.broadcast %cst_12 : f32 to vector<9x48xf32>
    %15 = arith.maximumf %13, %14 : vector<9x48xf32>
    %16 = tpu.iota {dimensions = array<i32: 0>} : vector<9x1xi32>
    %c0_i32 = arith.constant 0 : i32
    %17 = vector.broadcast %c0_i32 : i32 to vector<9x1xi32>
    %18 = arith.cmpi eq, %16, %17 : vector<9x1xi32>
    %c0_13 = arith.constant 0 : index
    %c0_14 = arith.constant 0 : index
    %19 = vector.load %arg6[%c0_13, %c0_14] : memref<1x48xf32, #tpu.memory_space<vmem>>, vector<1x48xf32>
    %20 = vector.shape_cast %18 : vector<9x1xi1> to vector<9x1xi1>
    %21 = vector.broadcast %20 : vector<9x1xi1> to vector<9x48xi1>
    %22 = vector.shape_cast %19 : vector<1x48xf32> to vector<1x48xf32>
    %23 = vector.broadcast %22 : vector<1x48xf32> to vector<9x48xf32>
    %24 = arith.select %21, %23, %15 : vector<9x48xi1>, vector<9x48xf32>
    %c0_15 = arith.constant 0 : index
    %c0_16 = arith.constant 0 : index
    %25 = vector.load %arg7[%c0_15, %c0_16] : memref<9x48xf32, #tpu.memory_space<vmem>>, vector<9x48xf32>
    %26 = arith.addf %24, %25 : vector<9x48xf32>
    %cst_17 = arith.constant dense<0.000000e+00> : vector<9xf32>
    %27 = vector.multi_reduction <add>, %26, %cst_17 [1] : vector<9x48xf32> to vector<9xf32>
    %28 = vector.shape_cast %27 : vector<9xf32> to vector<9x1xf32>
    %cst_18 = arith.constant 4.800000e+01 : f32
    %29 = vector.broadcast %cst_18 : f32 to vector<9x1xf32>
    %30 = arith.divf %28, %29 : vector<9x1xf32>
    %31 = vector.broadcast %30 : vector<9x1xf32> to vector<9x48xf32>
    %32 = arith.subf %26, %31 : vector<9x48xf32>
    %33 = arith.mulf %32, %32 : vector<9x48xf32>
    %cst_19 = arith.constant dense<0.000000e+00> : vector<9xf32>
    %34 = vector.multi_reduction <add>, %33, %cst_19 [1] : vector<9x48xf32> to vector<9xf32>
    %35 = vector.shape_cast %34 : vector<9xf32> to vector<9x1xf32>
    %cst_20 = arith.constant 4.800000e+01 : f32
    %36 = vector.broadcast %cst_20 : f32 to vector<9x1xf32>
    %37 = arith.divf %35, %36 : vector<9x1xf32>
    %cst_21 = arith.constant 9.99999974E-6 : f32
    %38 = vector.broadcast %cst_21 : f32 to vector<9x1xf32>
    %39 = arith.addf %37, %38 : vector<9x1xf32>
    %40 = math.rsqrt %39 : vector<9x1xf32>
    %41 = vector.broadcast %40 : vector<9x1xf32> to vector<9x48xf32>
    %42 = arith.mulf %32, %41 : vector<9x48xf32>
    %c0_22 = arith.constant 0 : index
    %c0_23 = arith.constant 0 : index
    %43 = vector.load %arg8[%c0_22, %c0_23] : memref<1x48xf32, #tpu.memory_space<vmem>>, vector<1x48xf32>
    %44 = vector.broadcast %43 : vector<1x48xf32> to vector<9x48xf32>
    %45 = arith.mulf %42, %44 : vector<9x48xf32>
    %c0_24 = arith.constant 0 : index
    %c0_25 = arith.constant 0 : index
    %46 = vector.load %arg9[%c0_24, %c0_25] : memref<1x48xf32, #tpu.memory_space<vmem>>, vector<1x48xf32>
    %47 = vector.broadcast %46 : vector<1x48xf32> to vector<9x48xf32>
    %48 = arith.addf %45, %47 : vector<9x48xf32>
    %c0_26 = arith.constant 0 : index
    %c0_27 = arith.constant 0 : index
    %49 = vector.load %arg10[%c0_26, %c0_27] : memref<48x48xf32, #tpu.memory_space<vmem>>, vector<48x48xf32>
    %cst_28 = arith.constant dense<0.000000e+00> : vector<9x48xf32>
    %50 = tpu.matmul %48, %49, %cst_28 {dimension_numbers = #tpu.dot_dimension_numbers<[1], [0], [0], [1], [0, 0, 1, 1], [], []>} : vector<9x48xf32>, vector<48x48xf32>, vector<9x48xf32> -> vector<9x48xf32>
    %c0_29 = arith.constant 0 : index
    %c0_30 = arith.constant 0 : index
    %51 = vector.load %arg11[%c0_29, %c0_30] : memref<1x48xf32, #tpu.memory_space<vmem>>, vector<1x48xf32>
    %52 = vector.broadcast %51 : vector<1x48xf32> to vector<9x48xf32>
    %53 = arith.addf %50, %52 : vector<9x48xf32>
    %c0_31 = arith.constant 0 : index
    %c0_32 = arith.constant 0 : index
    %54 = vector.load %arg12[%c0_31, %c0_32] : memref<48x48xf32, #tpu.memory_space<vmem>>, vector<48x48xf32>
    %cst_33 = arith.constant dense<0.000000e+00> : vector<9x48xf32>
    %55 = tpu.matmul %48, %54, %cst_33 {dimension_numbers = #tpu.dot_dimension_numbers<[1], [0], [0], [1], [0, 0, 1, 1], [], []>} : vector<9x48xf32>, vector<48x48xf32>, vector<9x48xf32> -> vector<9x48xf32>
    %c0_34 = arith.constant 0 : index
    %c0_35 = arith.constant 0 : index
    %56 = vector.load %arg13[%c0_34, %c0_35] : memref<1x48xf32, #tpu.memory_space<vmem>>, vector<1x48xf32>
    %57 = vector.broadcast %56 : vector<1x48xf32> to vector<9x48xf32>
    %58 = arith.addf %55, %57 : vector<9x48xf32>
    %c0_36 = arith.constant 0 : index
    %c0_37 = arith.constant 0 : index
    %59 = vector.load %arg14[%c0_36, %c0_37] : memref<48x48xf32, #tpu.memory_space<vmem>>, vector<48x48xf32>
    %cst_38 = arith.constant dense<0.000000e+00> : vector<9x48xf32>
    %60 = tpu.matmul %48, %59, %cst_38 {dimension_numbers = #tpu.dot_dimension_numbers<[1], [0], [0], [1], [0, 0, 1, 1], [], []>} : vector<9x48xf32>, vector<48x48xf32>, vector<9x48xf32> -> vector<9x48xf32>
    %c0_39 = arith.constant 0 : index
    %c0_40 = arith.constant 0 : index
    %61 = vector.load %arg15[%c0_39, %c0_40] : memref<1x48xf32, #tpu.memory_space<vmem>>, vector<1x48xf32>
    %62 = vector.broadcast %61 : vector<1x48xf32> to vector<9x48xf32>
    %63 = arith.addf %60, %62 : vector<9x48xf32>
    %cst_41 = arith.constant 0.000000e+00 : f32
    %64 = vector.broadcast %cst_41 : f32 to vector<1x54x128xf32>
    %c0_42 = arith.constant 0 : index
    %c0_43 = arith.constant 0 : index
    %c0_44 = arith.constant 0 : index
    %65 = vector.load %arg29[%c0_42, %c0_43, %c0_44] : memref<1x54x128xf32, #tpu.memory_space<vmem>>, vector<1x54x128xf32>
    tpu.vector_store %arg29[%c0_42, %c0_43, %c0_44], %64 {strides = array<i32>} : memref<1x54x128xf32, #tpu.memory_space<vmem>>, vector<1x54x128xf32>,
    %66 = vector.extract_strided_slice %53 {offsets = [0, 0], sizes = [9, 8], strides = [1, 1]} : vector<9x48xf32> to vector<9x8xf32>
    %67 = vector.extract_strided_slice %58 {offsets = [0, 0], sizes = [9, 8], strides = [1, 1]} : vector<9x48xf32> to vector<9x8xf32>
    %68 = vector.extract_strided_slice %63 {offsets = [0, 0], sizes = [9, 8], strides = [1, 1]} : vector<9x48xf32> to vector<9x8xf32>
    %69 = tpu.transpose %67, [1, 0] : vector<9x8xf32> -> vector<8x9xf32>
    %cst_45 = arith.constant dense<0.000000e+00> : vector<9x9xf32>
    %70 = tpu.matmul %66, %69, %cst_45 {dimension_numbers = #tpu.dot_dimension_numbers<[1], [0], [0], [1], [0, 0, 1, 1], [], []>} : vector<9x8xf32>, vector<8x9xf32>, vector<9x9xf32> -> vector<9x9xf32>
    %cst_46 = arith.constant 0.353553385 : f32
    %71 = vector.broadcast %cst_46 : f32 to vector<9x9xf32>
    %72 = arith.mulf %70, %71 : vector<9x9xf32>
    %cst_47 = arith.constant dense<0xFF800000> : vector<9xf32>
    %73 = vector.multi_reduction <maximumf>, %72, %cst_47 [1] : vector<9x9xf32> to vector<9xf32>
    %74 = vector.shape_cast %73 : vector<9xf32> to vector<9x1xf32>
    %75 = vector.broadcast %74 : vector<9x1xf32> to vector<9x9xf32>
    %76 = arith.subf %72, %75 : vector<9x9xf32>
    %77 = math.exp %76 : vector<9x9xf32>
    %cst_48 = arith.constant dense<0.000000e+00> : vector<9xf32>
    %78 = vector.multi_reduction <add>, %77, %cst_48 [1] : vector<9x9xf32> to vector<9xf32>
    %79 = vector.shape_cast %78 : vector<9xf32> to vector<9x1xf32>
    %80 = tpu.reciprocal %79 {approx = true} : vector<9x1xf32> -> vector<9x1xf32>
    %81 = vector.broadcast %80 : vector<9x1xf32> to vector<9x9xf32>
    %82 = arith.mulf %77, %81 : vector<9x9xf32>
    %c0_49 = arith.constant 0 : index
    %c0_50 = arith.constant 0 : index
    %c0_51 = arith.constant 0 : index
    %83 = vector.load %arg29[%c0_49, %c0_50, %c0_51] : memref<1x54x128xf32, #tpu.memory_space<vmem>>, vector<1x9x9xf32>
    %84 = vector.shape_cast %83 : vector<1x9x9xf32> to vector<9x9xf32>
    %85 = vector.shape_cast %82 : vector<9x9xf32> to vector<1x9x9xf32>
    tpu.vector_store %arg29[%c0_49, %c0_50, %c0_51], %85 {strides = array<i32>} : memref<1x54x128xf32, #tpu.memory_space<vmem>>, vector<1x9x9xf32>,
    %cst_52 = arith.constant dense<0.000000e+00> : vector<9x8xf32>
    %86 = tpu.matmul %82, %68, %cst_52 {dimension_numbers = #tpu.dot_dimension_numbers<[1], [0], [0], [1], [0, 0, 1, 1], [], []>} : vector<9x9xf32>, vector<9x8xf32>, vector<9x8xf32> -> vector<9x8xf32>
    %c0_53 = arith.constant 0 : index
    %c0_54 = arith.constant 0 : index
    %87 = vector.load %arg30[%c0_53, %c0_54] : memref<9x48xf32, #tpu.memory_space<vmem>>, vector<9x8xf32>
    tpu.vector_store %arg30[%c0_53, %c0_54], %86 {strides = array<i32>} : memref<9x48xf32, #tpu.memory_space<vmem>>, vector<9x8xf32>,
    %88 = vector.extract_strided_slice %53 {offsets = [0, 8], sizes = [9, 8], strides = [1, 1]} : vector<9x48xf32> to vector<9x8xf32>
    %89 = vector.extract_strided_slice %58 {offsets = [0, 8], sizes = [9, 8], strides = [1, 1]} : vector<9x48xf32> to vector<9x8xf32>
    %90 = vector.extract_strided_slice %63 {offsets = [0, 8], sizes = [9, 8], strides = [1, 1]} : vector<9x48xf32> to vector<9x8xf32>
    %91 = tpu.transpose %89, [1, 0] : vector<9x8xf32> -> vector<8x9xf32>
    %cst_55 = arith.constant dense<0.000000e+00> : vector<9x9xf32>
    %92 = tpu.matmul %88, %91, %cst_55 {dimension_numbers = #tpu.dot_dimension_numbers<[1], [0], [0], [1], [0, 0, 1, 1], [], []>} : vector<9x8xf32>, vector<8x9xf32>, vector<9x9xf32> -> vector<9x9xf32>
    %cst_56 = arith.constant 0.353553385 : f32
    %93 = vector.broadcast %cst_56 : f32 to vector<9x9xf32>
    %94 = arith.mulf %92, %93 : vector<9x9xf32>
    %cst_57 = arith.constant dense<0xFF800000> : vector<9xf32>
    %95 = vector.multi_reduction <maximumf>, %94, %cst_57 [1] : vector<9x9xf32> to vector<9xf32>
    %96 = vector.shape_cast %95 : vector<9xf32> to vector<9x1xf32>
    %97 = vector.broadcast %96 : vector<9x1xf32> to vector<9x9xf32>
    %98 = arith.subf %94, %97 : vector<9x9xf32>
    %99 = math.exp %98 : vector<9x9xf32>
    %cst_58 = arith.constant dense<0.000000e+00> : vector<9xf32>
    %100 = vector.multi_reduction <add>, %99, %cst_58 [1] : vector<9x9xf32> to vector<9xf32>
    %101 = vector.shape_cast %100 : vector<9xf32> to vector<9x1xf32>
    %102 = tpu.reciprocal %101 {approx = true} : vector<9x1xf32> -> vector<9x1xf32>
    %103 = vector.broadcast %102 : vector<9x1xf32> to vector<9x9xf32>
    %104 = arith.mulf %99, %103 : vector<9x9xf32>
    %c0_59 = arith.constant 0 : index
    %c9 = arith.constant 9 : index
    %c0_60 = arith.constant 0 : index
    %105 = vector.load %arg29[%c0_59, %c9, %c0_60] : memref<1x54x128xf32, #tpu.memory_space<vmem>>, vector<1x9x9xf32>
    %106 = vector.shape_cast %105 : vector<1x9x9xf32> to vector<9x9xf32>
    %107 = vector.shape_cast %104 : vector<9x9xf32> to vector<1x9x9xf32>
    tpu.vector_store %arg29[%c0_59, %c9, %c0_60], %107 {strides = array<i32>} : memref<1x54x128xf32, #tpu.memory_space<vmem>>, vector<1x9x9xf32>,
    %cst_61 = arith.constant dense<0.000000e+00> : vector<9x8xf32>
    %108 = tpu.matmul %104, %90, %cst_61 {dimension_numbers = #tpu.dot_dimension_numbers<[1], [0], [0], [1], [0, 0, 1, 1], [], []>} : vector<9x9xf32>, vector<9x8xf32>, vector<9x8xf32> -> vector<9x8xf32>
    %c0_62 = arith.constant 0 : index
    %c8 = arith.constant 8 : index
    %109 = vector.load %arg30[%c0_62, %c8] : memref<9x48xf32, #tpu.memory_space<vmem>>, vector<9x8xf32>
    tpu.vector_store %arg30[%c0_62, %c8], %108 {strides = array<i32>} : memref<9x48xf32, #tpu.memory_space<vmem>>, vector<9x8xf32>,
    %110 = vector.extract_strided_slice %53 {offsets = [0, 16], sizes = [9, 8], strides = [1, 1]} : vector<9x48xf32> to vector<9x8xf32>
    %111 = vector.extract_strided_slice %58 {offsets = [0, 16], sizes = [9, 8], strides = [1, 1]} : vector<9x48xf32> to vector<9x8xf32>
    %112 = vector.extract_strided_slice %63 {offsets = [0, 16], sizes = [9, 8], strides = [1, 1]} : vector<9x48xf32> to vector<9x8xf32>
    %113 = tpu.transpose %111, [1, 0] : vector<9x8xf32> -> vector<8x9xf32>
    %cst_63 = arith.constant dense<0.000000e+00> : vector<9x9xf32>
    %114 = tpu.matmul %110, %113, %cst_63 {dimension_numbers = #tpu.dot_dimension_numbers<[1], [0], [0], [1], [0, 0, 1, 1], [], []>} : vector<9x8xf32>, vector<8x9xf32>, vector<9x9xf32> -> vector<9x9xf32>
    %cst_64 = arith.constant 0.353553385 : f32
    %115 = vector.broadcast %cst_64 : f32 to vector<9x9xf32>
    %116 = arith.mulf %114, %115 : vector<9x9xf32>
    %cst_65 = arith.constant dense<0xFF800000> : vector<9xf32>
    %117 = vector.multi_reduction <maximumf>, %116, %cst_65 [1] : vector<9x9xf32> to vector<9xf32>
    %118 = vector.shape_cast %117 : vector<9xf32> to vector<9x1xf32>
    %119 = vector.broadcast %118 : vector<9x1xf32> to vector<9x9xf32>
    %120 = arith.subf %116, %119 : vector<9x9xf32>
    %121 = math.exp %120 : vector<9x9xf32>
    %cst_66 = arith.constant dense<0.000000e+00> : vector<9xf32>
    %122 = vector.multi_reduction <add>, %121, %cst_66 [1] : vector<9x9xf32> to vector<9xf32>
    %123 = vector.shape_cast %122 : vector<9xf32> to vector<9x1xf32>
    %124 = tpu.reciprocal %123 {approx = true} : vector<9x1xf32> -> vector<9x1xf32>
    %125 = vector.broadcast %124 : vector<9x1xf32> to vector<9x9xf32>
    %126 = arith.mulf %121, %125 : vector<9x9xf32>
    %c0_67 = arith.constant 0 : index
    %c18 = arith.constant 18 : index
    %c0_68 = arith.constant 0 : index
    %127 = vector.load %arg29[%c0_67, %c18, %c0_68] : memref<1x54x128xf32, #tpu.memory_space<vmem>>, vector<1x9x9xf32>
    %128 = vector.shape_cast %127 : vector<1x9x9xf32> to vector<9x9xf32>
    %129 = vector.shape_cast %126 : vector<9x9xf32> to vector<1x9x9xf32>
    tpu.vector_store %arg29[%c0_67, %c18, %c0_68], %129 {strides = array<i32>} : memref<1x54x128xf32, #tpu.memory_space<vmem>>, vector<1x9x9xf32>,
    %cst_69 = arith.constant dense<0.000000e+00> : vector<9x8xf32>
    %130 = tpu.matmul %126, %112, %cst_69 {dimension_numbers = #tpu.dot_dimension_numbers<[1], [0], [0], [1], [0, 0, 1, 1], [], []>} : vector<9x9xf32>, vector<9x8xf32>, vector<9x8xf32> -> vector<9x8xf32>
    %c0_70 = arith.constant 0 : index
    %c16 = arith.constant 16 : index
    %131 = vector.load %arg30[%c0_70, %c16] : memref<9x48xf32, #tpu.memory_space<vmem>>, vector<9x8xf32>
    tpu.vector_store %arg30[%c0_70, %c16], %130 {strides = array<i32>} : memref<9x48xf32, #tpu.memory_space<vmem>>, vector<9x8xf32>,
    %132 = vector.extract_strided_slice %53 {offsets = [0, 24], sizes = [9, 8], strides = [1, 1]} : vector<9x48xf32> to vector<9x8xf32>
    %133 = vector.extract_strided_slice %58 {offsets = [0, 24], sizes = [9, 8], strides = [1, 1]} : vector<9x48xf32> to vector<9x8xf32>
    %134 = vector.extract_strided_slice %63 {offsets = [0, 24], sizes = [9, 8], strides = [1, 1]} : vector<9x48xf32> to vector<9x8xf32>
    %135 = tpu.transpose %133, [1, 0] : vector<9x8xf32> -> vector<8x9xf32>
    %cst_71 = arith.constant dense<0.000000e+00> : vector<9x9xf32>
    %136 = tpu.matmul %132, %135, %cst_71 {dimension_numbers = #tpu.dot_dimension_numbers<[1], [0], [0], [1], [0, 0, 1, 1], [], []>} : vector<9x8xf32>, vector<8x9xf32>, vector<9x9xf32> -> vector<9x9xf32>
    %cst_72 = arith.constant 0.353553385 : f32
    %137 = vector.broadcast %cst_72 : f32 to vector<9x9xf32>
    %138 = arith.mulf %136, %137 : vector<9x9xf32>
    %cst_73 = arith.constant dense<0xFF800000> : vector<9xf32>
    %139 = vector.multi_reduction <maximumf>, %138, %cst_73 [1] : vector<9x9xf32> to vector<9xf32>
    %140 = vector.shape_cast %139 : vector<9xf32> to vector<9x1xf32>
    %141 = vector.broadcast %140 : vector<9x1xf32> to vector<9x9xf32>
    %142 = arith.subf %138, %141 : vector<9x9xf32>
    %143 = math.exp %142 : vector<9x9xf32>
    %cst_74 = arith.constant dense<0.000000e+00> : vector<9xf32>
    %144 = vector.multi_reduction <add>, %143, %cst_74 [1] : vector<9x9xf32> to vector<9xf32>
    %145 = vector.shape_cast %144 : vector<9xf32> to vector<9x1xf32>
    %146 = tpu.reciprocal %145 {approx = true} : vector<9x1xf32> -> vector<9x1xf32>
    %147 = vector.broadcast %146 : vector<9x1xf32> to vector<9x9xf32>
    %148 = arith.mulf %143, %147 : vector<9x9xf32>
    %c0_75 = arith.constant 0 : index
    %c27 = arith.constant 27 : index
    %c0_76 = arith.constant 0 : index
    %149 = vector.load %arg29[%c0_75, %c27, %c0_76] : memref<1x54x128xf32, #tpu.memory_space<vmem>>, vector<1x9x9xf32>
    %150 = vector.shape_cast %149 : vector<1x9x9xf32> to vector<9x9xf32>
    %151 = vector.shape_cast %148 : vector<9x9xf32> to vector<1x9x9xf32>
    tpu.vector_store %arg29[%c0_75, %c27, %c0_76], %151 {strides = array<i32>} : memref<1x54x128xf32, #tpu.memory_space<vmem>>, vector<1x9x9xf32>,
    %cst_77 = arith.constant dense<0.000000e+00> : vector<9x8xf32>
    %152 = tpu.matmul %148, %134, %cst_77 {dimension_numbers = #tpu.dot_dimension_numbers<[1], [0], [0], [1], [0, 0, 1, 1], [], []>} : vector<9x9xf32>, vector<9x8xf32>, vector<9x8xf32> -> vector<9x8xf32>
    %c0_78 = arith.constant 0 : index
    %c24 = arith.constant 24 : index
    %153 = vector.load %arg30[%c0_78, %c24] : memref<9x48xf32, #tpu.memory_space<vmem>>, vector<9x8xf32>
    tpu.vector_store %arg30[%c0_78, %c24], %152 {strides = array<i32>} : memref<9x48xf32, #tpu.memory_space<vmem>>, vector<9x8xf32>,
    %154 = vector.extract_strided_slice %53 {offsets = [0, 32], sizes = [9, 8], strides = [1, 1]} : vector<9x48xf32> to vector<9x8xf32>
    %155 = vector.extract_strided_slice %58 {offsets = [0, 32], sizes = [9, 8], strides = [1, 1]} : vector<9x48xf32> to vector<9x8xf32>
    %156 = vector.extract_strided_slice %63 {offsets = [0, 32], sizes = [9, 8], strides = [1, 1]} : vector<9x48xf32> to vector<9x8xf32>
    %157 = tpu.transpose %155, [1, 0] : vector<9x8xf32> -> vector<8x9xf32>
    %cst_79 = arith.constant dense<0.000000e+00> : vector<9x9xf32>
    %158 = tpu.matmul %154, %157, %cst_79 {dimension_numbers = #tpu.dot_dimension_numbers<[1], [0], [0], [1], [0, 0, 1, 1], [], []>} : vector<9x8xf32>, vector<8x9xf32>, vector<9x9xf32> -> vector<9x9xf32>
    %cst_80 = arith.constant 0.353553385 : f32
    %159 = vector.broadcast %cst_80 : f32 to vector<9x9xf32>
    %160 = arith.mulf %158, %159 : vector<9x9xf32>
    %cst_81 = arith.constant dense<0xFF800000> : vector<9xf32>
    %161 = vector.multi_reduction <maximumf>, %160, %cst_81 [1] : vector<9x9xf32> to vector<9xf32>
    %162 = vector.shape_cast %161 : vector<9xf32> to vector<9x1xf32>
    %163 = vector.broadcast %162 : vector<9x1xf32> to vector<9x9xf32>
    %164 = arith.subf %160, %163 : vector<9x9xf32>
    %165 = math.exp %164 : vector<9x9xf32>
    %cst_82 = arith.constant dense<0.000000e+00> : vector<9xf32>
    %166 = vector.multi_reduction <add>, %165, %cst_82 [1] : vector<9x9xf32> to vector<9xf32>
    %167 = vector.shape_cast %166 : vector<9xf32> to vector<9x1xf32>
    %168 = tpu.reciprocal %167 {approx = true} : vector<9x1xf32> -> vector<9x1xf32>
    %169 = vector.broadcast %168 : vector<9x1xf32> to vector<9x9xf32>
    %170 = arith.mulf %165, %169 : vector<9x9xf32>
    %c0_83 = arith.constant 0 : index
    %c36 = arith.constant 36 : index
    %c0_84 = arith.constant 0 : index
    %171 = vector.load %arg29[%c0_83, %c36, %c0_84] : memref<1x54x128xf32, #tpu.memory_space<vmem>>, vector<1x9x9xf32>
    %172 = vector.shape_cast %171 : vector<1x9x9xf32> to vector<9x9xf32>
    %173 = vector.shape_cast %170 : vector<9x9xf32> to vector<1x9x9xf32>
    tpu.vector_store %arg29[%c0_83, %c36, %c0_84], %173 {strides = array<i32>} : memref<1x54x128xf32, #tpu.memory_space<vmem>>, vector<1x9x9xf32>,
    %cst_85 = arith.constant dense<0.000000e+00> : vector<9x8xf32>
    %174 = tpu.matmul %170, %156, %cst_85 {dimension_numbers = #tpu.dot_dimension_numbers<[1], [0], [0], [1], [0, 0, 1, 1], [], []>} : vector<9x9xf32>, vector<9x8xf32>, vector<9x8xf32> -> vector<9x8xf32>
    %c0_86 = arith.constant 0 : index
    %c32 = arith.constant 32 : index
    %175 = vector.load %arg30[%c0_86, %c32] : memref<9x48xf32, #tpu.memory_space<vmem>>, vector<9x8xf32>
    tpu.vector_store %arg30[%c0_86, %c32], %174 {strides = array<i32>} : memref<9x48xf32, #tpu.memory_space<vmem>>, vector<9x8xf32>,
    %176 = vector.extract_strided_slice %53 {offsets = [0, 40], sizes = [9, 8], strides = [1, 1]} : vector<9x48xf32> to vector<9x8xf32>
    %177 = vector.extract_strided_slice %58 {offsets = [0, 40], sizes = [9, 8], strides = [1, 1]} : vector<9x48xf32> to vector<9x8xf32>
    %178 = vector.extract_strided_slice %63 {offsets = [0, 40], sizes = [9, 8], strides = [1, 1]} : vector<9x48xf32> to vector<9x8xf32>
    %179 = tpu.transpose %177, [1, 0] : vector<9x8xf32> -> vector<8x9xf32>
    %cst_87 = arith.constant dense<0.000000e+00> : vector<9x9xf32>
    %180 = tpu.matmul %176, %179, %cst_87 {dimension_numbers = #tpu.dot_dimension_numbers<[1], [0], [0], [1], [0, 0, 1, 1], [], []>} : vector<9x8xf32>, vector<8x9xf32>, vector<9x9xf32> -> vector<9x9xf32>
    %cst_88 = arith.constant 0.353553385 : f32
    %181 = vector.broadcast %cst_88 : f32 to vector<9x9xf32>
    %182 = arith.mulf %180, %181 : vector<9x9xf32>
    %cst_89 = arith.constant dense<0xFF800000> : vector<9xf32>
    %183 = vector.multi_reduction <maximumf>, %182, %cst_89 [1] : vector<9x9xf32> to vector<9xf32>
    %184 = vector.shape_cast %183 : vector<9xf32> to vector<9x1xf32>
    %185 = vector.broadcast %184 : vector<9x1xf32> to vector<9x9xf32>
    %186 = arith.subf %182, %185 : vector<9x9xf32>
    %187 = math.exp %186 : vector<9x9xf32>
    %cst_90 = arith.constant dense<0.000000e+00> : vector<9xf32>
    %188 = vector.multi_reduction <add>, %187, %cst_90 [1] : vector<9x9xf32> to vector<9xf32>
    %189 = vector.shape_cast %188 : vector<9xf32> to vector<9x1xf32>
    %190 = tpu.reciprocal %189 {approx = true} : vector<9x1xf32> -> vector<9x1xf32>
    %191 = vector.broadcast %190 : vector<9x1xf32> to vector<9x9xf32>
    %192 = arith.mulf %187, %191 : vector<9x9xf32>
    %c0_91 = arith.constant 0 : index
    %c45 = arith.constant 45 : index
    %c0_92 = arith.constant 0 : index
    %193 = vector.load %arg29[%c0_91, %c45, %c0_92] : memref<1x54x128xf32, #tpu.memory_space<vmem>>, vector<1x9x9xf32>
    %194 = vector.shape_cast %193 : vector<1x9x9xf32> to vector<9x9xf32>
    %195 = vector.shape_cast %192 : vector<9x9xf32> to vector<1x9x9xf32>
    tpu.vector_store %arg29[%c0_91, %c45, %c0_92], %195 {strides = array<i32>} : memref<1x54x128xf32, #tpu.memory_space<vmem>>, vector<1x9x9xf32>,
    %cst_93 = arith.constant dense<0.000000e+00> : vector<9x8xf32>
    %196 = tpu.matmul %192, %178, %cst_93 {dimension_numbers = #tpu.dot_dimension_numbers<[1], [0], [0], [1], [0, 0, 1, 1], [], []>} : vector<9x9xf32>, vector<9x8xf32>, vector<9x8xf32> -> vector<9x8xf32>
    %c0_94 = arith.constant 0 : index
    %c40 = arith.constant 40 : index
    %197 = vector.load %arg30[%c0_94, %c40] : memref<9x48xf32, #tpu.memory_space<vmem>>, vector<9x8xf32>
    tpu.vector_store %arg30[%c0_94, %c40], %196 {strides = array<i32>} : memref<9x48xf32, #tpu.memory_space<vmem>>, vector<9x8xf32>,
    %c0_95 = arith.constant 0 : index
    %c0_96 = arith.constant 0 : index
    %198 = vector.load %arg30[%c0_95, %c0_96] : memref<9x48xf32, #tpu.memory_space<vmem>>, vector<9x48xf32>
    %c0_97 = arith.constant 0 : index
    %c0_98 = arith.constant 0 : index
    %199 = vector.load %arg16[%c0_97, %c0_98] : memref<48x48xf32, #tpu.memory_space<vmem>>, vector<48x48xf32>
    %cst_99 = arith.constant dense<0.000000e+00> : vector<9x48xf32>
    %200 = tpu.matmul %198, %199, %cst_99 {dimension_numbers = #tpu.dot_dimension_numbers<[1], [0], [0], [1], [0, 0, 1, 1], [], []>} : vector<9x48xf32>, vector<48x48xf32>, vector<9x48xf32> -> vector<9x48xf32>
    %201 = arith.addf %26, %200 : vector<9x48xf32>
    %c0_100 = arith.constant 0 : index
    %c0_101 = arith.constant 0 : index
    %202 = vector.load %arg17[%c0_100, %c0_101] : memref<1x48xf32, #tpu.memory_space<vmem>>, vector<1x48xf32>
    %203 = vector.broadcast %202 : vector<1x48xf32> to vector<9x48xf32>
    %204 = arith.addf %201, %203 : vector<9x48xf32>
    %cst_102 = arith.constant dense<0.000000e+00> : vector<9xf32>
    %205 = vector.multi_reduction <add>, %204, %cst_102 [1] : vector<9x48xf32> to vector<9xf32>
    %206 = vector.shape_cast %205 : vector<9xf32> to vector<9x1xf32>
    %cst_103 = arith.constant 4.800000e+01 : f32
    %207 = vector.broadcast %cst_103 : f32 to vector<9x1xf32>
    %208 = arith.divf %206, %207 : vector<9x1xf32>
    %209 = vector.broadcast %208 : vector<9x1xf32> to vector<9x48xf32>
    %210 = arith.subf %204, %209 : vector<9x48xf32>
    %211 = arith.mulf %210, %210 : vector<9x48xf32>
    %cst_104 = arith.constant dense<0.000000e+00> : vector<9xf32>
    %212 = vector.multi_reduction <add>, %211, %cst_104 [1] : vector<9x48xf32> to vector<9xf32>
    %213 = vector.shape_cast %212 : vector<9xf32> to vector<9x1xf32>
    %cst_105 = arith.constant 4.800000e+01 : f32
    %214 = vector.broadcast %cst_105 : f32 to vector<9x1xf32>
    %215 = arith.divf %213, %214 : vector<9x1xf32>
    %cst_106 = arith.constant 9.99999974E-6 : f32
    %216 = vector.broadcast %cst_106 : f32 to vector<9x1xf32>
    %217 = arith.addf %215, %216 : vector<9x1xf32>
    %218 = math.rsqrt %217 : vector<9x1xf32>
    %219 = vector.broadcast %218 : vector<9x1xf32> to vector<9x48xf32>
    %220 = arith.mulf %210, %219 : vector<9x48xf32>
    %c0_107 = arith.constant 0 : index
    %c0_108 = arith.constant 0 : index
    %221 = vector.load %arg18[%c0_107, %c0_108] : memref<1x48xf32, #tpu.memory_space<vmem>>, vector<1x48xf32>
    %222 = vector.broadcast %221 : vector<1x48xf32> to vector<9x48xf32>
    %223 = arith.mulf %220, %222 : vector<9x48xf32>
    %c0_109 = arith.constant 0 : index
    %c0_110 = arith.constant 0 : index
    %224 = vector.load %arg19[%c0_109, %c0_110] : memref<1x48xf32, #tpu.memory_space<vmem>>, vector<1x48xf32>
    %225 = vector.broadcast %224 : vector<1x48xf32> to vector<9x48xf32>
    %226 = arith.addf %223, %225 : vector<9x48xf32>
    %c0_111 = arith.constant 0 : index
    %c0_112 = arith.constant 0 : index
    %227 = vector.load %arg20[%c0_111, %c0_112] : memref<48x192xf32, #tpu.memory_space<vmem>>, vector<48x192xf32>
    %cst_113 = arith.constant dense<0.000000e+00> : vector<9x192xf32>
    %228 = tpu.matmul %226, %227, %cst_113 {dimension_numbers = #tpu.dot_dimension_numbers<[1], [0], [0], [1], [0, 0, 1, 1], [], []>} : vector<9x48xf32>, vector<48x192xf32>, vector<9x192xf32> -> vector<9x192xf32>
    %c0_114 = arith.constant 0 : index
    %c0_115 = arith.constant 0 : index
    %229 = vector.load %arg21[%c0_114, %c0_115] : memref<1x192xf32, #tpu.memory_space<vmem>>, vector<1x192xf32>
    %230 = vector.broadcast %229 : vector<1x192xf32> to vector<9x192xf32>
    %231 = arith.addf %228, %230 : vector<9x192xf32>
    %232 = arith.mulf %231, %231 : vector<9x192xf32>
    %233 = arith.mulf %231, %232 : vector<9x192xf32>
    %cst_116 = arith.constant 4.471500e-02 : f32
    %234 = vector.broadcast %cst_116 : f32 to vector<9x192xf32>
    %235 = arith.mulf %234, %233 : vector<9x192xf32>
    %236 = arith.addf %231, %235 : vector<9x192xf32>
    %cst_117 = arith.constant 0.797884583 : f32
    %237 = vector.broadcast %cst_117 : f32 to vector<9x192xf32>
    %238 = arith.mulf %237, %236 : vector<9x192xf32>
    %239 = math.tanh %238 : vector<9x192xf32>
    %cst_118 = arith.constant 1.000000e+00 : f32
    %240 = vector.broadcast %cst_118 : f32 to vector<9x192xf32>
    %241 = arith.addf %240, %239 : vector<9x192xf32>
    %cst_119 = arith.constant 5.000000e-01 : f32
    %242 = vector.broadcast %cst_119 : f32 to vector<9x192xf32>
    %243 = arith.mulf %242, %241 : vector<9x192xf32>
    %244 = arith.mulf %231, %243 : vector<9x192xf32>
    %c0_120 = arith.constant 0 : index
    %c0_121 = arith.constant 0 : index
    %245 = vector.load %arg22[%c0_120, %c0_121] : memref<192x48xf32, #tpu.memory_space<vmem>>, vector<192x48xf32>
    %cst_122 = arith.constant dense<0.000000e+00> : vector<9x48xf32>
    %246 = tpu.matmul %244, %245, %cst_122 {dimension_numbers = #tpu.dot_dimension_numbers<[1], [0], [0], [1], [0, 0, 1, 1], [], []>} : vector<9x192xf32>, vector<192x48xf32>, vector<9x48xf32> -> vector<9x48xf32>
    %247 = arith.addf %204, %246 : vector<9x48xf32>
    %c0_123 = arith.constant 0 : index
    %c0_124 = arith.constant 0 : index
    %248 = vector.load %arg23[%c0_123, %c0_124] : memref<1x48xf32, #tpu.memory_space<vmem>>, vector<1x48xf32>
    %249 = vector.broadcast %248 : vector<1x48xf32> to vector<9x48xf32>
    %250 = arith.addf %247, %249 : vector<9x48xf32>
    %251 = vector.extract_strided_slice %250 {offsets = [0, 0], sizes = [1, 48], strides = [1, 1]} : vector<9x48xf32> to vector<1x48xf32>
    %cst_125 = arith.constant dense<0.000000e+00> : vector<1xf32>
    %252 = vector.multi_reduction <add>, %251, %cst_125 [1] : vector<1x48xf32> to vector<1xf32>
    %253 = vector.shape_cast %252 : vector<1xf32> to vector<1x1xf32>
    %cst_126 = arith.constant 4.800000e+01 : f32
    %254 = vector.broadcast %cst_126 : f32 to vector<1x1xf32>
    %255 = arith.divf %253, %254 : vector<1x1xf32>
    %256 = vector.broadcast %255 : vector<1x1xf32> to vector<1x48xf32>
    %257 = arith.subf %251, %256 : vector<1x48xf32>
    %258 = arith.mulf %257, %257 : vector<1x48xf32>
    %cst_127 = arith.constant dense<0.000000e+00> : vector<1xf32>
    %259 = vector.multi_reduction <add>, %258, %cst_127 [1] : vector<1x48xf32> to vector<1xf32>
    %260 = vector.shape_cast %259 : vector<1xf32> to vector<1x1xf32>
    %cst_128 = arith.constant 4.800000e+01 : f32
    %261 = vector.broadcast %cst_128 : f32 to vector<1x1xf32>
    %262 = arith.divf %260, %261 : vector<1x1xf32>
    %cst_129 = arith.constant 9.99999974E-6 : f32
    %263 = vector.broadcast %cst_129 : f32 to vector<1x1xf32>
    %264 = arith.addf %262, %263 : vector<1x1xf32>
    %265 = math.rsqrt %264 : vector<1x1xf32>
    %266 = vector.broadcast %265 : vector<1x1xf32> to vector<1x48xf32>
    %267 = arith.mulf %257, %266 : vector<1x48xf32>
    %c0_130 = arith.constant 0 : index
    %c0_131 = arith.constant 0 : index
    %268 = vector.load %arg24[%c0_130, %c0_131] : memref<1x48xf32, #tpu.memory_space<vmem>>, vector<1x48xf32>
    %269 = arith.mulf %267, %268 : vector<1x48xf32>
    %c0_132 = arith.constant 0 : index
    %c0_133 = arith.constant 0 : index
    %270 = vector.load %arg25[%c0_132, %c0_133] : memref<1x48xf32, #tpu.memory_space<vmem>>, vector<1x48xf32>
    %271 = arith.addf %269, %270 : vector<1x48xf32>
    %c0_134 = arith.constant 0 : index
    %c0_135 = arith.constant 0 : index
    %272 = vector.load %arg26[%c0_134, %c0_135] : memref<48x128xf32, #tpu.memory_space<vmem>>, vector<48x128xf32>
    %cst_136 = arith.constant dense<0.000000e+00> : vector<1x128xf32>
    %273 = tpu.matmul %271, %272, %cst_136 {dimension_numbers = #tpu.dot_dimension_numbers<[1], [0], [0], [1], [0, 0, 1, 1], [], []>} : vector<1x48xf32>, vector<48x128xf32>, vector<1x128xf32> -> vector<1x128xf32>
    %c0_137 = arith.constant 0 : index
    %c0_138 = arith.constant 0 : index
    %274 = vector.load %arg27[%c0_137, %c0_138] : memref<1x128xf32, #tpu.memory_space<vmem>>, vector<1x128xf32>
    %275 = arith.addf %273, %274 : vector<1x128xf32>
    %c0_139 = arith.constant 0 : index
    %c0_140 = arith.constant 0 : index
    %c0_141 = arith.constant 0 : index
    %276 = vector.load %arg28[%c0_139, %c0_140, %c0_141] : memref<1x1x128xf32, #tpu.memory_space<vmem>>, vector<1x1x128xf32>
    %277 = vector.shape_cast %276 : vector<1x1x128xf32> to vector<1x128xf32>
    %278 = vector.shape_cast %275 : vector<1x128xf32> to vector<1x1x128xf32>
    tpu.vector_store %arg28[%c0_139, %c0_140, %c0_141], %278 {strides = array<i32>} : memref<1x1x128xf32, #tpu.memory_space<vmem>>, vector<1x1x128xf32>,
    return
  }
  func.func @transform_0(%arg0: i32) -> (i32, i32, i32) {
    %c0_i32 = arith.constant 0 : i32
    %c0_i32_0 = arith.constant 0 : i32
    %c0_i32_1 = arith.constant 0 : i32
    return %arg0, %c0_i32, %c0_i32_0 : i32, i32, i32
  }
  func.func @transform_1(%arg0: i32) -> (i32, i32) {
    %c0_i32 = arith.constant 0 : i32
    %c0_i32_0 = arith.constant 0 : i32
    %c0_i32_1 = arith.constant 0 : i32
    return %c0_i32, %c0_i32_0 : i32, i32
  }
  func.func @transform_2(%arg0: i32) -> (i32, i32) {
    %c0_i32 = arith.constant 0 : i32
    %c0_i32_0 = arith.constant 0 : i32
    %c0_i32_1 = arith.constant 0 : i32
    return %c0_i32, %c0_i32_0 : i32, i32
  }
  func.func @transform_3(%arg0: i32) -> (i32, i32) {
    %c0_i32 = arith.constant 0 : i32
    %c0_i32_0 = arith.constant 0 : i32
    %c0_i32_1 = arith.constant 0 : i32
    return %c0_i32, %c0_i32_0 : i32, i32
  }
  func.func @transform_4(%arg0: i32) -> (i32, i32) {
    %c0_i32 = arith.constant 0 : i32
    %c0_i32_0 = arith.constant 0 : i32
    %c0_i32_1 = arith.constant 0 : i32
    return %c0_i32, %c0_i32_0 : i32, i32
  }
  func.func @transform_5(%arg0: i32) -> (i32, i32) {
    %c0_i32 = arith.constant 0 : i32
    %c0_i32_0 = arith.constant 0 : i32
    %c0_i32_1 = arith.constant 0 : i32
    return %c0_i32, %c0_i32_0 : i32, i32
  }
  func.func @transform_6(%arg0: i32) -> (i32, i32) {
    %c0_i32 = arith.constant 0 : i32
    %c0_i32_0 = arith.constant 0 : i32
    %c0_i32_1 = arith.constant 0 : i32
    return %c0_i32, %c0_i32_0 : i32, i32
  }
  func.func @transform_7(%arg0: i32) -> (i32, i32) {
    %c0_i32 = arith.constant 0 : i32
    %c0_i32_0 = arith.constant 0 : i32
    %c0_i32_1 = arith.constant 0 : i32
    return %c0_i32, %c0_i32_0 : i32, i32
  }
  func.func @transform_8(%arg0: i32) -> (i32, i32) {
    %c0_i32 = arith.constant 0 : i32
    %c0_i32_0 = arith.constant 0 : i32
    %c0_i32_1 = arith.constant 0 : i32
    return %c0_i32, %c0_i32_0 : i32, i32
  }
  func.func @transform_9(%arg0: i32) -> (i32, i32) {
    %c0_i32 = arith.constant 0 : i32
    %c0_i32_0 = arith.constant 0 : i32
    %c0_i32_1 = arith.constant 0 : i32
    return %c0_i32, %c0_i32_0 : i32, i32
  }
  func.func @transform_10(%arg0: i32) -> (i32, i32) {
    %c0_i32 = arith.constant 0 : i32
    %c0_i32_0 = arith.constant 0 : i32
    %c0_i32_1 = arith.constant 0 : i32
    return %c0_i32, %c0_i32_0 : i32, i32
  }
  func.func @transform_11(%arg0: i32) -> (i32, i32) {
    %c0_i32 = arith.constant 0 : i32
    %c0_i32_0 = arith.constant 0 : i32
    %c0_i32_1 = arith.constant 0 : i32
    return %c0_i32, %c0_i32_0 : i32, i32
  }
  func.func @transform_12(%arg0: i32) -> (i32, i32) {
    %c0_i32 = arith.constant 0 : i32
    %c0_i32_0 = arith.constant 0 : i32
    %c0_i32_1 = arith.constant 0 : i32
    return %c0_i32, %c0_i32_0 : i32, i32
  }
  func.func @transform_13(%arg0: i32) -> (i32, i32) {
    %c0_i32 = arith.constant 0 : i32
    %c0_i32_0 = arith.constant 0 : i32
    %c0_i32_1 = arith.constant 0 : i32
    return %c0_i32, %c0_i32_0 : i32, i32
  }
  func.func @transform_14(%arg0: i32) -> (i32, i32) {
    %c0_i32 = arith.constant 0 : i32
    %c0_i32_0 = arith.constant 0 : i32
    %c0_i32_1 = arith.constant 0 : i32
    return %c0_i32, %c0_i32_0 : i32, i32
  }
  func.func @transform_15(%arg0: i32) -> (i32, i32) {
    %c0_i32 = arith.constant 0 : i32
    %c0_i32_0 = arith.constant 0 : i32
    %c0_i32_1 = arith.constant 0 : i32
    return %c0_i32, %c0_i32_0 : i32, i32
  }
  func.func @transform_16(%arg0: i32) -> (i32, i32) {
    %c0_i32 = arith.constant 0 : i32
    %c0_i32_0 = arith.constant 0 : i32
    %c0_i32_1 = arith.constant 0 : i32
    return %c0_i32, %c0_i32_0 : i32, i32
  }
  func.func @transform_17(%arg0: i32) -> (i32, i32) {
    %c0_i32 = arith.constant 0 : i32
    %c0_i32_0 = arith.constant 0 : i32
    %c0_i32_1 = arith.constant 0 : i32
    return %c0_i32, %c0_i32_0 : i32, i32
  }
  func.func @transform_18(%arg0: i32) -> (i32, i32) {
    %c0_i32 = arith.constant 0 : i32
    %c0_i32_0 = arith.constant 0 : i32
    %c0_i32_1 = arith.constant 0 : i32
    return %c0_i32, %c0_i32_0 : i32, i32
  }
  func.func @transform_19(%arg0: i32) -> (i32, i32) {
    %c0_i32 = arith.constant 0 : i32
    %c0_i32_0 = arith.constant 0 : i32
    %c0_i32_1 = arith.constant 0 : i32
    return %c0_i32, %c0_i32_0 : i32, i32
  }
  func.func @transform_20(%arg0: i32) -> (i32, i32) {
    %c0_i32 = arith.constant 0 : i32
    %c0_i32_0 = arith.constant 0 : i32
    %c0_i32_1 = arith.constant 0 : i32
    return %c0_i32, %c0_i32_0 : i32, i32
  }
  func.func @transform_21(%arg0: i32) -> (i32, i32) {
    %c0_i32 = arith.constant 0 : i32
    %c0_i32_0 = arith.constant 0 : i32
    %c0_i32_1 = arith.constant 0 : i32
    return %c0_i32, %c0_i32_0 : i32, i32
  }
  func.func @transform_22(%arg0: i32) -> (i32, i32) {
    %c0_i32 = arith.constant 0 : i32
    %c0_i32_0 = arith.constant 0 : i32
    %c0_i32_1 = arith.constant 0 : i32
    return %c0_i32, %c0_i32_0 : i32, i32
  }
  func.func @transform_23(%arg0: i32) -> (i32, i32) {
    %c0_i32 = arith.constant 0 : i32
    %c0_i32_0 = arith.constant 0 : i32
    %c0_i32_1 = arith.constant 0 : i32
    return %c0_i32, %c0_i32_0 : i32, i32
  }
  func.func @transform_24(%arg0: i32) -> (i32, i32) {
    %c0_i32 = arith.constant 0 : i32
    %c0_i32_0 = arith.constant 0 : i32
    %c0_i32_1 = arith.constant 0 : i32
    return %c0_i32, %c0_i32_0 : i32, i32
  }
  func.func @transform_25(%arg0: i32) -> (i32, i32) {
    %c0_i32 = arith.constant 0 : i32
    %c0_i32_0 = arith.constant 0 : i32
    %c0_i32_1 = arith.constant 0 : i32
    return %c0_i32, %c0_i32_0 : i32, i32
  }
  func.func @transform_26(%arg0: i32) -> (i32, i32) {
    %c0_i32 = arith.constant 0 : i32
    %c0_i32_0 = arith.constant 0 : i32
    %c0_i32_1 = arith.constant 0 : i32
    return %c0_i32, %c0_i32_0 : i32, i32
  }
  func.func @transform_27(%arg0: i32) -> (i32, i32, i32) {
    %c0_i32 = arith.constant 0 : i32
    %c0_i32_0 = arith.constant 0 : i32
    %c0_i32_1 = arith.constant 0 : i32
    return %arg0, %c0_i32, %c0_i32_0 : i32, i32, i32
  }
  func.func @transform_28(%arg0: i32) -> (i32, i32, i32) {
    %c0_i32 = arith.constant 0 : i32
    %c0_i32_0 = arith.constant 0 : i32
    %c0_i32_1 = arith.constant 0 : i32
    return %arg0, %c0_i32, %c0_i32_0 : i32, i32, i32
  }
}

</mosaic_0001>

<llo_original>
// kernel: transformer_mil_forward.1
$region0: #{transformer_mil_forward.1}
  #allocation0 [shape = 'u32[]', space=smem, size = 0x4, offset = 0x4, fixed_abs, tag = 'smem constant byte address 0x4 - core index']
  #allocation1 [shape = 'u32[144,128]{1,0:T(1,128)}', space=vmem, size = 0x12000, scoped, tag = 'internal scratch']
  #allocation2 [shape = 'f32[9,48]{1,0:T(8,128)}', space=vmem, size = 0x2000, scoped, tag = 'scratch operand']
  %s0 = inlined_call_operand.vmem [shape: f32[2,9,192], index: 0, kind: input, shape index: {}]
  %s1 = inlined_call_operand.vmem [shape: f32[192,64], index: 1, kind: input, shape index: {}]
  %s2 = inlined_call_operand.vmem [shape: f32[1,64], index: 2, kind: input, shape index: {}]
  %s3 = inlined_call_operand.vmem [shape: f32[64,48], index: 3, kind: input, shape index: {}]
  %s4 = inlined_call_operand.vmem [shape: f32[1,48], index: 4, kind: input, shape index: {}]
  %s5 = inlined_call_operand.vmem [shape: f32[1,48], index: 5, kind: input, shape index: {}]
  %s6 = inlined_call_operand.vmem [shape: f32[9,48], index: 6, kind: input, shape index: {}]
  %s7 = inlined_call_operand.vmem [shape: f32[1,48], index: 7, kind: input, shape index: {}]
  %s8 = inlined_call_operand.vmem [shape: f32[1,48], index: 8, kind: input, shape index: {}]
  %s9 = inlined_call_operand.vmem [shape: f32[48,48], index: 9, kind: input, shape index: {}]
  %s10 = inlined_call_operand.vmem [shape: f32[1,48], index: 10, kind: input, shape index: {}]
  %s11 = inlined_call_operand.vmem [shape: f32[48,48], index: 11, kind: input, shape index: {}]
  %s12 = inlined_call_operand.vmem [shape: f32[1,48], index: 12, kind: input, shape index: {}]
  %s13 = inlined_call_operand.vmem [shape: f32[48,48], index: 13, kind: input, shape index: {}]
  %s14 = inlined_call_operand.vmem [shape: f32[1,48], index: 14, kind: input, shape index: {}]
  %s15 = inlined_call_operand.vmem [shape: f32[48,48], index: 15, kind: input, shape index: {}]
  %s16 = inlined_call_operand.vmem [shape: f32[1,48], index: 16, kind: input, shape index: {}]
  %s17 = inlined_call_operand.vmem [shape: f32[1,48], index: 17, kind: input, shape index: {}]
  %s18 = inlined_call_operand.vmem [shape: f32[1,48], index: 18, kind: input, shape index: {}]
  %s19 = inlined_call_operand.vmem [shape: f32[48,192], index: 19, kind: input, shape index: {}]
  %s20 = inlined_call_operand.vmem [shape: f32[1,192], index: 20, kind: input, shape index: {}]
  %s21 = inlined_call_operand.vmem [shape: f32[192,48], index: 21, kind: input, shape index: {}]
  %s22 = inlined_call_operand.vmem [shape: f32[1,48], index: 22, kind: input, shape index: {}]
  %s23 = inlined_call_operand.vmem [shape: f32[1,48], index: 23, kind: input, shape index: {}]
  %s24 = inlined_call_operand.vmem [shape: f32[1,48], index: 24, kind: input, shape index: {}]
  %s25 = inlined_call_operand.vmem [shape: f32[48,128], index: 25, kind: input, shape index: {}]
  %s26 = inlined_call_operand.vmem [shape: f32[1,128], index: 26, kind: input, shape index: {}]
  %s27 = inlined_call_operand.hbm [shape: f32[2,1,128], index: 27, kind: output, shape index: {0}]
  %s28 = inlined_call_operand.vmem [shape: f32[2,54,128], index: 28, kind: output, shape index: {1}]
  %29 = xla_tuple %s27, %s28
  %s30 = sld [smem:[#allocation0]]
  $region149: #{transformer_mil_forward.1} parent=0
    _
  %s32 = ssub.s32 1, %s30
  %s33 = scalar_select 0, %s32, %s30
  $region1: #{transformer_mil_forward.1} parent=0
    #allocation3 [shape = 'u8[1024]{0}', space=vmem, size = 0x400, scoped, tag = 'output window, operand 0']
    #allocation4 [shape = 's32[2]{0}', space=sflag, size = 0x8, scoped, tag = 'scoped memory for transformer_mil_forward.1']
    %34 = vsyncpa [#allocation4], 0
    %s35 = scalar_lea.sflag [#allocation4], 1
    %36 = vsyncpa %s35, 0
    loop: start=0, step=1, limit=4
    $region2: #{transformer_mil_forward.1} parent=1 // loop_pre_header
      _
    $region3: #{transformer_mil_forward.1} parent=1 // loop_header
      %s38 = sphi 0, %s42
      %p39 = scmp.ge.s32.totalorder %s38, 4
      %s48 = sphi 0, %s50
      %s51 = sphi 0, %s48
      %s52 = sphi 0, %s51
      %s68 = sphi 0, %s52
      %s72 = sphi 0, %s72
      %s74 = sphi 0, %s72
      %s75 = sphi 0, %s74
      %s89 = sphi 0, %s75
      %s93 = sphi 0, %s93
      %s95 = sphi 0, %s93
      %s96 = sphi 0, %s95
      %s110 = sphi 0, %s96
      %s114 = sphi 0, %s114
      %s116 = sphi 0, %s114
      %s117 = sphi 0, %s116
      %s131 = sphi 0, %s117
      %s135 = sphi 0, %s135
      %s137 = sphi 0, %s135
      %s138 = sphi 0, %s137
      %s152 = sphi 0, %s138
      %s156 = sphi 0, %s156
      %s158 = sphi 0, %s156
      %s159 = sphi 0, %s158
      %s173 = sphi 0, %s159
      %s177 = sphi 0, %s177
      %s179 = sphi 0, %s177
      %s180 = sphi 0, %s179
      %s194 = sphi 0, %s180
      %s198 = sphi 0, %s198
      %s200 = sphi 0, %s198
      %s201 = sphi 0, %s200
      %s215 = sphi 0, %s201
      %s219 = sphi 0, %s219
      %s221 = sphi 0, %s219
      %s222 = sphi 0, %s221
      %s236 = sphi 0, %s222
      %s240 = sphi 0, %s240
      %s242 = sphi 0, %s240
      %s243 = sphi 0, %s242
      %s257 = sphi 0, %s243
      %s261 = sphi 0, %s261
      %s263 = sphi 0, %s261
      %s264 = sphi 0, %s263
      %s278 = sphi 0, %s264
      %s282 = sphi 0, %s282
      %s284 = sphi 0, %s282
      %s285 = sphi 0, %s284
      %s299 = sphi 0, %s285
      %s303 = sphi 0, %s303
      %s305 = sphi 0, %s303
      %s306 = sphi 0, %s305
      %s320 = sphi 0, %s306
      %s324 = sphi 0, %s324
      %s326 = sphi 0, %s324
      %s327 = sphi 0, %s326
      %s341 = sphi 0, %s327
      %s345 = sphi 0, %s345
      %s347 = sphi 0, %s345
      %s348 = sphi 0, %s347
      %s362 = sphi 0, %s348
      %s366 = sphi 0, %s366
      %s368 = sphi 0, %s366
      %s369 = sphi 0, %s368
      %s383 = sphi 0, %s369
      %s387 = sphi 0, %s387
      %s389 = sphi 0, %s387
      %s390 = sphi 0, %s389
      %s404 = sphi 0, %s390
      %s408 = sphi 0, %s408
      %s410 = sphi 0, %s408
      %s411 = sphi 0, %s410
      %s425 = sphi 0, %s411
      %s429 = sphi 0, %s429
      %s431 = sphi 0, %s429
      %s432 = sphi 0, %s431
      %s446 = sphi 0, %s432
      %s450 = sphi 0, %s450
      %s452 = sphi 0, %s450
      %s453 = sphi 0, %s452
      %s467 = sphi 0, %s453
      %s471 = sphi 0, %s471
      %s473 = sphi 0, %s471
      %s474 = sphi 0, %s473
      %s488 = sphi 0, %s474
      %s492 = sphi 0, %s492
      %s494 = sphi 0, %s492
      %s495 = sphi 0, %s494
      %s509 = sphi 0, %s495
      %s513 = sphi 0, %s513
      %s515 = sphi 0, %s513
      %s516 = sphi 0, %s515
      %s530 = sphi 0, %s516
      %s534 = sphi 0, %s534
      %s536 = sphi 0, %s534
      %s537 = sphi 0, %s536
      %s551 = sphi 0, %s537
      %s555 = sphi 0, %s555
      %s557 = sphi 0, %s555
      %s558 = sphi 0, %s557
      %s572 = sphi 0, %s558
      %s576 = sphi 0, %s576
      %s578 = sphi 0, %s576
      %s579 = sphi 0, %s578
      %s593 = sphi 0, %s579
      %s597 = sphi 0, %s597
      %s599 = sphi 0, %s597
      %s600 = sphi 0, %s599
      %s614 = sphi 0, %s600
      %s620 = sphi 0, %s622
      %s623 = sphi 0, %s620
      %s624 = sphi 0, %s623
      %s640 = sphi 0, %s624
      %s646 = sphi 0, %s648
      %s649 = sphi 0, %s646
      %s650 = sphi 0, %s649
      %s666 = sphi 0, %s650
    $region4: #{transformer_mil_forward.1} parent=1 // loop_header_branch
      %41 = sbr.rel (%p39) target = $region8
    $region5: #{transformer_mil_forward.1} parent=1 // loop_body
      %s43 = ssub.s32 %s38, 1
      %s44 = ssub.s32 %s38, 2
      %s45 = sadd.s32 %s38, 1
      %s46 = ssub.s32 %s38, %s45
      %p47 = scmp.eq.s32.totalorder %s46, 0
      %s49 = sadd.s32 %s48, 1
      %s50 = scalar_select %p47, %s48, %s49
      %p53 = pneg %p47
      %p54 = scmp.eq.s32.totalorder %s38, 1
      %p55 = por %p53, %p54
      %p56 = scmp.ne.s32.totalorder %s48, %s51
      %p57 = scmp.eq.s32.totalorder %s38, 0
      %p58 = por %p56, %p57
      %p59 = scmp.ne.s32.totalorder %s48, %s51
      %p60 = scmp.eq.s32.totalorder %s43, 1
      %p61 = por %p59, %p60
      %p62 = scmp.ne.s32.totalorder %s51, %s52
      %p63 = scmp.eq.s32.totalorder %s43, 0
      %p64 = por %p62, %p63
      %p65 = scmp.ne.s32.totalorder %s51, %s52
      %p66 = scmp.eq.s32.totalorder %s44, 1
      %p67 = por %p65, %p66
      %p69 = scmp.ne.s32.totalorder %s52, %s68
      %p70 = scmp.eq.s32.totalorder %s44, 0
      %p71 = por %p69, %p70
      %s73 = sadd.s32 %s72, 1
      %p76 = scmp.eq.s32.totalorder %s38, 1
      %p77 = scmp.ne.s32.totalorder %s72, %s74
      %p78 = scmp.eq.s32.totalorder %s38, 0
      %p79 = por %p77, %p78
      %p80 = scmp.ne.s32.totalorder %s72, %s74
      %p81 = scmp.eq.s32.totalorder %s43, 1
      %p82 = por %p80, %p81
      %p83 = scmp.ne.s32.totalorder %s74, %s75
      %p84 = scmp.eq.s32.totalorder %s43, 0
      %p85 = por %p83, %p84
      %p86 = scmp.ne.s32.totalorder %s74, %s75
      %p87 = scmp.eq.s32.totalorder %s44, 1
      %p88 = por %p86, %p87
      %p90 = scmp.ne.s32.totalorder %s75, %s89
      %p91 = scmp.eq.s32.totalorder %s44, 0
      %p92 = por %p90, %p91
      %s94 = sadd.s32 %s93, 1
      %p97 = scmp.eq.s32.totalorder %s38, 1
      %p98 = scmp.ne.s32.totalorder %s93, %s95
      %p99 = scmp.eq.s32.totalorder %s38, 0
      %p100 = por %p98, %p99
      %p101 = scmp.ne.s32.totalorder %s93, %s95
      %p102 = scmp.eq.s32.totalorder %s43, 1
      %p103 = por %p101, %p102
      %p104 = scmp.ne.s32.totalorder %s95, %s96
      %p105 = scmp.eq.s32.totalorder %s43, 0
      %p106 = por %p104, %p105
      %p107 = scmp.ne.s32.totalorder %s95, %s96
      %p108 = scmp.eq.s32.totalorder %s44, 1
      %p109 = por %p107, %p108
      %p111 = scmp.ne.s32.totalorder %s96, %s110
      %p112 = scmp.eq.s32.totalorder %s44, 0
      %p113 = por %p111, %p112
      %s115 = sadd.s32 %s114, 1
      %p118 = scmp.eq.s32.totalorder %s38, 1
      %p119 = scmp.ne.s32.totalorder %s114, %s116
      %p120 = scmp.eq.s32.totalorder %s38, 0
      %p121 = por %p119, %p120
      %p122 = scmp.ne.s32.totalorder %s114, %s116
      %p123 = scmp.eq.s32.totalorder %s43, 1
      %p124 = por %p122, %p123
      %p125 = scmp.ne.s32.totalorder %s116, %s117
      %p126 = scmp.eq.s32.totalorder %s43, 0
      %p127 = por %p125, %p126
      %p128 = scmp.ne.s32.totalorder %s116, %s117
      %p129 = scmp.eq.s32.totalorder %s44, 1
      %p130 = por %p128, %p129
      %p132 = scmp.ne.s32.totalorder %s117, %s131
      %p133 = scmp.eq.s32.totalorder %s44, 0
      %p134 = por %p132, %p133
      %s136 = sadd.s32 %s135, 1
      %p139 = scmp.eq.s32.totalorder %s38, 1
      %p140 = scmp.ne.s32.totalorder %s135, %s137
      %p141 = scmp.eq.s32.totalorder %s38, 0
      %p142 = por %p140, %p141
      %p143 = scmp.ne.s32.totalorder %s135, %s137
      %p144 = scmp.eq.s32.totalorder %s43, 1
      %p145 = por %p143, %p144
      %p146 = scmp.ne.s32.totalorder %s137, %s138
      %p147 = scmp.eq.s32.totalorder %s43, 0
      %p148 = por %p146, %p147
      %p149 = scmp.ne.s32.totalorder %s137, %s138
      %p150 = scmp.eq.s32.totalorder %s44, 1
      %p151 = por %p149, %p150
      %p153 = scmp.ne.s32.totalorder %s138, %s152
      %p154 = scmp.eq.s32.totalorder %s44, 0
      %p155 = por %p153, %p154
      %s157 = sadd.s32 %s156, 1
      %p160 = scmp.eq.s32.totalorder %s38, 1
      %p161 = scmp.ne.s32.totalorder %s156, %s158
      %p162 = scmp.eq.s32.totalorder %s38, 0
      %p163 = por %p161, %p162
      %p164 = scmp.ne.s32.totalorder %s156, %s158
      %p165 = scmp.eq.s32.totalorder %s43, 1
      %p166 = por %p164, %p165
      %p167 = scmp.ne.s32.totalorder %s158, %s159
      %p168 = scmp.eq.s32.totalorder %s43, 0
      %p169 = por %p167, %p168
      %p170 = scmp.ne.s32.totalorder %s158, %s159
      %p171 = scmp.eq.s32.totalorder %s44, 1
      %p172 = por %p170, %p171
      %p174 = scmp.ne.s32.totalorder %s159, %s173
      %p175 = scmp.eq.s32.totalorder %s44, 0
      %p176 = por %p174, %p175
      %s178 = sadd.s32 %s177, 1
      %p181 = scmp.eq.s32.totalorder %s38, 1
      %p182 = scmp.ne.s32.totalorder %s177, %s179
      %p183 = scmp.eq.s32.totalorder %s38, 0
      %p184 = por %p182, %p183
      %p185 = scmp.ne.s32.totalorder %s177, %s179
      %p186 = scmp.eq.s32.totalorder %s43, 1
      %p187 = por %p185, %p186
      %p188 = scmp.ne.s32.totalorder %s179, %s180
      %p189 = scmp.eq.s32.totalorder %s43, 0
      %p190 = por %p188, %p189
      %p191 = scmp.ne.s32.totalorder %s179, %s180
      %p192 = scmp.eq.s32.totalorder %s44, 1
      %p193 = por %p191, %p192
      %p195 = scmp.ne.s32.totalorder %s180, %s194
      %p196 = scmp.eq.s32.totalorder %s44, 0
      %p197 = por %p195, %p196
      %s199 = sadd.s32 %s198, 1
      %p202 = scmp.eq.s32.totalorder %s38, 1
      %p203 = scmp.ne.s32.totalorder %s198, %s200
      %p204 = scmp.eq.s32.totalorder %s38, 0
      %p205 = por %p203, %p204
      %p206 = scmp.ne.s32.totalorder %s198, %s200
      %p207 = scmp.eq.s32.totalorder %s43, 1
      %p208 = por %p206, %p207
      %p209 = scmp.ne.s32.totalorder %s200, %s201
      %p210 = scmp.eq.s32.totalorder %s43, 0
      %p211 = por %p209, %p210
      %p212 = scmp.ne.s32.totalorder %s200, %s201
      %p213 = scmp.eq.s32.totalorder %s44, 1
      %p214 = por %p212, %p213
      %p216 = scmp.ne.s32.totalorder %s201, %s215
      %p217 = scmp.eq.s32.totalorder %s44, 0
      %p218 = por %p216, %p217
      %s220 = sadd.s32 %s219, 1
      %p223 = scmp.eq.s32.totalorder %s38, 1
      %p224 = scmp.ne.s32.totalorder %s219, %s221
      %p225 = scmp.eq.s32.totalorder %s38, 0
      %p226 = por %p224, %p225
      %p227 = scmp.ne.s32.totalorder %s219, %s221
      %p228 = scmp.eq.s32.totalorder %s43, 1
      %p229 = por %p227, %p228
      %p230 = scmp.ne.s32.totalorder %s221, %s222
      %p231 = scmp.eq.s32.totalorder %s43, 0
      %p232 = por %p230, %p231
      %p233 = scmp.ne.s32.totalorder %s221, %s222
      %p234 = scmp.eq.s32.totalorder %s44, 1
      %p235 = por %p233, %p234
      %p237 = scmp.ne.s32.totalorder %s222, %s236
      %p238 = scmp.eq.s32.totalorder %s44, 0
      %p239 = por %p237, %p238
      %s241 = sadd.s32 %s240, 1
      %p244 = scmp.eq.s32.totalorder %s38, 1
      %p245 = scmp.ne.s32.totalorder %s240, %s242
      %p246 = scmp.eq.s32.totalorder %s38, 0
      %p247 = por %p245, %p246
      %p248 = scmp.ne.s32.totalorder %s240, %s242
      %p249 = scmp.eq.s32.totalorder %s43, 1
      %p250 = por %p248, %p249
      %p251 = scmp.ne.s32.totalorder %s242, %s243
      %p252 = scmp.eq.s32.totalorder %s43, 0
      %p253 = por %p251, %p252
      %p254 = scmp.ne.s32.totalorder %s242, %s243
      %p255 = scmp.eq.s32.totalorder %s44, 1
      %p256 = por %p254, %p255
      %p258 = scmp.ne.s32.totalorder %s243, %s257
      %p259 = scmp.eq.s32.totalorder %s44, 0
      %p260 = por %p258, %p259
      %s262 = sadd.s32 %s261, 1
      %p265 = scmp.eq.s32.totalorder %s38, 1
      %p266 = scmp.ne.s32.totalorder %s261, %s263
      %p267 = scmp.eq.s32.totalorder %s38, 0
      %p268 = por %p266, %p267
      %p269 = scmp.ne.s32.totalorder %s261, %s263
      %p270 = scmp.eq.s32.totalorder %s43, 1
      %p271 = por %p269, %p270
      %p272 = scmp.ne.s32.totalorder %s263, %s264
      %p273 = scmp.eq.s32.totalorder %s43, 0
      %p274 = por %p272, %p273
      %p275 = scmp.ne.s32.totalorder %s263, %s264
      %p276 = scmp.eq.s32.totalorder %s44, 1
      %p277 = por %p275, %p276
      %p279 = scmp.ne.s32.totalorder %s264, %s278
      %p280 = scmp.eq.s32.totalorder %s44, 0
      %p281 = por %p279, %p280
      %s283 = sadd.s32 %s282, 1
      %p286 = scmp.eq.s32.totalorder %s38, 1
      %p287 = scmp.ne.s32.totalorder %s282, %s284
      %p288 = scmp.eq.s32.totalorder %s38, 0
      %p289 = por %p287, %p288
      %p290 = scmp.ne.s32.totalorder %s282, %s284
      %p291 = scmp.eq.s32.totalorder %s43, 1
      %p292 = por %p290, %p291
      %p293 = scmp.ne.s32.totalorder %s284, %s285
      %p294 = scmp.eq.s32.totalorder %s43, 0
      %p295 = por %p293, %p294
      %p296 = scmp.ne.s32.totalorder %s284, %s285
      %p297 = scmp.eq.s32.totalorder %s44, 1
      %p298 = por %p296, %p297
      %p300 = scmp.ne.s32.totalorder %s285, %s299
      %p301 = scmp.eq.s32.totalorder %s44, 0
      %p302 = por %p300, %p301
      %s304 = sadd.s32 %s303, 1
      %p307 = scmp.eq.s32.totalorder %s38, 1
      %p308 = scmp.ne.s32.totalorder %s303, %s305
      %p309 = scmp.eq.s32.totalorder %s38, 0
      %p310 = por %p308, %p309
      %p311 = scmp.ne.s32.totalorder %s303, %s305
      %p312 = scmp.eq.s32.totalorder %s43, 1
      %p313 = por %p311, %p312
      %p314 = scmp.ne.s32.totalorder %s305, %s306
      %p315 = scmp.eq.s32.totalorder %s43, 0
      %p316 = por %p314, %p315
      %p317 = scmp.ne.s32.totalorder %s305, %s306
      %p318 = scmp.eq.s32.totalorder %s44, 1
      %p319 = por %p317, %p318
      %p321 = scmp.ne.s32.totalorder %s306, %s320
      %p322 = scmp.eq.s32.totalorder %s44, 0
      %p323 = por %p321, %p322
      %s325 = sadd.s32 %s324, 1
      %p328 = scmp.eq.s32.totalorder %s38, 1
      %p329 = scmp.ne.s32.totalorder %s324, %s326
      %p330 = scmp.eq.s32.totalorder %s38, 0
      %p331 = por %p329, %p330
      %p332 = scmp.ne.s32.totalorder %s324, %s326
      %p333 = scmp.eq.s32.totalorder %s43, 1
      %p334 = por %p332, %p333
      %p335 = scmp.ne.s32.totalorder %s326, %s327
      %p336 = scmp.eq.s32.totalorder %s43, 0
      %p337 = por %p335, %p336
      %p338 = scmp.ne.s32.totalorder %s326, %s327
      %p339 = scmp.eq.s32.totalorder %s44, 1
      %p340 = por %p338, %p339
      %p342 = scmp.ne.s32.totalorder %s327, %s341
      %p343 = scmp.eq.s32.totalorder %s44, 0
      %p344 = por %p342, %p343
      %s346 = sadd.s32 %s345, 1
      %p349 = scmp.eq.s32.totalorder %s38, 1
      %p350 = scmp.ne.s32.totalorder %s345, %s347
      %p351 = scmp.eq.s32.totalorder %s38, 0
      %p352 = por %p350, %p351
      %p353 = scmp.ne.s32.totalorder %s345, %s347
      %p354 = scmp.eq.s32.totalorder %s43, 1
      %p355 = por %p353, %p354
      %p356 = scmp.ne.s32.totalorder %s347, %s348
      %p357 = scmp.eq.s32.totalorder %s43, 0
      %p358 = por %p356, %p357
      %p359 = scmp.ne.s32.totalorder %s347, %s348
      %p360 = scmp.eq.s32.totalorder %s44, 1
      %p361 = por %p359, %p360
      %p363 = scmp.ne.s32.totalorder %s348, %s362
      %p364 = scmp.eq.s32.totalorder %s44, 0
      %p365 = por %p363, %p364
      %s367 = sadd.s32 %s366, 1
      %p370 = scmp.eq.s32.totalorder %s38, 1
      %p371 = scmp.ne.s32.totalorder %s366, %s368
      %p372 = scmp.eq.s32.totalorder %s38, 0
      %p373 = por %p371, %p372
      %p374 = scmp.ne.s32.totalorder %s366, %s368
      %p375 = scmp.eq.s32.totalorder %s43, 1
      %p376 = por %p374, %p375
      %p377 = scmp.ne.s32.totalorder %s368, %s369
      %p378 = scmp.eq.s32.totalorder %s43, 0
      %p379 = por %p377, %p378
      %p380 = scmp.ne.s32.totalorder %s368, %s369
      %p381 = scmp.eq.s32.totalorder %s44, 1
      %p382 = por %p380, %p381
      %p384 = scmp.ne.s32.totalorder %s369, %s383
      %p385 = scmp.eq.s32.totalorder %s44, 0
      %p386 = por %p384, %p385
      %s388 = sadd.s32 %s387, 1
      %p391 = scmp.eq.s32.totalorder %s38, 1
      %p392 = scmp.ne.s32.totalorder %s387, %s389
      %p393 = scmp.eq.s32.totalorder %s38, 0
      %p394 = por %p392, %p393
      %p395 = scmp.ne.s32.totalorder %s387, %s389
      %p396 = scmp.eq.s32.totalorder %s43, 1
      %p397 = por %p395, %p396
      %p398 = scmp.ne.s32.totalorder %s389, %s390
      %p399 = scmp.eq.s32.totalorder %s43, 0
      %p400 = por %p398, %p399
      %p401 = scmp.ne.s32.totalorder %s389, %s390
      %p402 = scmp.eq.s32.totalorder %s44, 1
      %p403 = por %p401, %p402
      %p405 = scmp.ne.s32.totalorder %s390, %s404
      %p406 = scmp.eq.s32.totalorder %s44, 0
      %p407 = por %p405, %p406
      %s409 = sadd.s32 %s408, 1
      %p412 = scmp.eq.s32.totalorder %s38, 1
      %p413 = scmp.ne.s32.totalorder %s408, %s410
      %p414 = scmp.eq.s32.totalorder %s38, 0
      %p415 = por %p413, %p414
      %p416 = scmp.ne.s32.totalorder %s408, %s410
      %p417 = scmp.eq.s32.totalorder %s43, 1
      %p418 = por %p416, %p417
      %p419 = scmp.ne.s32.totalorder %s410, %s411
      %p420 = scmp.eq.s32.totalorder %s43, 0
      %p421 = por %p419, %p420
      %p422 = scmp.ne.s32.totalorder %s410, %s411
      %p423 = scmp.eq.s32.totalorder %s44, 1
      %p424 = por %p422, %p423
      %p426 = scmp.ne.s32.totalorder %s411, %s425
      %p427 = scmp.eq.s32.totalorder %s44, 0
      %p428 = por %p426, %p427
      %s430 = sadd.s32 %s429, 1
      %p433 = scmp.eq.s32.totalorder %s38, 1
      %p434 = scmp.ne.s32.totalorder %s429, %s431
      %p435 = scmp.eq.s32.totalorder %s38, 0
      %p436 = por %p434, %p435
      %p437 = scmp.ne.s32.totalorder %s429, %s431
      %p438 = scmp.eq.s32.totalorder %s43, 1
      %p439 = por %p437, %p438
      %p440 = scmp.ne.s32.totalorder %s431, %s432
      %p441 = scmp.eq.s32.totalorder %s43, 0
      %p442 = por %p440, %p441
      %p443 = scmp.ne.s32.totalorder %s431, %s432
      %p444 = scmp.eq.s32.totalorder %s44, 1
      %p445 = por %p443, %p444
      %p447 = scmp.ne.s32.totalorder %s432, %s446
      %p448 = scmp.eq.s32.totalorder %s44, 0
      %p449 = por %p447, %p448
      %s451 = sadd.s32 %s450, 1
      %p454 = scmp.eq.s32.totalorder %s38, 1
      %p455 = scmp.ne.s32.totalorder %s450, %s452
      %p456 = scmp.eq.s32.totalorder %s38, 0
      %p457 = por %p455, %p456
      %p458 = scmp.ne.s32.totalorder %s450, %s452
      %p459 = scmp.eq.s32.totalorder %s43, 1
      %p460 = por %p458, %p459
      %p461 = scmp.ne.s32.totalorder %s452, %s453
      %p462 = scmp.eq.s32.totalorder %s43, 0
      %p463 = por %p461, %p462
      %p464 = scmp.ne.s32.totalorder %s452, %s453
      %p465 = scmp.eq.s32.totalorder %s44, 1
      %p466 = por %p464, %p465
      %p468 = scmp.ne.s32.totalorder %s453, %s467
      %p469 = scmp.eq.s32.totalorder %s44, 0
      %p470 = por %p468, %p469
      %s472 = sadd.s32 %s471, 1
      %p475 = scmp.eq.s32.totalorder %s38, 1
      %p476 = scmp.ne.s32.totalorder %s471, %s473
      %p477 = scmp.eq.s32.totalorder %s38, 0
      %p478 = por %p476, %p477
      %p479 = scmp.ne.s32.totalorder %s471, %s473
      %p480 = scmp.eq.s32.totalorder %s43, 1
      %p481 = por %p479, %p480
      %p482 = scmp.ne.s32.totalorder %s473, %s474
      %p483 = scmp.eq.s32.totalorder %s43, 0
      %p484 = por %p482, %p483
      %p485 = scmp.ne.s32.totalorder %s473, %s474
      %p486 = scmp.eq.s32.totalorder %s44, 1
      %p487 = por %p485, %p486
      %p489 = scmp.ne.s32.totalorder %s474, %s488
      %p490 = scmp.eq.s32.totalorder %s44, 0
      %p491 = por %p489, %p490
      %s493 = sadd.s32 %s492, 1
      %p496 = scmp.eq.s32.totalorder %s38, 1
      %p497 = scmp.ne.s32.totalorder %s492, %s494
      %p498 = scmp.eq.s32.totalorder %s38, 0
      %p499 = por %p497, %p498
      %p500 = scmp.ne.s32.totalorder %s492, %s494
      %p501 = scmp.eq.s32.totalorder %s43, 1
      %p502 = por %p500, %p501
      %p503 = scmp.ne.s32.totalorder %s494, %s495
      %p504 = scmp.eq.s32.totalorder %s43, 0
      %p505 = por %p503, %p504
      %p506 = scmp.ne.s32.totalorder %s494, %s495
      %p507 = scmp.eq.s32.totalorder %s44, 1
      %p508 = por %p506, %p507
      %p510 = scmp.ne.s32.totalorder %s495, %s509
      %p511 = scmp.eq.s32.totalorder %s44, 0
      %p512 = por %p510, %p511
      %s514 = sadd.s32 %s513, 1
      %p517 = scmp.eq.s32.totalorder %s38, 1
      %p518 = scmp.ne.s32.totalorder %s513, %s515
      %p519 = scmp.eq.s32.totalorder %s38, 0
      %p520 = por %p518, %p519
      %p521 = scmp.ne.s32.totalorder %s513, %s515
      %p522 = scmp.eq.s32.totalorder %s43, 1
      %p523 = por %p521, %p522
      %p524 = scmp.ne.s32.totalorder %s515, %s516
      %p525 = scmp.eq.s32.totalorder %s43, 0
      %p526 = por %p524, %p525
      %p527 = scmp.ne.s32.totalorder %s515, %s516
      %p528 = scmp.eq.s32.totalorder %s44, 1
      %p529 = por %p527, %p528
      %p531 = scmp.ne.s32.totalorder %s516, %s530
      %p532 = scmp.eq.s32.totalorder %s44, 0
      %p533 = por %p531, %p532
      %s535 = sadd.s32 %s534, 1
      %p538 = scmp.eq.s32.totalorder %s38, 1
      %p539 = scmp.ne.s32.totalorder %s534, %s536
      %p540 = scmp.eq.s32.totalorder %s38, 0
      %p541 = por %p539, %p540
      %p542 = scmp.ne.s32.totalorder %s534, %s536
      %p543 = scmp.eq.s32.totalorder %s43, 1
      %p544 = por %p542, %p543
      %p545 = scmp.ne.s32.totalorder %s536, %s537
      %p546 = scmp.eq.s32.totalorder %s43, 0
      %p547 = por %p545, %p546
      %p548 = scmp.ne.s32.totalorder %s536, %s537
      %p549 = scmp.eq.s32.totalorder %s44, 1
      %p550 = por %p548, %p549
      %p552 = scmp.ne.s32.totalorder %s537, %s551
      %p553 = scmp.eq.s32.totalorder %s44, 0
      %p554 = por %p552, %p553
      %s556 = sadd.s32 %s555, 1
      %p559 = scmp.eq.s32.totalorder %s38, 1
      %p560 = scmp.ne.s32.totalorder %s555, %s557
      %p561 = scmp.eq.s32.totalorder %s38, 0
      %p562 = por %p560, %p561
      %p563 = scmp.ne.s32.totalorder %s555, %s557
      %p564 = scmp.eq.s32.totalorder %s43, 1
      %p565 = por %p563, %p564
      %p566 = scmp.ne.s32.totalorder %s557, %s558
      %p567 = scmp.eq.s32.totalorder %s43, 0
      %p568 = por %p566, %p567
      %p569 = scmp.ne.s32.totalorder %s557, %s558
      %p570 = scmp.eq.s32.totalorder %s44, 1
      %p571 = por %p569, %p570
      %p573 = scmp.ne.s32.totalorder %s558, %s572
      %p574 = scmp.eq.s32.totalorder %s44, 0
      %p575 = por %p573, %p574
      %s577 = sadd.s32 %s576, 1
      %p580 = scmp.eq.s32.totalorder %s38, 1
      %p581 = scmp.ne.s32.totalorder %s576, %s578
      %p582 = scmp.eq.s32.totalorder %s38, 0
      %p583 = por %p581, %p582
      %p584 = scmp.ne.s32.totalorder %s576, %s578
      %p585 = scmp.eq.s32.totalorder %s43, 1
      %p586 = por %p584, %p585
      %p587 = scmp.ne.s32.totalorder %s578, %s579
      %p588 = scmp.eq.s32.totalorder %s43, 0
      %p589 = por %p587, %p588
      %p590 = scmp.ne.s32.totalorder %s578, %s579
      %p591 = scmp.eq.s32.totalorder %s44, 1
      %p592 = por %p590, %p591
      %p594 = scmp.ne.s32.totalorder %s579, %s593
      %p595 = scmp.eq.s32.totalorder %s44, 0
      %p596 = por %p594, %p595
      %s598 = sadd.s32 %s597, 1
      %p601 = scmp.eq.s32.totalorder %s38, 1
      %p602 = scmp.ne.s32.totalorder %s597, %s599
      %p603 = scmp.eq.s32.totalorder %s38, 0
      %p604 = por %p602, %p603
      %p605 = scmp.ne.s32.totalorder %s597, %s599
      %p606 = scmp.eq.s32.totalorder %s43, 1
      %p607 = por %p605, %p606
      %p608 = scmp.ne.s32.totalorder %s599, %s600
      %p609 = scmp.eq.s32.totalorder %s43, 0
      %p610 = por %p608, %p609
      %p611 = scmp.ne.s32.totalorder %s599, %s600
      %p612 = scmp.eq.s32.totalorder %s44, 1
      %p613 = por %p611, %p612
      %p615 = scmp.ne.s32.totalorder %s600, %s614
      %p616 = scmp.eq.s32.totalorder %s44, 0
      %p617 = por %p615, %p616
      %s618 = ssub.s32 %s38, %s45
      %p619 = scmp.eq.s32.totalorder %s618, 0
      %s621 = sadd.s32 %s620, 1
      %s622 = scalar_select %p619, %s620, %s621
      %p625 = pneg %p619
      %p626 = scmp.eq.s32.totalorder %s38, 1
      %p627 = por %p625, %p626
      %p628 = scmp.ne.s32.totalorder %s620, %s623
      %p629 = scmp.eq.s32.totalorder %s38, 0
      %p630 = por %p628, %p629
      %p631 = scmp.ne.s32.totalorder %s620, %s623
      %p632 = scmp.eq.s32.totalorder %s43, 1
      %p633 = por %p631, %p632
      %p634 = scmp.ne.s32.totalorder %s623, %s624
      %p635 = scmp.eq.s32.totalorder %s43, 0
      %p636 = por %p634, %p635
      %p637 = scmp.ne.s32.totalorder %s623, %s624
      %p638 = scmp.eq.s32.totalorder %s44, 1
      %p639 = por %p637, %p638
      %p641 = scmp.ne.s32.totalorder %s624, %s640
      %p642 = scmp.eq.s32.totalorder %s44, 0
      %p643 = por %p641, %p642
      %s644 = ssub.s32 %s38, %s45
      %p645 = scmp.eq.s32.totalorder %s644, 0
      %s647 = sadd.s32 %s646, 1
      %s648 = scalar_select %p645, %s646, %s647
      %p651 = pneg %p645
      %p652 = scmp.eq.s32.totalorder %s38, 1
      %p653 = por %p651, %p652
      %p654 = scmp.ne.s32.totalorder %s646, %s649
      %p655 = scmp.eq.s32.totalorder %s38, 0
      %p656 = por %p654, %p655
      %p657 = scmp.ne.s32.totalorder %s646, %s649
      %p658 = scmp.eq.s32.totalorder %s43, 1
      %p659 = por %p657, %p658
      %p660 = scmp.ne.s32.totalorder %s649, %s650
      %p661 = scmp.eq.s32.totalorder %s43, 0
      %p662 = por %p660, %p661
      %p663 = scmp.ne.s32.totalorder %s649, %s650
      %p664 = scmp.eq.s32.totalorder %s44, 1
      %p665 = por %p663, %p664
      %p667 = scmp.ne.s32.totalorder %s650, %s666
      %p668 = scmp.eq.s32.totalorder %s44, 0
      %p669 = por %p667, %p668
      %p670 = scmp.le.s32.totalorder 1, %s38
      %p671 = scmp.lt.s32.totalorder %s38, 3
      %p672 = pnand %p670, %p671
      %p673 = pneg %p672
      // Predicated region
      $region9: #{transformer_mil_forward.1} parent=5 // pred_check
        _
      $region10: #{transformer_mil_forward.1} parent=5 // pred_check_branch
        %675 = sbr.rel (%p672) target = $region12
      $region11: #{transformer_mil_forward.1} parent=5 // pred_region
        %s676 = ssub.s32 %s38, 1
        // Predicated region
        $region13: #{transformer_mil_forward.1} parent=11 // pred_check
          %p677 = pneg %p85
        $region14: #{transformer_mil_forward.1} parent=11 // pred_check_branch
          %679 = sbr.rel (%p677) target = $region16
        $region15: #{transformer_mil_forward.1} parent=11 // pred_region
          _
        $region16: #{transformer_mil_forward.1} parent=11 // pred_fallthru
          _
        // Predicated region
        $region17: #{transformer_mil_forward.1} parent=11 // pred_check
          %p680 = pneg %p106
        $region18: #{transformer_mil_forward.1} parent=11 // pred_check_branch
          %682 = sbr.rel (%p680) target = $region20
        $region19: #{transformer_mil_forward.1} parent=11 // pred_region
          _
        $region20: #{transformer_mil_forward.1} parent=11 // pred_fallthru
          _
        // Predicated region
        $region21: #{transformer_mil_forward.1} parent=11 // pred_check
          %p683 = pneg %p127
        $region22: #{transformer_mil_forward.1} parent=11 // pred_check_branch
          %685 = sbr.rel (%p683) target = $region24
        $region23: #{transformer_mil_forward.1} parent=11 // pred_region
          _
        $region24: #{transformer_mil_forward.1} parent=11 // pred_fallthru
          _
        // Predicated region
        $region25: #{transformer_mil_forward.1} parent=11 // pred_check
          %p686 = pneg %p148
        $region26: #{transformer_mil_forward.1} parent=11 // pred_check_branch
          %688 = sbr.rel (%p686) target = $region28
        $region27: #{transformer_mil_forward.1} parent=11 // pred_region
          _
        $region28: #{transformer_mil_forward.1} parent=11 // pred_fallthru
          _
        // Predicated region
        $region29: #{transformer_mil_forward.1} parent=11 // pred_check
          %p689 = pneg %p169
        $region30: #{transformer_mil_forward.1} parent=11 // pred_check_branch
          %691 = sbr.rel (%p689) target = $region32
        $region31: #{transformer_mil_forward.1} parent=11 // pred_region
          _
        $region32: #{transformer_mil_forward.1} parent=11 // pred_fallthru
          _
        // Predicated region
        $region33: #{transformer_mil_forward.1} parent=11 // pred_check
          %p692 = pneg %p190
        $region34: #{transformer_mil_forward.1} parent=11 // pred_check_branch
          %694 = sbr.rel (%p692) target = $region36
        $region35: #{transformer_mil_forward.1} parent=11 // pred_region
          _
        $region36: #{transformer_mil_forward.1} parent=11 // pred_fallthru
          _
        // Predicated region
        $region37: #{transformer_mil_forward.1} parent=11 // pred_check
          %p695 = pneg %p211
        $region38: #{transformer_mil_forward.1} parent=11 // pred_check_branch
          %697 = sbr.rel (%p695) target = $region40
        $region39: #{transformer_mil_forward.1} parent=11 // pred_region
          _
        $region40: #{transformer_mil_forward.1} parent=11 // pred_fallthru
          _
        // Predicated region
        $region41: #{transformer_mil_forward.1} parent=11 // pred_check
          %p698 = pneg %p232
        $region42: #{transformer_mil_forward.1} parent=11 // pred_check_branch
          %700 = sbr.rel (%p698) target = $region44
        $region43: #{transformer_mil_forward.1} parent=11 // pred_region
          _
        $region44: #{transformer_mil_forward.1} parent=11 // pred_fallthru
          _
        // Predicated region
        $region45: #{transformer_mil_forward.1} parent=11 // pred_check
          %p701 = pneg %p253
        $region46: #{transformer_mil_forward.1} parent=11 // pred_check_branch
          %703 = sbr.rel (%p701) target = $region48
        $region47: #{transformer_mil_forward.1} parent=11 // pred_region
          _
        $region48: #{transformer_mil_forward.1} parent=11 // pred_fallthru
          _
        // Predicated region
        $region49: #{transformer_mil_forward.1} parent=11 // pred_check
          %p704 = pneg %p274
        $region50: #{transformer_mil_forward.1} parent=11 // pred_check_branch
          %706 = sbr.rel (%p704) target = $region52
        $region51: #{transformer_mil_forward.1} parent=11 // pred_region
          _
        $region52: #{transformer_mil_forward.1} parent=11 // pred_fallthru
          _
        // Predicated region
        $region53: #{transformer_mil_forward.1} parent=11 // pred_check
          %p707 = pneg %p295
        $region54: #{transformer_mil_forward.1} parent=11 // pred_check_branch
          %709 = sbr.rel (%p707) target = $region56
        $region55: #{transformer_mil_forward.1} parent=11 // pred_region
          _
        $region56: #{transformer_mil_forward.1} parent=11 // pred_fallthru
          _
        // Predicated region
        $region57: #{transformer_mil_forward.1} parent=11 // pred_check
          %p710 = pneg %p316
        $region58: #{transformer_mil_forward.1} parent=11 // pred_check_branch
          %712 = sbr.rel (%p710) target = $region60
        $region59: #{transformer_mil_forward.1} parent=11 // pred_region
          _
        $region60: #{transformer_mil_forward.1} parent=11 // pred_fallthru
          _
        // Predicated region
        $region61: #{transformer_mil_forward.1} parent=11 // pred_check
          %p713 = pneg %p337
        $region62: #{transformer_mil_forward.1} parent=11 // pred_check_branch
          %715 = sbr.rel (%p713) target = $region64
        $region63: #{transformer_mil_forward.1} parent=11 // pred_region
          _
        $region64: #{transformer_mil_forward.1} parent=11 // pred_fallthru
          _
        // Predicated region
        $region65: #{transformer_mil_forward.1} parent=11 // pred_check
          %p716 = pneg %p358
        $region66: #{transformer_mil_forward.1} parent=11 // pred_check_branch
          %718 = sbr.rel (%p716) target = $region68
        $region67: #{transformer_mil_forward.1} parent=11 // pred_region
          _
        $region68: #{transformer_mil_forward.1} parent=11 // pred_fallthru
          _
        // Predicated region
        $region69: #{transformer_mil_forward.1} parent=11 // pred_check
          %p719 = pneg %p379
        $region70: #{transformer_mil_forward.1} parent=11 // pred_check_branch
          %721 = sbr.rel (%p719) target = $region72
        $region71: #{transformer_mil_forward.1} parent=11 // pred_region
          _
        $region72: #{transformer_mil_forward.1} parent=11 // pred_fallthru
          _
        // Predicated region
        $region73: #{transformer_mil_forward.1} parent=11 // pred_check
          %p722 = pneg %p400
        $region74: #{transformer_mil_forward.1} parent=11 // pred_check_branch
          %724 = sbr.rel (%p722) target = $region76
        $region75: #{transformer_mil_forward.1} parent=11 // pred_region
          _
        $region76: #{transformer_mil_forward.1} parent=11 // pred_fallthru
          _
        // Predicated region
        $region77: #{transformer_mil_forward.1} parent=11 // pred_check
          %p725 = pneg %p421
        $region78: #{transformer_mil_forward.1} parent=11 // pred_check_branch
          %727 = sbr.rel (%p725) target = $region80
        $region79: #{transformer_mil_forward.1} parent=11 // pred_region
          _
        $region80: #{transformer_mil_forward.1} parent=11 // pred_fallthru
          _
        // Predicated region
        $region81: #{transformer_mil_forward.1} parent=11 // pred_check
          %p728 = pneg %p442
        $region82: #{transformer_mil_forward.1} parent=11 // pred_check_branch
          %730 = sbr.rel (%p728) target = $region84
        $region83: #{transformer_mil_forward.1} parent=11 // pred_region
          _
        $region84: #{transformer_mil_forward.1} parent=11 // pred_fallthru
          _
        // Predicated region
        $region85: #{transformer_mil_forward.1} parent=11 // pred_check
          %p731 = pneg %p463
        $region86: #{transformer_mil_forward.1} parent=11 // pred_check_branch
          %733 = sbr.rel (%p731) target = $region88
        $region87: #{transformer_mil_forward.1} parent=11 // pred_region
          _
        $region88: #{transformer_mil_forward.1} parent=11 // pred_fallthru
          _
        // Predicated region
        $region89: #{transformer_mil_forward.1} parent=11 // pred_check
          %p734 = pneg %p484
        $region90: #{transformer_mil_forward.1} parent=11 // pred_check_branch
          %736 = sbr.rel (%p734) target = $region92
        $region91: #{transformer_mil_forward.1} parent=11 // pred_region
          _
        $region92: #{transformer_mil_forward.1} parent=11 // pred_fallthru
          _
        // Predicated region
        $region93: #{transformer_mil_forward.1} parent=11 // pred_check
          %p737 = pneg %p505
        $region94: #{transformer_mil_forward.1} parent=11 // pred_check_branch
          %739 = sbr.rel (%p737) target = $region96
        $region95: #{transformer_mil_forward.1} parent=11 // pred_region
          _
        $region96: #{transformer_mil_forward.1} parent=11 // pred_fallthru
          _
        // Predicated region
        $region97: #{transformer_mil_forward.1} parent=11 // pred_check
          %p740 = pneg %p526
        $region98: #{transformer_mil_forward.1} parent=11 // pred_check_branch
          %742 = sbr.rel (%p740) target = $region100
        $region99: #{transformer_mil_forward.1} parent=11 // pred_region
          _
        $region100: #{transformer_mil_forward.1} parent=11 // pred_fallthru
          _
        // Predicated region
        $region101: #{transformer_mil_forward.1} parent=11 // pred_check
          %p743 = pneg %p547
        $region102: #{transformer_mil_forward.1} parent=11 // pred_check_branch
          %745 = sbr.rel (%p743) target = $region104
        $region103: #{transformer_mil_forward.1} parent=11 // pred_region
          _
        $region104: #{transformer_mil_forward.1} parent=11 // pred_fallthru
          _
        // Predicated region
        $region105: #{transformer_mil_forward.1} parent=11 // pred_check
          %p746 = pneg %p568
        $region106: #{transformer_mil_forward.1} parent=11 // pred_check_branch
          %748 = sbr.rel (%p746) target = $region108
        $region107: #{transformer_mil_forward.1} parent=11 // pred_region
          _
        $region108: #{transformer_mil_forward.1} parent=11 // pred_fallthru
          _
        // Predicated region
        $region109: #{transformer_mil_forward.1} parent=11 // pred_check
          %p749 = pneg %p589
        $region110: #{transformer_mil_forward.1} parent=11 // pred_check_branch
          %751 = sbr.rel (%p749) target = $region112
        $region111: #{transformer_mil_forward.1} parent=11 // pred_region
          _
        $region112: #{transformer_mil_forward.1} parent=11 // pred_fallthru
          _
        // Predicated region
        $region113: #{transformer_mil_forward.1} parent=11 // pred_check
          %p752 = pneg %p610
        $region114: #{transformer_mil_forward.1} parent=11 // pred_check_branch
          %754 = sbr.rel (%p752) target = $region116
        $region115: #{transformer_mil_forward.1} parent=11 // pred_region
          _
        $region116: #{transformer_mil_forward.1} parent=11 // pred_fallthru
          _
      $region12: #{transformer_mil_forward.1} parent=5 // pred_fallthru
        _
      %p755 = scmp.lt.s32.totalorder %s38, 2
      // Predicated region
      $region117: #{transformer_mil_forward.1} parent=5 // pred_check
        %p756 = pneg %p755
      $region118: #{transformer_mil_forward.1} parent=5 // pred_check_branch
        %758 = sbr.rel (%p756) target = $region120
      $region119: #{transformer_mil_forward.1} parent=5 // pred_region
        // Predicated region
        $region121: #{transformer_mil_forward.1} parent=119 // pred_check
          %p759 = pneg %p58
        $region122: #{transformer_mil_forward.1} parent=119 // pred_check_branch
          %761 = sbr.rel (%p759) target = $region124
        $region123: #{transformer_mil_forward.1} parent=119 // pred_region
          %p762 = scmp.lt.s32.totalorder %s38, 1
          %s763 = scalar_select %p762, %s38, 1
          %s764 = smul.addr %s763, 4
          %s765 = smul.addr %s764, 8
          %s766 = scalar_lea.vmem %s0, %s765
        $region124: #{transformer_mil_forward.1} parent=119 // pred_fallthru
          _
      $region120: #{transformer_mil_forward.1} parent=5 // pred_fallthru
        _
      %p767 = scmp.le.s32.totalorder 1, %s38
      %p768 = scmp.lt.s32.totalorder %s38, 3
      %p769 = pnand %p767, %p768
      %p770 = pneg %p769
      // Predicated region
      $region125: #{transformer_mil_forward.1} parent=5 // pred_check
        _
      $region126: #{transformer_mil_forward.1} parent=5 // pred_check_branch
        %772 = sbr.rel (%p769) target = $region128
      $region127: #{transformer_mil_forward.1} parent=5 // pred_region
        %s773 = ssub.s32 %s38, 1
        %p774 = scmp.lt.s32.totalorder %s43, 1
        %s775 = scalar_select %p774, %s43, 1
        %s776 = smul.addr %s775, 4
        %s777 = smul.addr %s776, 8
        %s778 = scalar_lea.vmem %s0, %s777
        %p779 = pneg %p64
        %p780 = pneg %p61
        %p781 = pneg %p85
        %p782 = pneg %p82
        %p783 = pneg %p106
        %p784 = pneg %p103
        %p785 = pneg %p127
        %p786 = pneg %p124
        %p787 = pneg %p148
        %p788 = pneg %p145
        %p789 = pneg %p169
        %p790 = pneg %p166
        %p791 = pneg %p190
        %p792 = pneg %p187
        %p793 = pneg %p211
        %p794 = pneg %p208
        %p795 = pneg %p232
        %p796 = pneg %p229
        %p797 = pneg %p253
        %p798 = pneg %p250
        %p799 = pneg %p274
        %p800 = pneg %p271
        %p801 = pneg %p295
        %p802 = pneg %p292
        %p803 = pneg %p316
        %p804 = pneg %p313
        %p805 = pneg %p337
        %p806 = pneg %p334
        %p807 = pneg %p358
        %p808 = pneg %p355
        %p809 = pneg %p379
        %p810 = pneg %p376
        %p811 = pneg %p400
        %p812 = pneg %p397
        %p813 = pneg %p421
        %p814 = pneg %p418
        %p815 = pneg %p442
        %p816 = pneg %p439
        %p817 = pneg %p463
        %p818 = pneg %p460
        %p819 = pneg %p484
        %p820 = pneg %p481
        %p821 = pneg %p505
        %p822 = pneg %p502
        %p823 = pneg %p526
        %p824 = pneg %p523
        %p825 = pneg %p547
        %p826 = pneg %p544
        %p827 = pneg %p568
        %p828 = pneg %p565
        %p829 = pneg %p589
        %p830 = pneg %p586
        %p831 = pneg %p610
        %p832 = pneg %p607
        %p833 = pneg %p636
        %p834 = pneg %p633
        %s835 = sand.u32 %s623, 1
        %s836 = scalar_lea.sflag [#allocation4], %s835
        %s837 = sand.u32 %s623, 1
        %s838 = scalar_lea.vmem [#allocation3], %s837
        %p839 = pneg %p662
        %p840 = pneg %p659
        %p841 = scmp.lt.s32.totalorder %s43, 1
        %s842 = scalar_select %p841, %s43, 1
        %s843 = smul.addr %s842, 7
        %s844 = smul.addr %s843, 8
        %s845 = scalar_lea.vmem %s28, %s844
        %p846 = scmp.lt.s32.totalorder %s43, 1
        %s847 = scalar_select %p846, %s43, 1
        %s848 = smul.addr %s847, 4
        %s849 = smul.addr %s848, 8
        %s850 = scalar_lea.vmem %s0, %s849
        %p851 = scmp.lt.s32.totalorder %s43, 1
        %s852 = scalar_select %p851, %s43, 1
        %s853 = smul.addr %s852, 7
        %s854 = smul.addr %s853, 8
        %s855 = scalar_lea.vmem %s28, %s854
        %v856 = vld [vmem:[%s850] sm:$0xff]
        %v857 = vld [vmem:[%s850 + $0x8] sm:$0xff]
        %v858 = vld [vmem:[%s850 + $0x10] sm:$0x1]
        %v859 = vld [vmem:[%s850 + $0x18] sm:$0x1]
        %v860 = vld [vmem:[%s1] sm:$0xff]
        %v861 = vld [vmem:[%s1 + $0x8] sm:$0xff]
        %v862 = vld [vmem:[%s1 + $0x10] sm:$0xff]
        %v863 = vld [vmem:[%s1 + $0x18] sm:$0xff]
        %v864 = vld [vmem:[%s1 + $0x20] sm:$0xff]
        %v865 = vld [vmem:[%s1 + $0x28] sm:$0xff]
        %v866 = vld [vmem:[%s1 + $0x30] sm:$0xff]
        %v867 = vld [vmem:[%s1 + $0x38] sm:$0xff]
        %v868 = vld [vmem:[%s1 + $0x40] sm:$0xff]
        %v869 = vld [vmem:[%s1 + $0x48] sm:$0xff]
        %v870 = vld [vmem:[%s1 + $0x50] sm:$0xff]
        %v871 = vld [vmem:[%s1 + $0x58] sm:$0xff]
        %v872 = vld [vmem:[%s1 + $0x60] sm:$0xff]
        %v873 = vld [vmem:[%s1 + $0x68] sm:$0xff]
        %v874 = vld [vmem:[%s1 + $0x70] sm:$0xff]
        %v875 = vld [vmem:[%s1 + $0x78] sm:$0xff]
        %v876 = vld [vmem:[%s1 + $0x80] sm:$0xff]
        %v877 = vld [vmem:[%s1 + $0x88] sm:$0xff]
        %v878 = vld [vmem:[%s1 + $0x90] sm:$0xff]
        %v879 = vld [vmem:[%s1 + $0x98] sm:$0xff]
        %v880 = vld [vmem:[%s1 + $0xa0] sm:$0xff]
        %v881 = vld [vmem:[%s1 + $0xa8] sm:$0xff]
        %v882 = vld [vmem:[%s1 + $0xb0] sm:$0xff]
        %v883 = vld [vmem:[%s1 + $0xb8] sm:$0xff]
        %v884 = vld [vmem:[%s2] sm:$0x1]
        %v886 = vlaneseq
        %v887 = vshrl.u32 %v886, 7
        %v888 = vsub.s32 0, %v887
        %v889 = vrot.slane %v884, %v888
        %vm891 = vcmask 523264
        %v893 = vsel %vm891, %v857, 0
        %v896 = vsel %vm891, %v859, 0
        %898 = vmatprep.subr.mxu0 0.0
        %899 = vmatpush1.msra.mxu0 %v860
        %900 = vmatprep.subr.mxu0 0.0
        %901 = vmatpush1.msra.mxu0 %v861
        %902 = vmatprep.subr.mxu0 0.0
        %903 = vmatpush1.msra.mxu0 %v862
        %904 = vmatprep.subr.mxu0 0.0
        %905 = vmatpush1.msra.mxu0 %v863
        %906 = vmatprep.subr.mxu0 0.0
        %907 = vmatpush1.msra.mxu0 %v864
        %908 = vmatprep.subr.mxu0 0.0
        %909 = vmatpush1.msra.mxu0 %v865
        %910 = vmatprep.subr.mxu0 0.0
        %911 = vmatpush1.msra.mxu0 %v866
        %912 = vmatprep.subr.mxu0 0.0
        %913 = vmatpush1.msra.mxu0 %v867
        %914 = vmatprep.subr.mxu0 0.0
        %915 = vmatpush1.msra.mxu0 %v868
        %916 = vmatprep.subr.mxu0 0.0
        %917 = vmatpush1.msra.mxu0 %v869
        %918 = vmatprep.subr.mxu0 0.0
        %919 = vmatpush1.msra.mxu0 %v870
        %920 = vmatprep.subr.mxu0 0.0
        %921 = vmatpush1.msra.mxu0 %v871
        %922 = vmatprep.subr.mxu0 0.0
        %923 = vmatpush1.msra.mxu0 %v872
        %924 = vmatprep.subr.mxu0 0.0
        %925 = vmatpush1.msra.mxu0 %v873
        %926 = vmatprep.subr.mxu0 0.0
        %927 = vmatpush1.msra.mxu0 %v874
        %928 = vmatprep.subr.mxu0 0.0
        %929 = vmatpush1.msra.mxu0 %v875
        %930 = vmatprep.subr.mxu0 0.0
        %931 = vmatpush1.msra.mxu0 %v876
        %932 = vmatprep.subr.mxu0 0.0
        %933 = vmatpush1.msra.mxu0 %v877
        %934 = vmatprep.subr.mxu0 0.0
        %935 = vmatpush1.msra.mxu0 %v878
        %936 = vmatprep.subr.mxu0 0.0
        %937 = vmatpush1.msra.mxu0 %v879
        %938 = vmatprep.subr.mxu0 0.0
        %939 = vmatpush1.msra.mxu0 %v880
        %940 = vmatprep.subr.mxu0 0.0
        %941 = vmatpush1.msra.mxu0 %v881
        %942 = vmatprep.subr.mxu0 0.0
        %943 = vmatpush1.msra.mxu0 %v882
        %944 = vmatprep.subr.mxu0 0.0
        %945 = vmatpush1.msra.mxu0 %v883
        %946 = vmatprep.subr.mxu0 0.0
        %947 = vmatpush1.msra.mxu0 0.0
        %948 = vmatprep.subr.mxu0 0.0
        %949 = vmatpush1.msra.mxu0 0.0
        %950 = vmatprep.subr.mxu0 0.0
        %951 = vmatpush1.msra.mxu0 0.0
        %952 = vmatprep.subr.mxu0 0.0
        %953 = vmatpush1.msra.mxu0 0.0
        %954 = vmatprep.subr.mxu0 0.0
        %955 = vmatpush1.msra.mxu0 0.0
        %956 = vmatprep.subr.mxu0 0.0
        %957 = vmatpush1.msra.mxu0 0.0
        %958 = vmatprep.subr.mxu0 0.0
        %959 = vmatpush1.msra.mxu0 0.0
        %960 = vmatprep.subr.mxu0 0.0
        %961 = vmatpush1.msra.mxu0 0.0
        %962 = vmatprep.mubr.f32.mxu0 %v893
        %963 = vmatmul.mubr.f32.gmra.mrb[0].mxu0 %v856
        %v964 = vpop.f32.mrb[0].mxu0
        %v965 = vadd.f32 %v889, %v964
        %v966 = vpop.f32.mrb[0].mxu0
        %967 = vmatprep.mubr.f32.mxu0 %v896
        %968 = vmatmul.mubr.f32.gmra.mrb[0].mxu0 %v858
        %v969 = vpop.f32.mrb[0].mxu0
        %v970 = vadd.f32 %v889, %v969
        %v971 = vpop.f32.mrb[0].mxu0
        %972 = vdwg.mxu0
        %v973 = vmax.f32 %v965, 0.0
        %v974 = vmax.f32 %v970, 0.0
        %v975 = vld [vmem:[%s3] sm:$0xff]
        %v976 = vld [vmem:[%s3 + $0x8] sm:$0xff]
        %v977 = vld [vmem:[%s3 + $0x10] sm:$0xff]
        %v978 = vld [vmem:[%s3 + $0x18] sm:$0xff]
        %v979 = vld [vmem:[%s3 + $0x20] sm:$0xff]
        %v980 = vld [vmem:[%s3 + $0x28] sm:$0xff]
        %v981 = vld [vmem:[%s3 + $0x30] sm:$0xff]
        %v982 = vld [vmem:[%s3 + $0x38] sm:$0xff]
        %v983 = vld [vmem:[%s4] sm:$0x1]
        %v985 = vlaneseq
        %v986 = vshrl.u32 %v985, 7
        %v987 = vsub.s32 0, %v986
        %v988 = vrot.slane %v983, %v987
        %v991 = vsel %vm891, %v973, 0
        %v994 = vsel %vm891, %v974, 0
        %996 = vmatprep.subr.mxu0 0.0
        %997 = vmatpush1.msra.mxu0 %v975
        %998 = vmatprep.subr.mxu0 0.0
        %999 = vmatpush1.msra.mxu0 %v976
        %1000 = vmatprep.subr.mxu0 0.0
        %1001 = vmatpush1.msra.mxu0 %v977
        %1002 = vmatprep.subr.mxu0 0.0
        %1003 = vmatpush1.msra.mxu0 %v978
        %1004 = vmatprep.subr.mxu0 0.0
        %1005 = vmatpush1.msra.mxu0 %v979
        %1006 = vmatprep.subr.mxu0 0.0
        %1007 = vmatpush1.msra.mxu0 %v980
        %1008 = vmatprep.subr.mxu0 0.0
        %1009 = vmatpush1.msra.mxu0 %v981
        %1010 = vmatprep.subr.mxu0 0.0
        %1011 = vmatpush1.msra.mxu0 %v982
        %1012 = vmatprep.subr.mxu0 0.0
        %1013 = vmatpush1.msra.mxu0 0.0
        %1014 = vmatprep.subr.mxu0 0.0
        %1015 = vmatpush1.msra.mxu0 0.0
        %1016 = vmatprep.subr.mxu0 0.0
        %1017 = vmatpush1.msra.mxu0 0.0
        %1018 = vmatprep.subr.mxu0 0.0
        %1019 = vmatpush1.msra.mxu0 0.0
        %1020 = vmatprep.subr.mxu0 0.0
        %1021 = vmatpush1.msra.mxu0 0.0
        %1022 = vmatprep.subr.mxu0 0.0
        %1023 = vmatpush1.msra.mxu0 0.0
        %1024 = vmatprep.subr.mxu0 0.0
        %1025 = vmatpush1.msra.mxu0 0.0
        %1026 = vmatprep.subr.mxu0 0.0
        %1027 = vmatpush1.msra.mxu0 0.0
        %1028 = vmatprep.subr.mxu0 0.0
        %1029 = vmatpush1.msra.mxu0 0.0
        %1030 = vmatprep.subr.mxu0 0.0
        %1031 = vmatpush1.msra.mxu0 0.0
        %1032 = vmatprep.subr.mxu0 0.0
        %1033 = vmatpush1.msra.mxu0 0.0
        %1034 = vmatprep.subr.mxu0 0.0
        %1035 = vmatpush1.msra.mxu0 0.0
        %1036 = vmatprep.subr.mxu0 0.0
        %1037 = vmatpush1.msra.mxu0 0.0
        %1038 = vmatprep.subr.mxu0 0.0
        %1039 = vmatpush1.msra.mxu0 0.0
        %1040 = vmatprep.subr.mxu0 0.0
        %1041 = vmatpush1.msra.mxu0 0.0
        %1042 = vmatprep.subr.mxu0 0.0
        %1043 = vmatpush1.msra.mxu0 0.0
        %1044 = vmatprep.subr.mxu0 0.0
        %1045 = vmatpush1.msra.mxu0 0.0
        %1046 = vmatprep.subr.mxu0 0.0
        %1047 = vmatpush1.msra.mxu0 0.0
        %1048 = vmatprep.subr.mxu0 0.0
        %1049 = vmatpush1.msra.mxu0 0.0
        %1050 = vmatprep.subr.mxu0 0.0
        %1051 = vmatpush1.msra.mxu0 0.0
        %1052 = vmatprep.subr.mxu0 0.0
        %1053 = vmatpush1.msra.mxu0 0.0
        %1054 = vmatprep.subr.mxu0 0.0
        %1055 = vmatpush1.msra.mxu0 0.0
        %1056 = vmatprep.subr.mxu0 0.0
        %1057 = vmatpush1.msra.mxu0 0.0
        %1058 = vmatprep.subr.mxu0 0.0
        %1059 = vmatpush1.msra.mxu0 0.0
        %1060 = vmatprep.mubr.f32.mxu0 0.0
        %1061 = vmatmul.mubr.f32.gmra.mrb[0].mxu0 %v991
        %v1062 = vpop.f32.mrb[0].mxu0
        %v1063 = vadd.f32 %v988, %v1062
        %v1064 = vpop.f32.mrb[0].mxu0
        %1065 = vmatprep.mubr.f32.mxu0 0.0
        %1066 = vmatmul.mubr.f32.gmra.mrb[0].mxu0 %v994
        %v1067 = vpop.f32.mrb[0].mxu0
        %v1068 = vadd.f32 %v988, %v1067
        %v1069 = vpop.f32.mrb[0].mxu0
        %1070 = vdwg.mxu0
        %v1071 = vmax.f32 %v1063, 0.0
        %v1072 = vmax.f32 %v1068, 0.0
        %v1073 = vlaneseq
        %v1074 = vshrl.u32 %v1073, 7
        %v1075 = vadd.s32 %v1074, 8
        %vm1076 = vcmp.eq.s32.totalorder %v1074, 0
        %vm1077 = vcmp.eq.s32.totalorder %v1075, 0
        %v1078 = vld [vmem:[%s5] sm:$0x1]
        %v1079 = vsel %vm1076, 1, 0
        %v1080 = vsel %vm1077, 1, 0
        %vm1081 = vcmp.eq.s32.totalorder %v1079, 1
        %vm1082 = vcmp.eq.s32.totalorder %v1080, 1
        %v1084 = vlaneseq
        %v1085 = vshrl.u32 %v1084, 7
        %v1086 = vsub.s32 0, %v1085
        %v1087 = vrot.slane %v1078, %v1086
        %v1089 = vsel %vm1081, %v1087, %v1071
        %v1090 = vsel %vm1082, %v1087, %v1072
        %v1091 = vld [vmem:[%s6] sm:$0xff]
        %v1092 = vld [vmem:[%s6 + $0x8] sm:$0x1]
        %v1093 = vadd.f32 %v1089, %v1091
        %v1094 = vadd.f32 %v1090, %v1092
        %vm1095 = vcmask 392192
        %v1096 = vsel %vm1095, %v1093, 0.0
        %1097 = vadd.xlane.f32.xlu0 %v1096
        %v1098 = vpop.xlane.xlu0 %1097
        %vm1099 = vcmask 385024
        %v1100 = vsel %vm1099, %v1094, 0.0
        %1101 = vadd.xlane.f32.xlu0 %v1100
        %v1102 = vpop.xlane.xlu0 %1101
        %v1103 = vrcp.pop 48.0
        %v1104 = vmul.f32 %v1098, %v1103
        %v1105 = vmul.f32 %v1102, %v1103
        %v1106 = vsub.f32 %v1093, %v1104
        %v1107 = vsub.f32 %v1094, %v1105
        %v1108 = vmul.f32 %v1106, %v1106
        %v1109 = vmul.f32 %v1107, %v1107
        %v1110 = vsel %vm1095, %v1108, 0.0
        %1111 = vadd.xlane.f32.xlu0 %v1110
        %v1112 = vpop.xlane.xlu0 %1111
        %v1113 = vsel %vm1099, %v1109, 0.0
        %1114 = vadd.xlane.f32.xlu0 %v1113
        %v1115 = vpop.xlane.xlu0 %1114
        %v1116 = vmul.f32 %v1112, %v1103
        %v1117 = vmul.f32 %v1115, %v1103
        %v1118 = vadd.f32 %v1116, 1e-05
        %v1119 = vadd.f32 %v1117, 1e-05
        %v1120 = vrsqrt.pop %v1118
        %v1121 = vrsqrt.pop %v1119
        %v1122 = vmul.f32 %v1106, %v1120
        %v1123 = vmul.f32 %v1107, %v1121
        %v1124 = vld [vmem:[%s7] sm:$0x1]
        %v1126 = vlaneseq
        %v1127 = vshrl.u32 %v1126, 7
        %v1128 = vsub.s32 0, %v1127
        %v1129 = vrot.slane %v1124, %v1128
        %v1131 = vmul.f32 %v1122, %v1129
        %v1132 = vmul.f32 %v1123, %v1129
        %v1133 = vld [vmem:[%s8] sm:$0x1]
        %v1135 = vlaneseq
        %v1136 = vshrl.u32 %v1135, 7
        %v1137 = vsub.s32 0, %v1136
        %v1138 = vrot.slane %v1133, %v1137
        %v1140 = vadd.f32 %v1131, %v1138
        %v1141 = vadd.f32 %v1132, %v1138
        %v1142 = vld [vmem:[%s9] sm:$0xff]
        %v1143 = vld [vmem:[%s9 + $0x8] sm:$0xff]
        %v1144 = vld [vmem:[%s9 + $0x10] sm:$0xff]
        %v1145 = vld [vmem:[%s9 + $0x18] sm:$0xff]
        %v1146 = vld [vmem:[%s9 + $0x20] sm:$0xff]
        %v1147 = vld [vmem:[%s9 + $0x28] sm:$0xff]
        %v1148 = vld [vmem:[%s10] sm:$0x1]
        %v1150 = vlaneseq
        %v1151 = vshrl.u32 %v1150, 7
        %v1152 = vsub.s32 0, %v1151
        %v1153 = vrot.slane %v1148, %v1152
        %v1156 = vsel %vm1095, %v1140, 0
        %v1159 = vsel %vm1095, %v1141, 0
        %1161 = vmatprep.subr.mxu0 0.0
        %1162 = vmatpush1.msra.mxu0 %v1142
        %1163 = vmatprep.subr.mxu0 0.0
        %1164 = vmatpush1.msra.mxu0 %v1143
        %1165 = vmatprep.subr.mxu0 0.0
        %1166 = vmatpush1.msra.mxu0 %v1144
        %1167 = vmatprep.subr.mxu0 0.0
        %1168 = vmatpush1.msra.mxu0 %v1145
        %1169 = vmatprep.subr.mxu0 0.0
        %1170 = vmatpush1.msra.mxu0 %v1146
        %1171 = vmatprep.subr.mxu0 0.0
        %1172 = vmatpush1.msra.mxu0 %v1147
        %1173 = vmatprep.subr.mxu0 0.0
        %1174 = vmatpush1.msra.mxu0 0.0
        %1175 = vmatprep.subr.mxu0 0.0
        %1176 = vmatpush1.msra.mxu0 0.0
        %1177 = vmatprep.subr.mxu0 0.0
        %1178 = vmatpush1.msra.mxu0 0.0
        %1179 = vmatprep.subr.mxu0 0.0
        %1180 = vmatpush1.msra.mxu0 0.0
        %1181 = vmatprep.subr.mxu0 0.0
        %1182 = vmatpush1.msra.mxu0 0.0
        %1183 = vmatprep.subr.mxu0 0.0
        %1184 = vmatpush1.msra.mxu0 0.0
        %1185 = vmatprep.subr.mxu0 0.0
        %1186 = vmatpush1.msra.mxu0 0.0
        %1187 = vmatprep.subr.mxu0 0.0
        %1188 = vmatpush1.msra.mxu0 0.0
        %1189 = vmatprep.subr.mxu0 0.0
        %1190 = vmatpush1.msra.mxu0 0.0
        %1191 = vmatprep.subr.mxu0 0.0
        %1192 = vmatpush1.msra.mxu0 0.0
        %1193 = vmatprep.subr.mxu0 0.0
        %1194 = vmatpush1.msra.mxu0 0.0
        %1195 = vmatprep.subr.mxu0 0.0
        %1196 = vmatpush1.msra.mxu0 0.0
        %1197 = vmatprep.subr.mxu0 0.0
        %1198 = vmatpush1.msra.mxu0 0.0
        %1199 = vmatprep.subr.mxu0 0.0
        %1200 = vmatpush1.msra.mxu0 0.0
        %1201 = vmatprep.subr.mxu0 0.0
        %1202 = vmatpush1.msra.mxu0 0.0
        %1203 = vmatprep.subr.mxu0 0.0
        %1204 = vmatpush1.msra.mxu0 0.0
        %1205 = vmatprep.subr.mxu0 0.0
        %1206 = vmatpush1.msra.mxu0 0.0
        %1207 = vmatprep.subr.mxu0 0.0
        %1208 = vmatpush1.msra.mxu0 0.0
        %1209 = vmatprep.subr.mxu0 0.0
        %1210 = vmatpush1.msra.mxu0 0.0
        %1211 = vmatprep.subr.mxu0 0.0
        %1212 = vmatpush1.msra.mxu0 0.0
        %1213 = vmatprep.subr.mxu0 0.0
        %1214 = vmatpush1.msra.mxu0 0.0
        %1215 = vmatprep.subr.mxu0 0.0
        %1216 = vmatpush1.msra.mxu0 0.0
        %1217 = vmatprep.subr.mxu0 0.0
        %1218 = vmatpush1.msra.mxu0 0.0
        %1219 = vmatprep.subr.mxu0 0.0
        %1220 = vmatpush1.msra.mxu0 0.0
        %1221 = vmatprep.subr.mxu0 0.0
        %1222 = vmatpush1.msra.mxu0 0.0
        %1223 = vmatprep.subr.mxu0 0.0
        %1224 = vmatpush1.msra.mxu0 0.0
        %1225 = vmatprep.mubr.f32.mxu0 0.0
        %1226 = vmatmul.mubr.f32.gmra.mrb[0].mxu0 %v1156
        %v1227 = vpop.f32.mrb[0].mxu0
        %v1228 = vadd.f32 %v1153, %v1227
        %v1229 = vpop.f32.mrb[0].mxu0
        %1230 = vmatprep.mubr.f32.mxu0 0.0
        %1231 = vmatmul.mubr.f32.gmra.mrb[0].mxu0 %v1159
        %v1232 = vpop.f32.mrb[0].mxu0
        %v1233 = vadd.f32 %v1153, %v1232
        %v1234 = vpop.f32.mrb[0].mxu0
        %1235 = vdwg.mxu0
        %v1236 = vld [vmem:[%s11] sm:$0xff]
        %v1237 = vld [vmem:[%s11 + $0x8] sm:$0xff]
        %v1238 = vld [vmem:[%s11 + $0x10] sm:$0xff]
        %v1239 = vld [vmem:[%s11 + $0x18] sm:$0xff]
        %v1240 = vld [vmem:[%s11 + $0x20] sm:$0xff]
        %v1241 = vld [vmem:[%s11 + $0x28] sm:$0xff]
        %v1242 = vld [vmem:[%s12] sm:$0x1]
        %v1244 = vlaneseq
        %v1245 = vshrl.u32 %v1244, 7
        %v1246 = vsub.s32 0, %v1245
        %v1247 = vrot.slane %v1242, %v1246
        %1249 = vmatprep.subr.mxu0 0.0
        %1250 = vmatpush1.msra.mxu0 %v1236
        %1251 = vmatprep.subr.mxu0 0.0
        %1252 = vmatpush1.msra.mxu0 %v1237
        %1253 = vmatprep.subr.mxu0 0.0
        %1254 = vmatpush1.msra.mxu0 %v1238
        %1255 = vmatprep.subr.mxu0 0.0
        %1256 = vmatpush1.msra.mxu0 %v1239
        %1257 = vmatprep.subr.mxu0 0.0
        %1258 = vmatpush1.msra.mxu0 %v1240
        %1259 = vmatprep.subr.mxu0 0.0
        %1260 = vmatpush1.msra.mxu0 %v1241
        %1261 = vmatprep.subr.mxu0 0.0
        %1262 = vmatpush1.msra.mxu0 0.0
        %1263 = vmatprep.subr.mxu0 0.0
        %1264 = vmatpush1.msra.mxu0 0.0
        %1265 = vmatprep.subr.mxu0 0.0
        %1266 = vmatpush1.msra.mxu0 0.0
        %1267 = vmatprep.subr.mxu0 0.0
        %1268 = vmatpush1.msra.mxu0 0.0
        %1269 = vmatprep.subr.mxu0 0.0
        %1270 = vmatpush1.msra.mxu0 0.0
        %1271 = vmatprep.subr.mxu0 0.0
        %1272 = vmatpush1.msra.mxu0 0.0
        %1273 = vmatprep.subr.mxu0 0.0
        %1274 = vmatpush1.msra.mxu0 0.0
        %1275 = vmatprep.subr.mxu0 0.0
        %1276 = vmatpush1.msra.mxu0 0.0
        %1277 = vmatprep.subr.mxu0 0.0
        %1278 = vmatpush1.msra.mxu0 0.0
        %1279 = vmatprep.subr.mxu0 0.0
        %1280 = vmatpush1.msra.mxu0 0.0
        %1281 = vmatprep.subr.mxu0 0.0
        %1282 = vmatpush1.msra.mxu0 0.0
        %1283 = vmatprep.subr.mxu0 0.0
        %1284 = vmatpush1.msra.mxu0 0.0
        %1285 = vmatprep.subr.mxu0 0.0
        %1286 = vmatpush1.msra.mxu0 0.0
        %1287 = vmatprep.subr.mxu0 0.0
        %1288 = vmatpush1.msra.mxu0 0.0
        %1289 = vmatprep.subr.mxu0 0.0
        %1290 = vmatpush1.msra.mxu0 0.0
        %1291 = vmatprep.subr.mxu0 0.0
        %1292 = vmatpush1.msra.mxu0 0.0
        %1293 = vmatprep.subr.mxu0 0.0
        %1294 = vmatpush1.msra.mxu0 0.0
        %1295 = vmatprep.subr.mxu0 0.0
        %1296 = vmatpush1.msra.mxu0 0.0
        %1297 = vmatprep.subr.mxu0 0.0
        %1298 = vmatpush1.msra.mxu0 0.0
        %1299 = vmatprep.subr.mxu0 0.0
        %1300 = vmatpush1.msra.mxu0 0.0
        %1301 = vmatprep.subr.mxu0 0.0
        %1302 = vmatpush1.msra.mxu0 0.0
        %1303 = vmatprep.subr.mxu0 0.0
        %1304 = vmatpush1.msra.mxu0 0.0
        %1305 = vmatprep.subr.mxu0 0.0
        %1306 = vmatpush1.msra.mxu0 0.0
        %1307 = vmatprep.subr.mxu0 0.0
        %1308 = vmatpush1.msra.mxu0 0.0
        %1309 = vmatprep.subr.mxu0 0.0
        %1310 = vmatpush1.msra.mxu0 0.0
        %1311 = vmatprep.subr.mxu0 0.0
        %1312 = vmatpush1.msra.mxu0 0.0
        %1313 = vmatprep.mubr.f32.mxu0 0.0
        %1314 = vmatmul.mubr.f32.gmra.mrb[0].mxu0 %v1156
        %v1315 = vpop.f32.mrb[0].mxu0
        %v1316 = vadd.f32 %v1247, %v1315
        %v1317 = vpop.f32.mrb[0].mxu0
        %1318 = vmatprep.mubr.f32.mxu0 0.0
        %1319 = vmatmul.mubr.f32.gmra.mrb[0].mxu0 %v1159
        %v1320 = vpop.f32.mrb[0].mxu0
        %v1321 = vadd.f32 %v1247, %v1320
        %v1322 = vpop.f32.mrb[0].mxu0
        %1323 = vdwg.mxu0
        %v1324 = vld [vmem:[%s13] sm:$0xff]
        %v1325 = vld [vmem:[%s13 + $0x8] sm:$0xff]
        %v1326 = vld [vmem:[%s13 + $0x10] sm:$0xff]
        %v1327 = vld [vmem:[%s13 + $0x18] sm:$0xff]
        %v1328 = vld [vmem:[%s13 + $0x20] sm:$0xff]
        %v1329 = vld [vmem:[%s13 + $0x28] sm:$0xff]
        %v1330 = vld [vmem:[%s14] sm:$0x1]
        %v1332 = vlaneseq
        %v1333 = vshrl.u32 %v1332, 7
        %v1334 = vsub.s32 0, %v1333
        %v1335 = vrot.slane %v1330, %v1334
        %1337 = vmatprep.subr.mxu0 0.0
        %1338 = vmatpush1.msra.mxu0 %v1324
        %1339 = vmatprep.subr.mxu0 0.0
        %1340 = vmatpush1.msra.mxu0 %v1325
        %1341 = vmatprep.subr.mxu0 0.0
        %1342 = vmatpush1.msra.mxu0 %v1326
        %1343 = vmatprep.subr.mxu0 0.0
        %1344 = vmatpush1.msra.mxu0 %v1327
        %1345 = vmatprep.subr.mxu0 0.0
        %1346 = vmatpush1.msra.mxu0 %v1328
        %1347 = vmatprep.subr.mxu0 0.0
        %1348 = vmatpush1.msra.mxu0 %v1329
        %1349 = vmatprep.subr.mxu0 0.0
        %1350 = vmatpush1.msra.mxu0 0.0
        %1351 = vmatprep.subr.mxu0 0.0
        %1352 = vmatpush1.msra.mxu0 0.0
        %1353 = vmatprep.subr.mxu0 0.0
        %1354 = vmatpush1.msra.mxu0 0.0
        %1355 = vmatprep.subr.mxu0 0.0
        %1356 = vmatpush1.msra.mxu0 0.0
        %1357 = vmatprep.subr.mxu0 0.0
        %1358 = vmatpush1.msra.mxu0 0.0
        %1359 = vmatprep.subr.mxu0 0.0
        %1360 = vmatpush1.msra.mxu0 0.0
        %1361 = vmatprep.subr.mxu0 0.0
        %1362 = vmatpush1.msra.mxu0 0.0
        %1363 = vmatprep.subr.mxu0 0.0
        %1364 = vmatpush1.msra.mxu0 0.0
        %1365 = vmatprep.subr.mxu0 0.0
        %1366 = vmatpush1.msra.mxu0 0.0
        %1367 = vmatprep.subr.mxu0 0.0
        %1368 = vmatpush1.msra.mxu0 0.0
        %1369 = vmatprep.subr.mxu0 0.0
        %1370 = vmatpush1.msra.mxu0 0.0
        %1371 = vmatprep.subr.mxu0 0.0
        %1372 = vmatpush1.msra.mxu0 0.0
        %1373 = vmatprep.subr.mxu0 0.0
        %1374 = vmatpush1.msra.mxu0 0.0
        %1375 = vmatprep.subr.mxu0 0.0
        %1376 = vmatpush1.msra.mxu0 0.0
        %1377 = vmatprep.subr.mxu0 0.0
        %1378 = vmatpush1.msra.mxu0 0.0
        %1379 = vmatprep.subr.mxu0 0.0
        %1380 = vmatpush1.msra.mxu0 0.0
        %1381 = vmatprep.subr.mxu0 0.0
        %1382 = vmatpush1.msra.mxu0 0.0
        %1383 = vmatprep.subr.mxu0 0.0
        %1384 = vmatpush1.msra.mxu0 0.0
        %1385 = vmatprep.subr.mxu0 0.0
        %1386 = vmatpush1.msra.mxu0 0.0
        %1387 = vmatprep.subr.mxu0 0.0
        %1388 = vmatpush1.msra.mxu0 0.0
        %1389 = vmatprep.subr.mxu0 0.0
        %1390 = vmatpush1.msra.mxu0 0.0
        %1391 = vmatprep.subr.mxu0 0.0
        %1392 = vmatpush1.msra.mxu0 0.0
        %1393 = vmatprep.subr.mxu0 0.0
        %1394 = vmatpush1.msra.mxu0 0.0
        %1395 = vmatprep.subr.mxu0 0.0
        %1396 = vmatpush1.msra.mxu0 0.0
        %1397 = vmatprep.subr.mxu0 0.0
        %1398 = vmatpush1.msra.mxu0 0.0
        %1399 = vmatprep.subr.mxu0 0.0
        %1400 = vmatpush1.msra.mxu0 0.0
        %1401 = vmatprep.mubr.f32.mxu0 0.0
        %1402 = vmatmul.mubr.f32.gmra.mrb[0].mxu0 %v1156
        %v1403 = vpop.f32.mrb[0].mxu0
        %v1404 = vadd.f32 %v1335, %v1403
        %v1405 = vpop.f32.mrb[0].mxu0
        %1406 = vmatprep.mubr.f32.mxu0 0.0
        %1407 = vmatmul.mubr.f32.gmra.mrb[0].mxu0 %v1159
        %v1408 = vpop.f32.mrb[0].mxu0
        %v1409 = vadd.f32 %v1335, %v1408
        %v1410 = vpop.f32.mrb[0].mxu0
        %1411 = vdwg.mxu0
        %1412 = vst [vmem:[%s855] sm:$0xff] 0.0
        %1413 = vst [vmem:[%s855 + $0x8] sm:$0xff] 0.0
        %1414 = vst [vmem:[%s855 + $0x10] sm:$0xff] 0.0
        %1415 = vst [vmem:[%s855 + $0x18] sm:$0xff] 0.0
        %1416 = vst [vmem:[%s855 + $0x20] sm:$0xff] 0.0
        %1417 = vst [vmem:[%s855 + $0x28] sm:$0xff] 0.0
        %1418 = vst [vmem:[%s855 + $0x30] sm:$0x3f] 0.0
        %vm1419 = vcmask 64512
        %v1421 = vsel %vm1419, %v1228, 0
        %v1424 = vsel %vm1419, %v1233, 0
        %v1427 = vsel %vm1419, %v1316, 0
        %v1430 = vsel %vm1419, %v1321, 0
        %1432 = vmatprep.subr.mxu0 0.0
        %1433 = vmatpush1.xpose.msra.mxu0 %v1427
        %1434 = vmatprep.subr.mxu0 0.0
        %1435 = vmatpush1.xpose.msra.mxu0 %v1430
        %1436 = vmatprep.subr.mxu0 0.0
        %1437 = vmatpush1.xpose.msra.mxu0 0.0
        %1438 = vmatprep.subr.mxu0 0.0
        %1439 = vmatpush1.xpose.msra.mxu0 0.0
        %1440 = vmatprep.subr.mxu0 0.0
        %1441 = vmatpush1.xpose.msra.mxu0 0.0
        %1442 = vmatprep.subr.mxu0 0.0
        %1443 = vmatpush1.xpose.msra.mxu0 0.0
        %1444 = vmatprep.subr.mxu0 0.0
        %1445 = vmatpush1.xpose.msra.mxu0 0.0
        %1446 = vmatprep.subr.mxu0 0.0
        %1447 = vmatpush1.xpose.msra.mxu0 0.0
        %1448 = vmatprep.subr.mxu0 0.0
        %1449 = vmatpush1.xpose.msra.mxu0 0.0
        %1450 = vmatprep.subr.mxu0 0.0
        %1451 = vmatpush1.xpose.msra.mxu0 0.0
        %1452 = vmatprep.subr.mxu0 0.0
        %1453 = vmatpush1.xpose.msra.mxu0 0.0
        %1454 = vmatprep.subr.mxu0 0.0
        %1455 = vmatpush1.xpose.msra.mxu0 0.0
        %1456 = vmatprep.subr.mxu0 0.0
        %1457 = vmatpush1.xpose.msra.mxu0 0.0
        %1458 = vmatprep.subr.mxu0 0.0
        %1459 = vmatpush1.xpose.msra.mxu0 0.0
        %1460 = vmatprep.subr.mxu0 0.0
        %1461 = vmatpush1.xpose.msra.mxu0 0.0
        %1462 = vmatprep.subr.mxu0 0.0
        %1463 = vmatpush1.xpose.msra.mxu0 0.0
        %1464 = vmatprep.subr.mxu0 0.0
        %1465 = vmatpush1.xpose.msra.mxu0 0.0
        %1466 = vmatprep.subr.mxu0 0.0
        %1467 = vmatpush1.xpose.msra.mxu0 0.0
        %1468 = vmatprep.subr.mxu0 0.0
        %1469 = vmatpush1.xpose.msra.mxu0 0.0
        %1470 = vmatprep.subr.mxu0 0.0
        %1471 = vmatpush1.xpose.msra.mxu0 0.0
        %1472 = vmatprep.subr.mxu0 0.0
        %1473 = vmatpush1.xpose.msra.mxu0 0.0
        %1474 = vmatprep.subr.mxu0 0.0
        %1475 = vmatpush1.xpose.msra.mxu0 0.0
        %1476 = vmatprep.subr.mxu0 0.0
        %1477 = vmatpush1.xpose.msra.mxu0 0.0
        %1478 = vmatprep.subr.mxu0 0.0
        %1479 = vmatpush1.xpose.msra.mxu0 0.0
        %1480 = vmatprep.subr.mxu0 0.0
        %1481 = vmatpush1.xpose.msra.mxu0 0.0
        %1482 = vmatprep.subr.mxu0 0.0
        %1483 = vmatpush1.xpose.msra.mxu0 0.0
        %1484 = vmatprep.subr.mxu0 0.0
        %1485 = vmatpush1.xpose.msra.mxu0 0.0
        %1486 = vmatprep.subr.mxu0 0.0
        %1487 = vmatpush1.xpose.msra.mxu0 0.0
        %1488 = vmatprep.subr.mxu0 0.0
        %1489 = vmatpush1.xpose.msra.mxu0 0.0
        %1490 = vmatprep.subr.mxu0 0.0
        %1491 = vmatpush1.xpose.msra.mxu0 0.0
        %1492 = vmatprep.subr.mxu0 0.0
        %1493 = vmatpush1.xpose.msra.mxu0 0.0
        %1494 = vmatprep.subr.mxu0 0.0
        %1495 = vmatpush1.xpose.msra.mxu0 0.0
        %1496 = vmatprep.mubr.f32.mxu0 0.0
        %1497 = vmatmul.mubr.f32.gmra.mrb[0].mxu0 %v1421
        %v1498 = vpop.f32.mrb[0].mxu0
        %v1499 = vadd.f32 0.0, %v1498
        %v1500 = vpop.f32.mrb[0].mxu0
        %1501 = vmatprep.mubr.f32.mxu0 0.0
        %1502 = vmatmul.mubr.f32.gmra.mrb[0].mxu0 %v1424
        %v1503 = vpop.f32.mrb[0].mxu0
        %v1504 = vadd.f32 0.0, %v1503
        %v1505 = vpop.f32.mrb[0].mxu0
        %1506 = vdwg.mxu0
        %v1507 = vmul.f32 %v1499, 0.35355338
        %v1508 = vmul.f32 %v1504, 0.35355338
        %vm1509 = vcmask 72704
        %v1510 = vsel %vm1509, %v1507, -inf
        %1511 = vmax.xlane.f32.xlu0 %v1510
        %v1512 = vpop.xlane.xlu0 %1511
        %vm1513 = vcmask 65536
        %v1514 = vsel %vm1513, %v1508, -inf
        %1515 = vmax.xlane.f32.xlu0 %v1514
        %v1516 = vpop.xlane.xlu0 %1515
        %v1517 = vsub.f32 %v1507, %v1512
        %v1518 = vsub.f32 %v1508, %v1516
        %v1519 = vmul.f32 %v1517, 1.442695
        %v1520 = vpow.pop %v1519
        %v1521 = vmul.f32 %v1518, 1.442695
        %v1522 = vpow.pop %v1521
        %v1523 = vsel %vm1509, %v1520, 0.0
        %1524 = vadd.xlane.f32.xlu0 %v1523
        %v1525 = vpop.xlane.xlu0 %1524
        %v1526 = vsel %vm1513, %v1522, 0.0
        %1527 = vadd.xlane.f32.xlu0 %v1526
        %v1528 = vpop.xlane.xlu0 %1527
        %v1529 = vrcp.pop %v1525
        %v1530 = vrcp.pop %v1528
        %v1531 = vmul.f32 %v1520, %v1529
        %v1532 = vmul.f32 %v1522, %v1530
        %1533 = vst.msk [vmem:[%s855] sm:$0xff] %vm1509, %v1531
        %1534 = vst.msk [vmem:[%s855 + $0x8] sm:$0x1] %vm1513, %v1532
        %v1536 = vsel %vm1509, %v1531, 0
        %v1539 = vsel %vm1509, %v1532, 0
        %vm1541 = vcmask 1040384
        %v1543 = vsel %vm1541, %v1409, 0
        %1545 = vmatprep.subr.mxu0 0.0
        %1546 = vmatpush1.msra.mxu0 %v1404
        %1547 = vmatprep.subr.mxu0 0.0
        %1548 = vmatpush1.msra.mxu0 %v1543
        %1549 = vmatprep.subr.mxu0 0.0
        %1550 = vmatpush1.msra.mxu0 0.0
        %1551 = vmatprep.subr.mxu0 0.0
        %1552 = vmatpush1.msra.mxu0 0.0
        %1553 = vmatprep.subr.mxu0 0.0
        %1554 = vmatpush1.msra.mxu0 0.0
        %1555 = vmatprep.subr.mxu0 0.0
        %1556 = vmatpush1.msra.mxu0 0.0
        %1557 = vmatprep.subr.mxu0 0.0
        %1558 = vmatpush1.msra.mxu0 0.0
        %1559 = vmatprep.subr.mxu0 0.0
        %1560 = vmatpush1.msra.mxu0 0.0
        %1561 = vmatprep.subr.mxu0 0.0
        %1562 = vmatpush1.msra.mxu0 0.0
        %1563 = vmatprep.subr.mxu0 0.0
        %1564 = vmatpush1.msra.mxu0 0.0
        %1565 = vmatprep.subr.mxu0 0.0
        %1566 = vmatpush1.msra.mxu0 0.0
        %1567 = vmatprep.subr.mxu0 0.0
        %1568 = vmatpush1.msra.mxu0 0.0
        %1569 = vmatprep.subr.mxu0 0.0
        %1570 = vmatpush1.msra.mxu0 0.0
        %1571 = vmatprep.subr.mxu0 0.0
        %1572 = vmatpush1.msra.mxu0 0.0
        %1573 = vmatprep.subr.mxu0 0.0
        %1574 = vmatpush1.msra.mxu0 0.0
        %1575 = vmatprep.subr.mxu0 0.0
        %1576 = vmatpush1.msra.mxu0 0.0
        %1577 = vmatprep.subr.mxu0 0.0
        %1578 = vmatpush1.msra.mxu0 0.0
        %1579 = vmatprep.subr.mxu0 0.0
        %1580 = vmatpush1.msra.mxu0 0.0
        %1581 = vmatprep.subr.mxu0 0.0
        %1582 = vmatpush1.msra.mxu0 0.0
        %1583 = vmatprep.subr.mxu0 0.0
        %1584 = vmatpush1.msra.mxu0 0.0
        %1585 = vmatprep.subr.mxu0 0.0
        %1586 = vmatpush1.msra.mxu0 0.0
        %1587 = vmatprep.subr.mxu0 0.0
        %1588 = vmatpush1.msra.mxu0 0.0
        %1589 = vmatprep.subr.mxu0 0.0
        %1590 = vmatpush1.msra.mxu0 0.0
        %1591 = vmatprep.subr.mxu0 0.0
        %1592 = vmatpush1.msra.mxu0 0.0
        %1593 = vmatprep.subr.mxu0 0.0
        %1594 = vmatpush1.msra.mxu0 0.0
        %1595 = vmatprep.subr.mxu0 0.0
        %1596 = vmatpush1.msra.mxu0 0.0
        %1597 = vmatprep.subr.mxu0 0.0
        %1598 = vmatpush1.msra.mxu0 0.0
        %1599 = vmatprep.subr.mxu0 0.0
        %1600 = vmatpush1.msra.mxu0 0.0
        %1601 = vmatprep.subr.mxu0 0.0
        %1602 = vmatpush1.msra.mxu0 0.0
        %1603 = vmatprep.subr.mxu0 0.0
        %1604 = vmatpush1.msra.mxu0 0.0
        %1605 = vmatprep.subr.mxu0 0.0
        %1606 = vmatpush1.msra.mxu0 0.0
        %1607 = vmatprep.subr.mxu0 0.0
        %1608 = vmatpush1.msra.mxu0 0.0
        %1609 = vmatprep.mubr.f32.mxu0 0.0
        %1610 = vmatmul.mubr.f32.gmra.mrb[0].mxu0 %v1536
        %v1611 = vpop.f32.mrb[0].mxu0
        %v1612 = vadd.f32 0.0, %v1611
        %v1613 = vpop.f32.mrb[0].mxu0
        %1614 = vmatprep.mubr.f32.mxu0 0.0
        %1615 = vmatmul.mubr.f32.gmra.mrb[0].mxu0 %v1539
        %v1616 = vpop.f32.mrb[0].mxu0
        %v1617 = vadd.f32 0.0, %v1616
        %v1618 = vpop.f32.mrb[0].mxu0
        %1619 = vdwg.mxu0
        %1620 = vst.msk [vmem:[#allocation2] sm:$0xff] %vm1419, %v1612
        %vm1621 = vcmask 57344
        %1622 = vst.msk [vmem:[#allocation2 + $0x8] sm:$0x1] %vm1621, %v1617
        %1623 = vrot.lane.b32.xlu0 %v1228, 120
        %v1624 = vpop.permute.xlu0 %1623
        %1625 = vrot.lane.b32.xlu0 %v1233, 120
        %v1626 = vpop.permute.xlu0 %1625
        %1627 = vrot.lane.b32.xlu0 %v1316, 120
        %v1628 = vpop.permute.xlu0 %1627
        %1629 = vrot.lane.b32.xlu0 %v1321, 120
        %v1630 = vpop.permute.xlu0 %1629
        %v1631 = vsel %vm1419, %v1624, 0
        %v1633 = vsel %vm1419, %v1626, 0
        %v1635 = vsel %vm1419, %v1628, 0
        %v1637 = vsel %vm1419, %v1630, 0
        %1639 = vmatprep.subr.mxu0 0.0
        %1640 = vmatpush1.xpose.msra.mxu0 %v1635
        %1641 = vmatprep.subr.mxu0 0.0
        %1642 = vmatpush1.xpose.msra.mxu0 %v1637
        %1643 = vmatprep.subr.mxu0 0.0
        %1644 = vmatpush1.xpose.msra.mxu0 0.0
        %1645 = vmatprep.subr.mxu0 0.0
        %1646 = vmatpush1.xpose.msra.mxu0 0.0
        %1647 = vmatprep.subr.mxu0 0.0
        %1648 = vmatpush1.xpose.msra.mxu0 0.0
        %1649 = vmatprep.subr.mxu0 0.0
        %1650 = vmatpush1.xpose.msra.mxu0 0.0
        %1651 = vmatprep.subr.mxu0 0.0
        %1652 = vmatpush1.xpose.msra.mxu0 0.0
        %1653 = vmatprep.subr.mxu0 0.0
        %1654 = vmatpush1.xpose.msra.mxu0 0.0
        %1655 = vmatprep.subr.mxu0 0.0
        %1656 = vmatpush1.xpose.msra.mxu0 0.0
        %1657 = vmatprep.subr.mxu0 0.0
        %1658 = vmatpush1.xpose.msra.mxu0 0.0
        %1659 = vmatprep.subr.mxu0 0.0
        %1660 = vmatpush1.xpose.msra.mxu0 0.0
        %1661 = vmatprep.subr.mxu0 0.0
        %1662 = vmatpush1.xpose.msra.mxu0 0.0
        %1663 = vmatprep.subr.mxu0 0.0
        %1664 = vmatpush1.xpose.msra.mxu0 0.0
        %1665 = vmatprep.subr.mxu0 0.0
        %1666 = vmatpush1.xpose.msra.mxu0 0.0
        %1667 = vmatprep.subr.mxu0 0.0
        %1668 = vmatpush1.xpose.msra.mxu0 0.0
        %1669 = vmatprep.subr.mxu0 0.0
        %1670 = vmatpush1.xpose.msra.mxu0 0.0
        %1671 = vmatprep.subr.mxu0 0.0
        %1672 = vmatpush1.xpose.msra.mxu0 0.0
        %1673 = vmatprep.subr.mxu0 0.0
        %1674 = vmatpush1.xpose.msra.mxu0 0.0
        %1675 = vmatprep.subr.mxu0 0.0
        %1676 = vmatpush1.xpose.msra.mxu0 0.0
        %1677 = vmatprep.subr.mxu0 0.0
        %1678 = vmatpush1.xpose.msra.mxu0 0.0
        %1679 = vmatprep.subr.mxu0 0.0
        %1680 = vmatpush1.xpose.msra.mxu0 0.0
        %1681 = vmatprep.subr.mxu0 0.0
        %1682 = vmatpush1.xpose.msra.mxu0 0.0
        %1683 = vmatprep.subr.mxu0 0.0
        %1684 = vmatpush1.xpose.msra.mxu0 0.0
        %1685 = vmatprep.subr.mxu0 0.0
        %1686 = vmatpush1.xpose.msra.mxu0 0.0
        %1687 = vmatprep.subr.mxu0 0.0
        %1688 = vmatpush1.xpose.msra.mxu0 0.0
        %1689 = vmatprep.subr.mxu0 0.0
        %1690 = vmatpush1.xpose.msra.mxu0 0.0
        %1691 = vmatprep.subr.mxu0 0.0
        %1692 = vmatpush1.xpose.msra.mxu0 0.0
        %1693 = vmatprep.subr.mxu0 0.0
        %1694 = vmatpush1.xpose.msra.mxu0 0.0
        %1695 = vmatprep.subr.mxu0 0.0
        %1696 = vmatpush1.xpose.msra.mxu0 0.0
        %1697 = vmatprep.subr.mxu0 0.0
        %1698 = vmatpush1.xpose.msra.mxu0 0.0
        %1699 = vmatprep.subr.mxu0 0.0
        %1700 = vmatpush1.xpose.msra.mxu0 0.0
        %1701 = vmatprep.subr.mxu0 0.0
        %1702 = vmatpush1.xpose.msra.mxu0 0.0
        %1703 = vmatprep.mubr.f32.mxu0 0.0
        %1704 = vmatmul.mubr.f32.gmra.mrb[0].mxu0 %v1631
        %v1705 = vpop.f32.mrb[0].mxu0
        %v1706 = vadd.f32 0.0, %v1705
        %v1707 = vpop.f32.mrb[0].mxu0
        %1708 = vmatprep.mubr.f32.mxu0 0.0
        %1709 = vmatmul.mubr.f32.gmra.mrb[0].mxu0 %v1633
        %v1710 = vpop.f32.mrb[0].mxu0
        %v1711 = vadd.f32 0.0, %v1710
        %v1712 = vpop.f32.mrb[0].mxu0
        %1713 = vdwg.mxu0
        %v1714 = vmul.f32 %v1706, 0.35355338
        %v1715 = vmul.f32 %v1711, 0.35355338
        %v1716 = vsel %vm1509, %v1714, -inf
        %1717 = vmax.xlane.f32.xlu0 %v1716
        %v1718 = vpop.xlane.xlu0 %1717
        %v1719 = vsel %vm1513, %v1715, -inf
        %1720 = vmax.xlane.f32.xlu0 %v1719
        %v1721 = vpop.xlane.xlu0 %1720
        %v1722 = vsub.f32 %v1714, %v1718
        %v1723 = vsub.f32 %v1715, %v1721
        %v1724 = vmul.f32 %v1722, 1.442695
        %v1725 = vpow.pop %v1724
        %v1726 = vmul.f32 %v1723, 1.442695
        %v1727 = vpow.pop %v1726
        %v1728 = vsel %vm1509, %v1725, 0.0
        %1729 = vadd.xlane.f32.xlu0 %v1728
        %v1730 = vpop.xlane.xlu0 %1729
        %v1731 = vsel %vm1513, %v1727, 0.0
        %1732 = vadd.xlane.f32.xlu0 %v1731
        %v1733 = vpop.xlane.xlu0 %1732
        %v1734 = vrcp.pop %v1730
        %v1735 = vrcp.pop %v1733
        %v1736 = vmul.f32 %v1725, %v1734
        %v1737 = vmul.f32 %v1727, %v1735
        %1738 = vst.msk [vmem:[%s855 + $0x9] sm:$0xff] %vm1509, %v1736
        %1739 = vst.msk [vmem:[%s855 + $0x11] sm:$0x1] %vm1513, %v1737
        %1741 = vrot.lane.b32.xlu0 %v1404, 120
        %v1742 = vpop.permute.xlu0 %1741
        %1743 = vrot.lane.b32.xlu0 %v1409, 120
        %v1744 = vpop.permute.xlu0 %1743
        %v1747 = vsel %vm1509, %v1736, 0
        %v1750 = vsel %vm1509, %v1737, 0
        %v1752 = vsel %vm1541, %v1744, 0
        %1754 = vmatprep.subr.mxu0 0.0
        %1755 = vmatpush1.msra.mxu0 %v1742
        %1756 = vmatprep.subr.mxu0 0.0
        %1757 = vmatpush1.msra.mxu0 %v1752
        %1758 = vmatprep.subr.mxu0 0.0
        %1759 = vmatpush1.msra.mxu0 0.0
        %1760 = vmatprep.subr.mxu0 0.0
        %1761 = vmatpush1.msra.mxu0 0.0
        %1762 = vmatprep.subr.mxu0 0.0
        %1763 = vmatpush1.msra.mxu0 0.0
        %1764 = vmatprep.subr.mxu0 0.0
        %1765 = vmatpush1.msra.mxu0 0.0
        %1766 = vmatprep.subr.mxu0 0.0
        %1767 = vmatpush1.msra.mxu0 0.0
        %1768 = vmatprep.subr.mxu0 0.0
        %1769 = vmatpush1.msra.mxu0 0.0
        %1770 = vmatprep.subr.mxu0 0.0
        %1771 = vmatpush1.msra.mxu0 0.0
        %1772 = vmatprep.subr.mxu0 0.0
        %1773 = vmatpush1.msra.mxu0 0.0
        %1774 = vmatprep.subr.mxu0 0.0
        %1775 = vmatpush1.msra.mxu0 0.0
        %1776 = vmatprep.subr.mxu0 0.0
        %1777 = vmatpush1.msra.mxu0 0.0
        %1778 = vmatprep.subr.mxu0 0.0
        %1779 = vmatpush1.msra.mxu0 0.0
        %1780 = vmatprep.subr.mxu0 0.0
        %1781 = vmatpush1.msra.mxu0 0.0
        %1782 = vmatprep.subr.mxu0 0.0
        %1783 = vmatpush1.msra.mxu0 0.0
        %1784 = vmatprep.subr.mxu0 0.0
        %1785 = vmatpush1.msra.mxu0 0.0
        %1786 = vmatprep.subr.mxu0 0.0
        %1787 = vmatpush1.msra.mxu0 0.0
        %1788 = vmatprep.subr.mxu0 0.0
        %1789 = vmatpush1.msra.mxu0 0.0
        %1790 = vmatprep.subr.mxu0 0.0
        %1791 = vmatpush1.msra.mxu0 0.0
        %1792 = vmatprep.subr.mxu0 0.0
        %1793 = vmatpush1.msra.mxu0 0.0
        %1794 = vmatprep.subr.mxu0 0.0
        %1795 = vmatpush1.msra.mxu0 0.0
        %1796 = vmatprep.subr.mxu0 0.0
        %1797 = vmatpush1.msra.mxu0 0.0
        %1798 = vmatprep.subr.mxu0 0.0
        %1799 = vmatpush1.msra.mxu0 0.0
        %1800 = vmatprep.subr.mxu0 0.0
        %1801 = vmatpush1.msra.mxu0 0.0
        %1802 = vmatprep.subr.mxu0 0.0
        %1803 = vmatpush1.msra.mxu0 0.0
        %1804 = vmatprep.subr.mxu0 0.0
        %1805 = vmatpush1.msra.mxu0 0.0
        %1806 = vmatprep.subr.mxu0 0.0
        %1807 = vmatpush1.msra.mxu0 0.0
        %1808 = vmatprep.subr.mxu0 0.0
        %1809 = vmatpush1.msra.mxu0 0.0
        %1810 = vmatprep.subr.mxu0 0.0
        %1811 = vmatpush1.msra.mxu0 0.0
        %1812 = vmatprep.subr.mxu0 0.0
        %1813 = vmatpush1.msra.mxu0 0.0
        %1814 = vmatprep.subr.mxu0 0.0
        %1815 = vmatpush1.msra.mxu0 0.0
        %1816 = vmatprep.subr.mxu0 0.0
        %1817 = vmatpush1.msra.mxu0 0.0
        %1818 = vmatprep.mubr.f32.mxu0 0.0
        %1819 = vmatmul.mubr.f32.gmra.mrb[0].mxu0 %v1747
        %v1820 = vpop.f32.mrb[0].mxu0
        %v1821 = vadd.f32 0.0, %v1820
        %v1822 = vpop.f32.mrb[0].mxu0
        %1823 = vmatprep.mubr.f32.mxu0 0.0
        %1824 = vmatmul.mubr.f32.gmra.mrb[0].mxu0 %v1750
        %v1825 = vpop.f32.mrb[0].mxu0
        %v1826 = vadd.f32 0.0, %v1825
        %v1827 = vpop.f32.mrb[0].mxu0
        %1828 = vdwg.mxu0
        %1831 = vrot.lane.b32.xlu0 %v1821, 8
        %v1832 = vpop.permute.xlu0 %1831
        %1833 = vrot.lane.b32.xlu0 %v1826, 8
        %v1834 = vpop.permute.xlu0 %1833
        %vm1837 = vcmask 130112
        %1838 = vst.msk [vmem:[#allocation2] sm:$0xff] %vm1837, %v1832
        %vm1839 = vcmask 122944
        %1840 = vst.msk [vmem:[#allocation2 + $0x8] sm:$0x1] %vm1839, %v1834
        %1841 = vrot.lane.b32.xlu0 %v1228, 112
        %v1842 = vpop.permute.xlu0 %1841
        %1843 = vrot.lane.b32.xlu0 %v1233, 112
        %v1844 = vpop.permute.xlu0 %1843
        %1845 = vrot.lane.b32.xlu0 %v1316, 112
        %v1846 = vpop.permute.xlu0 %1845
        %1847 = vrot.lane.b32.xlu0 %v1321, 112
        %v1848 = vpop.permute.xlu0 %1847
        %v1849 = vsel %vm1419, %v1842, 0
        %v1851 = vsel %vm1419, %v1844, 0
        %v1853 = vsel %vm1419, %v1846, 0
        %v1855 = vsel %vm1419, %v1848, 0
        %1857 = vmatprep.subr.mxu0 0.0
        %1858 = vmatpush1.xpose.msra.mxu0 %v1853
        %1859 = vmatprep.subr.mxu0 0.0
        %1860 = vmatpush1.xpose.msra.mxu0 %v1855
        %1861 = vmatprep.subr.mxu0 0.0
        %1862 = vmatpush1.xpose.msra.mxu0 0.0
        %1863 = vmatprep.subr.mxu0 0.0
        %1864 = vmatpush1.xpose.msra.mxu0 0.0
        %1865 = vmatprep.subr.mxu0 0.0
        %1866 = vmatpush1.xpose.msra.mxu0 0.0
        %1867 = vmatprep.subr.mxu0 0.0
        %1868 = vmatpush1.xpose.msra.mxu0 0.0
        %1869 = vmatprep.subr.mxu0 0.0
        %1870 = vmatpush1.xpose.msra.mxu0 0.0
        %1871 = vmatprep.subr.mxu0 0.0
        %1872 = vmatpush1.xpose.msra.mxu0 0.0
        %1873 = vmatprep.subr.mxu0 0.0
        %1874 = vmatpush1.xpose.msra.mxu0 0.0
        %1875 = vmatprep.subr.mxu0 0.0
        %1876 = vmatpush1.xpose.msra.mxu0 0.0
        %1877 = vmatprep.subr.mxu0 0.0
        %1878 = vmatpush1.xpose.msra.mxu0 0.0
        %1879 = vmatprep.subr.mxu0 0.0
        %1880 = vmatpush1.xpose.msra.mxu0 0.0
        %1881 = vmatprep.subr.mxu0 0.0
        %1882 = vmatpush1.xpose.msra.mxu0 0.0
        %1883 = vmatprep.subr.mxu0 0.0
        %1884 = vmatpush1.xpose.msra.mxu0 0.0
        %1885 = vmatprep.subr.mxu0 0.0
        %1886 = vmatpush1.xpose.msra.mxu0 0.0
        %1887 = vmatprep.subr.mxu0 0.0
        %1888 = vmatpush1.xpose.msra.mxu0 0.0
        %1889 = vmatprep.subr.mxu0 0.0
        %1890 = vmatpush1.xpose.msra.mxu0 0.0
        %1891 = vmatprep.subr.mxu0 0.0
        %1892 = vmatpush1.xpose.msra.mxu0 0.0
        %1893 = vmatprep.subr.mxu0 0.0
        %1894 = vmatpush1.xpose.msra.mxu0 0.0
        %1895 = vmatprep.subr.mxu0 0.0
        %1896 = vmatpush1.xpose.msra.mxu0 0.0
        %1897 = vmatprep.subr.mxu0 0.0
        %1898 = vmatpush1.xpose.msra.mxu0 0.0
        %1899 = vmatprep.subr.mxu0 0.0
        %1900 = vmatpush1.xpose.msra.mxu0 0.0
        %1901 = vmatprep.subr.mxu0 0.0
        %1902 = vmatpush1.xpose.msra.mxu0 0.0
        %1903 = vmatprep.subr.mxu0 0.0
        %1904 = vmatpush1.xpose.msra.mxu0 0.0
        %1905 = vmatprep.subr.mxu0 0.0
        %1906 = vmatpush1.xpose.msra.mxu0 0.0
        %1907 = vmatprep.subr.mxu0 0.0
        %1908 = vmatpush1.xpose.msra.mxu0 0.0
        %1909 = vmatprep.subr.mxu0 0.0
        %1910 = vmatpush1.xpose.msra.mxu0 0.0
        %1911 = vmatprep.subr.mxu0 0.0
        %1912 = vmatpush1.xpose.msra.mxu0 0.0
        %1913 = vmatprep.subr.mxu0 0.0
        %1914 = vmatpush1.xpose.msra.mxu0 0.0
        %1915 = vmatprep.subr.mxu0 0.0
        %1916 = vmatpush1.xpose.msra.mxu0 0.0
        %1917 = vmatprep.subr.mxu0 0.0
        %1918 = vmatpush1.xpose.msra.mxu0 0.0
        %1919 = vmatprep.subr.mxu0 0.0
        %1920 = vmatpush1.xpose.msra.mxu0 0.0
        %1921 = vmatprep.mubr.f32.mxu0 0.0
        %1922 = vmatmul.mubr.f32.gmra.mrb[0].mxu0 %v1849
        %v1923 = vpop.f32.mrb[0].mxu0
        %v1924 = vadd.f32 0.0, %v1923
        %v1925 = vpop.f32.mrb[0].mxu0
        %1926 = vmatprep.mubr.f32.mxu0 0.0
        %1927 = vmatmul.mubr.f32.gmra.mrb[0].mxu0 %v1851
        %v1928 = vpop.f32.mrb[0].mxu0
        %v1929 = vadd.f32 0.0, %v1928
        %v1930 = vpop.f32.mrb[0].mxu0
        %1931 = vdwg.mxu0
        %v1932 = vmul.f32 %v1924, 0.35355338
        %v1933 = vmul.f32 %v1929, 0.35355338
        %v1934 = vsel %vm1509, %v1932, -inf
        %1935 = vmax.xlane.f32.xlu0 %v1934
        %v1936 = vpop.xlane.xlu0 %1935
        %v1937 = vsel %vm1513, %v1933, -inf
        %1938 = vmax.xlane.f32.xlu0 %v1937
        %v1939 = vpop.xlane.xlu0 %1938
        %v1940 = vsub.f32 %v1932, %v1936
        %v1941 = vsub.f32 %v1933, %v1939
        %v1942 = vmul.f32 %v1940, 1.442695
        %v1943 = vpow.pop %v1942
        %v1944 = vmul.f32 %v1941, 1.442695
        %v1945 = vpow.pop %v1944
        %v1946 = vsel %vm1509, %v1943, 0.0
        %1947 = vadd.xlane.f32.xlu0 %v1946
        %v1948 = vpop.xlane.xlu0 %1947
        %v1949 = vsel %vm1513, %v1945, 0.0
        %1950 = vadd.xlane.f32.xlu0 %v1949
        %v1951 = vpop.xlane.xlu0 %1950
        %v1952 = vrcp.pop %v1948
        %v1953 = vrcp.pop %v1951
        %v1954 = vmul.f32 %v1943, %v1952
        %v1955 = vmul.f32 %v1945, %v1953
        %1956 = vst.msk [vmem:[%s855 + $0x12] sm:$0xff] %vm1509, %v1954
        %1957 = vst.msk [vmem:[%s855 + $0x1a] sm:$0x1] %vm1513, %v1955
        %1958 = vrot.lane.b32.xlu0 %v1404, 112
        %v1959 = vpop.permute.xlu0 %1958
        %1960 = vrot.lane.b32.xlu0 %v1409, 112
        %v1961 = vpop.permute.xlu0 %1960
        %v1964 = vsel %vm1509, %v1954, 0
        %v1967 = vsel %vm1509, %v1955, 0
        %v1969 = vsel %vm1541, %v1961, 0
        %1971 = vmatprep.subr.mxu0 0.0
        %1972 = vmatpush1.msra.mxu0 %v1959
        %1973 = vmatprep.subr.mxu0 0.0
        %1974 = vmatpush1.msra.mxu0 %v1969
        %1975 = vmatprep.subr.mxu0 0.0
        %1976 = vmatpush1.msra.mxu0 0.0
        %1977 = vmatprep.subr.mxu0 0.0
        %1978 = vmatpush1.msra.mxu0 0.0
        %1979 = vmatprep.subr.mxu0 0.0
        %1980 = vmatpush1.msra.mxu0 0.0
        %1981 = vmatprep.subr.mxu0 0.0
        %1982 = vmatpush1.msra.mxu0 0.0
        %1983 = vmatprep.subr.mxu0 0.0
        %1984 = vmatpush1.msra.mxu0 0.0
        %1985 = vmatprep.subr.mxu0 0.0
        %1986 = vmatpush1.msra.mxu0 0.0
        %1987 = vmatprep.subr.mxu0 0.0
        %1988 = vmatpush1.msra.mxu0 0.0
        %1989 = vmatprep.subr.mxu0 0.0
        %1990 = vmatpush1.msra.mxu0 0.0
        %1991 = vmatprep.subr.mxu0 0.0
        %1992 = vmatpush1.msra.mxu0 0.0
        %1993 = vmatprep.subr.mxu0 0.0
        %1994 = vmatpush1.msra.mxu0 0.0
        %1995 = vmatprep.subr.mxu0 0.0
        %1996 = vmatpush1.msra.mxu0 0.0
        %1997 = vmatprep.subr.mxu0 0.0
        %1998 = vmatpush1.msra.mxu0 0.0
        %1999 = vmatprep.subr.mxu0 0.0
        %2000 = vmatpush1.msra.mxu0 0.0
        %2001 = vmatprep.subr.mxu0 0.0
        %2002 = vmatpush1.msra.mxu0 0.0
        %2003 = vmatprep.subr.mxu0 0.0
        %2004 = vmatpush1.msra.mxu0 0.0
        %2005 = vmatprep.subr.mxu0 0.0
        %2006 = vmatpush1.msra.mxu0 0.0
        %2007 = vmatprep.subr.mxu0 0.0
        %2008 = vmatpush1.msra.mxu0 0.0
        %2009 = vmatprep.subr.mxu0 0.0
        %2010 = vmatpush1.msra.mxu0 0.0
        %2011 = vmatprep.subr.mxu0 0.0
        %2012 = vmatpush1.msra.mxu0 0.0
        %2013 = vmatprep.subr.mxu0 0.0
        %2014 = vmatpush1.msra.mxu0 0.0
        %2015 = vmatprep.subr.mxu0 0.0
        %2016 = vmatpush1.msra.mxu0 0.0
        %2017 = vmatprep.subr.mxu0 0.0
        %2018 = vmatpush1.msra.mxu0 0.0
        %2019 = vmatprep.subr.mxu0 0.0
        %2020 = vmatpush1.msra.mxu0 0.0
        %2021 = vmatprep.subr.mxu0 0.0
        %2022 = vmatpush1.msra.mxu0 0.0
        %2023 = vmatprep.subr.mxu0 0.0
        %2024 = vmatpush1.msra.mxu0 0.0
        %2025 = vmatprep.subr.mxu0 0.0
        %2026 = vmatpush1.msra.mxu0 0.0
        %2027 = vmatprep.subr.mxu0 0.0
        %2028 = vmatpush1.msra.mxu0 0.0
        %2029 = vmatprep.subr.mxu0 0.0
        %2030 = vmatpush1.msra.mxu0 0.0
        %2031 = vmatprep.subr.mxu0 0.0
        %2032 = vmatpush1.msra.mxu0 0.0
        %2033 = vmatprep.subr.mxu0 0.0
        %2034 = vmatpush1.msra.mxu0 0.0
        %2035 = vmatprep.mubr.f32.mxu0 0.0
        %2036 = vmatmul.mubr.f32.gmra.mrb[0].mxu0 %v1964
        %v2037 = vpop.f32.mrb[0].mxu0
        %v2038 = vadd.f32 0.0, %v2037
        %v2039 = vpop.f32.mrb[0].mxu0
        %2040 = vmatprep.mubr.f32.mxu0 0.0
        %2041 = vmatmul.mubr.f32.gmra.mrb[0].mxu0 %v1967
        %v2042 = vpop.f32.mrb[0].mxu0
        %v2043 = vadd.f32 0.0, %v2042
        %v2044 = vpop.f32.mrb[0].mxu0
        %2045 = vdwg.mxu0
        %2048 = vrot.lane.b32.xlu0 %v2038, 16
        %v2049 = vpop.permute.xlu0 %2048
        %2050 = vrot.lane.b32.xlu0 %v2043, 16
        %v2051 = vpop.permute.xlu0 %2050
        %vm2054 = vcmask 195712
        %2055 = vst.msk [vmem:[#allocation2] sm:$0xff] %vm2054, %v2049
        %vm2056 = vcmask 188544
        %2057 = vst.msk [vmem:[#allocation2 + $0x8] sm:$0x1] %vm2056, %v2051
        %2058 = vrot.lane.b32.xlu0 %v1228, 104
        %v2059 = vpop.permute.xlu0 %2058
        %2060 = vrot.lane.b32.xlu0 %v1233, 104
        %v2061 = vpop.permute.xlu0 %2060
        %2062 = vrot.lane.b32.xlu0 %v1316, 104
        %v2063 = vpop.permute.xlu0 %2062
        %2064 = vrot.lane.b32.xlu0 %v1321, 104
        %v2065 = vpop.permute.xlu0 %2064
        %v2066 = vsel %vm1419, %v2059, 0
        %v2068 = vsel %vm1419, %v2061, 0
        %v2070 = vsel %vm1419, %v2063, 0
        %v2072 = vsel %vm1419, %v2065, 0
        %2074 = vmatprep.subr.mxu0 0.0
        %2075 = vmatpush1.xpose.msra.mxu0 %v2070
        %2076 = vmatprep.subr.mxu0 0.0
        %2077 = vmatpush1.xpose.msra.mxu0 %v2072
        %2078 = vmatprep.subr.mxu0 0.0
        %2079 = vmatpush1.xpose.msra.mxu0 0.0
        %2080 = vmatprep.subr.mxu0 0.0
        %2081 = vmatpush1.xpose.msra.mxu0 0.0
        %2082 = vmatprep.subr.mxu0 0.0
        %2083 = vmatpush1.xpose.msra.mxu0 0.0
        %2084 = vmatprep.subr.mxu0 0.0
        %2085 = vmatpush1.xpose.msra.mxu0 0.0
        %2086 = vmatprep.subr.mxu0 0.0
        %2087 = vmatpush1.xpose.msra.mxu0 0.0
        %2088 = vmatprep.subr.mxu0 0.0
        %2089 = vmatpush1.xpose.msra.mxu0 0.0
        %2090 = vmatprep.subr.mxu0 0.0
        %2091 = vmatpush1.xpose.msra.mxu0 0.0
        %2092 = vmatprep.subr.mxu0 0.0
        %2093 = vmatpush1.xpose.msra.mxu0 0.0
        %2094 = vmatprep.subr.mxu0 0.0
        %2095 = vmatpush1.xpose.msra.mxu0 0.0
        %2096 = vmatprep.subr.mxu0 0.0
        %2097 = vmatpush1.xpose.msra.mxu0 0.0
        %2098 = vmatprep.subr.mxu0 0.0
        %2099 = vmatpush1.xpose.msra.mxu0 0.0
        %2100 = vmatprep.subr.mxu0 0.0
        %2101 = vmatpush1.xpose.msra.mxu0 0.0
        %2102 = vmatprep.subr.mxu0 0.0
        %2103 = vmatpush1.xpose.msra.mxu0 0.0
        %2104 = vmatprep.subr.mxu0 0.0
        %2105 = vmatpush1.xpose.msra.mxu0 0.0
        %2106 = vmatprep.subr.mxu0 0.0
        %2107 = vmatpush1.xpose.msra.mxu0 0.0
        %2108 = vmatprep.subr.mxu0 0.0
        %2109 = vmatpush1.xpose.msra.mxu0 0.0
        %2110 = vmatprep.subr.mxu0 0.0
        %2111 = vmatpush1.xpose.msra.mxu0 0.0
        %2112 = vmatprep.subr.mxu0 0.0
        %2113 = vmatpush1.xpose.msra.mxu0 0.0
        %2114 = vmatprep.subr.mxu0 0.0
        %2115 = vmatpush1.xpose.msra.mxu0 0.0
        %2116 = vmatprep.subr.mxu0 0.0
        %2117 = vmatpush1.xpose.msra.mxu0 0.0
        %2118 = vmatprep.subr.mxu0 0.0
        %2119 = vmatpush1.xpose.msra.mxu0 0.0
        %2120 = vmatprep.subr.mxu0 0.0
        %2121 = vmatpush1.xpose.msra.mxu0 0.0
        %2122 = vmatprep.subr.mxu0 0.0
        %2123 = vmatpush1.xpose.msra.mxu0 0.0
        %2124 = vmatprep.subr.mxu0 0.0
        %2125 = vmatpush1.xpose.msra.mxu0 0.0
        %2126 = vmatprep.subr.mxu0 0.0
        %2127 = vmatpush1.xpose.msra.mxu0 0.0
        %2128 = vmatprep.subr.mxu0 0.0
        %2129 = vmatpush1.xpose.msra.mxu0 0.0
        %2130 = vmatprep.subr.mxu0 0.0
        %2131 = vmatpush1.xpose.msra.mxu0 0.0
        %2132 = vmatprep.subr.mxu0 0.0
        %2133 = vmatpush1.xpose.msra.mxu0 0.0
        %2134 = vmatprep.subr.mxu0 0.0
        %2135 = vmatpush1.xpose.msra.mxu0 0.0
        %2136 = vmatprep.subr.mxu0 0.0
        %2137 = vmatpush1.xpose.msra.mxu0 0.0
        %2138 = vmatprep.mubr.f32.mxu0 0.0
        %2139 = vmatmul.mubr.f32.gmra.mrb[0].mxu0 %v2066
        %v2140 = vpop.f32.mrb[0].mxu0
        %v2141 = vadd.f32 0.0, %v2140
        %v2142 = vpop.f32.mrb[0].mxu0
        %2143 = vmatprep.mubr.f32.mxu0 0.0
        %2144 = vmatmul.mubr.f32.gmra.mrb[0].mxu0 %v2068
        %v2145 = vpop.f32.mrb[0].mxu0
        %v2146 = vadd.f32 0.0, %v2145
        %v2147 = vpop.f32.mrb[0].mxu0
        %2148 = vdwg.mxu0
        %v2149 = vmul.f32 %v2141, 0.35355338
        %v2150 = vmul.f32 %v2146, 0.35355338
        %v2151 = vsel %vm1509, %v2149, -inf
        %2152 = vmax.xlane.f32.xlu0 %v2151
        %v2153 = vpop.xlane.xlu0 %2152
        %v2154 = vsel %vm1513, %v2150, -inf
        %2155 = vmax.xlane.f32.xlu0 %v2154
        %v2156 = vpop.xlane.xlu0 %2155
        %v2157 = vsub.f32 %v2149, %v2153
        %v2158 = vsub.f32 %v2150, %v2156
        %v2159 = vmul.f32 %v2157, 1.442695
        %v2160 = vpow.pop %v2159
        %v2161 = vmul.f32 %v2158, 1.442695
        %v2162 = vpow.pop %v2161
        %v2163 = vsel %vm1509, %v2160, 0.0
        %2164 = vadd.xlane.f32.xlu0 %v2163
        %v2165 = vpop.xlane.xlu0 %2164
        %v2166 = vsel %vm1513, %v2162, 0.0
        %2167 = vadd.xlane.f32.xlu0 %v2166
        %v2168 = vpop.xlane.xlu0 %2167
        %v2169 = vrcp.pop %v2165
        %v2170 = vrcp.pop %v2168
        %v2171 = vmul.f32 %v2160, %v2169
        %v2172 = vmul.f32 %v2162, %v2170
        %2173 = vst.msk [vmem:[%s855 + $0x1b] sm:$0xff] %vm1509, %v2171
        %2174 = vst.msk [vmem:[%s855 + $0x23] sm:$0x1] %vm1513, %v2172
        %2175 = vrot.lane.b32.xlu0 %v1404, 104
        %v2176 = vpop.permute.xlu0 %2175
        %2177 = vrot.lane.b32.xlu0 %v1409, 104
        %v2178 = vpop.permute.xlu0 %2177
        %v2181 = vsel %vm1509, %v2171, 0
        %v2184 = vsel %vm1509, %v2172, 0
        %v2186 = vsel %vm1541, %v2178, 0
        %2188 = vmatprep.subr.mxu0 0.0
        %2189 = vmatpush1.msra.mxu0 %v2176
        %2190 = vmatprep.subr.mxu0 0.0
        %2191 = vmatpush1.msra.mxu0 %v2186
        %2192 = vmatprep.subr.mxu0 0.0
        %2193 = vmatpush1.msra.mxu0 0.0
        %2194 = vmatprep.subr.mxu0 0.0
        %2195 = vmatpush1.msra.mxu0 0.0
        %2196 = vmatprep.subr.mxu0 0.0
        %2197 = vmatpush1.msra.mxu0 0.0
        %2198 = vmatprep.subr.mxu0 0.0
        %2199 = vmatpush1.msra.mxu0 0.0
        %2200 = vmatprep.subr.mxu0 0.0
        %2201 = vmatpush1.msra.mxu0 0.0
        %2202 = vmatprep.subr.mxu0 0.0
        %2203 = vmatpush1.msra.mxu0 0.0
        %2204 = vmatprep.subr.mxu0 0.0
        %2205 = vmatpush1.msra.mxu0 0.0
        %2206 = vmatprep.subr.mxu0 0.0
        %2207 = vmatpush1.msra.mxu0 0.0
        %2208 = vmatprep.subr.mxu0 0.0
        %2209 = vmatpush1.msra.mxu0 0.0
        %2210 = vmatprep.subr.mxu0 0.0
        %2211 = vmatpush1.msra.mxu0 0.0
        %2212 = vmatprep.subr.mxu0 0.0
        %2213 = vmatpush1.msra.mxu0 0.0
        %2214 = vmatprep.subr.mxu0 0.0
        %2215 = vmatpush1.msra.mxu0 0.0
        %2216 = vmatprep.subr.mxu0 0.0
        %2217 = vmatpush1.msra.mxu0 0.0
        %2218 = vmatprep.subr.mxu0 0.0
        %2219 = vmatpush1.msra.mxu0 0.0
        %2220 = vmatprep.subr.mxu0 0.0
        %2221 = vmatpush1.msra.mxu0 0.0
        %2222 = vmatprep.subr.mxu0 0.0
        %2223 = vmatpush1.msra.mxu0 0.0
        %2224 = vmatprep.subr.mxu0 0.0
        %2225 = vmatpush1.msra.mxu0 0.0
        %2226 = vmatprep.subr.mxu0 0.0
        %2227 = vmatpush1.msra.mxu0 0.0
        %2228 = vmatprep.subr.mxu0 0.0
        %2229 = vmatpush1.msra.mxu0 0.0
        %2230 = vmatprep.subr.mxu0 0.0
        %2231 = vmatpush1.msra.mxu0 0.0
        %2232 = vmatprep.subr.mxu0 0.0
        %2233 = vmatpush1.msra.mxu0 0.0
        %2234 = vmatprep.subr.mxu0 0.0
        %2235 = vmatpush1.msra.mxu0 0.0
        %2236 = vmatprep.subr.mxu0 0.0
        %2237 = vmatpush1.msra.mxu0 0.0
        %2238 = vmatprep.subr.mxu0 0.0
        %2239 = vmatpush1.msra.mxu0 0.0
        %2240 = vmatprep.subr.mxu0 0.0
        %2241 = vmatpush1.msra.mxu0 0.0
        %2242 = vmatprep.subr.mxu0 0.0
        %2243 = vmatpush1.msra.mxu0 0.0
        %2244 = vmatprep.subr.mxu0 0.0
        %2245 = vmatpush1.msra.mxu0 0.0
        %2246 = vmatprep.subr.mxu0 0.0
        %2247 = vmatpush1.msra.mxu0 0.0
        %2248 = vmatprep.subr.mxu0 0.0
        %2249 = vmatpush1.msra.mxu0 0.0
        %2250 = vmatprep.subr.mxu0 0.0
        %2251 = vmatpush1.msra.mxu0 0.0
        %2252 = vmatprep.mubr.f32.mxu0 0.0
        %2253 = vmatmul.mubr.f32.gmra.mrb[0].mxu0 %v2181
        %v2254 = vpop.f32.mrb[0].mxu0
        %v2255 = vadd.f32 0.0, %v2254
        %v2256 = vpop.f32.mrb[0].mxu0
        %2257 = vmatprep.mubr.f32.mxu0 0.0
        %2258 = vmatmul.mubr.f32.gmra.mrb[0].mxu0 %v2184
        %v2259 = vpop.f32.mrb[0].mxu0
        %v2260 = vadd.f32 0.0, %v2259
        %v2261 = vpop.f32.mrb[0].mxu0
        %2262 = vdwg.mxu0
        %2265 = vrot.lane.b32.xlu0 %v2255, 24
        %v2266 = vpop.permute.xlu0 %2265
        %2267 = vrot.lane.b32.xlu0 %v2260, 24
        %v2268 = vpop.permute.xlu0 %2267
        %vm2271 = vcmask 261312
        %2272 = vst.msk [vmem:[#allocation2] sm:$0xff] %vm2271, %v2266
        %vm2273 = vcmask 254144
        %2274 = vst.msk [vmem:[#allocation2 + $0x8] sm:$0x1] %vm2273, %v2268
        %2275 = vrot.lane.b32.xlu0 %v1228, 96
        %v2276 = vpop.permute.xlu0 %2275
        %2277 = vrot.lane.b32.xlu0 %v1233, 96
        %v2278 = vpop.permute.xlu0 %2277
        %2279 = vrot.lane.b32.xlu0 %v1316, 96
        %v2280 = vpop.permute.xlu0 %2279
        %2281 = vrot.lane.b32.xlu0 %v1321, 96
        %v2282 = vpop.permute.xlu0 %2281
        %v2283 = vsel %vm1419, %v2276, 0
        %v2285 = vsel %vm1419, %v2278, 0
        %v2287 = vsel %vm1419, %v2280, 0
        %v2289 = vsel %vm1419, %v2282, 0
        %2291 = vmatprep.subr.mxu0 0.0
        %2292 = vmatpush1.xpose.msra.mxu0 %v2287
        %2293 = vmatprep.subr.mxu0 0.0
        %2294 = vmatpush1.xpose.msra.mxu0 %v2289
        %2295 = vmatprep.subr.mxu0 0.0
        %2296 = vmatpush1.xpose.msra.mxu0 0.0
        %2297 = vmatprep.subr.mxu0 0.0
        %2298 = vmatpush1.xpose.msra.mxu0 0.0
        %2299 = vmatprep.subr.mxu0 0.0
        %2300 = vmatpush1.xpose.msra.mxu0 0.0
        %2301 = vmatprep.subr.mxu0 0.0
        %2302 = vmatpush1.xpose.msra.mxu0 0.0
        %2303 = vmatprep.subr.mxu0 0.0
        %2304 = vmatpush1.xpose.msra.mxu0 0.0
        %2305 = vmatprep.subr.mxu0 0.0
        %2306 = vmatpush1.xpose.msra.mxu0 0.0
        %2307 = vmatprep.subr.mxu0 0.0
        %2308 = vmatpush1.xpose.msra.mxu0 0.0
        %2309 = vmatprep.subr.mxu0 0.0
        %2310 = vmatpush1.xpose.msra.mxu0 0.0
        %2311 = vmatprep.subr.mxu0 0.0
        %2312 = vmatpush1.xpose.msra.mxu0 0.0
        %2313 = vmatprep.subr.mxu0 0.0
        %2314 = vmatpush1.xpose.msra.mxu0 0.0
        %2315 = vmatprep.subr.mxu0 0.0
        %2316 = vmatpush1.xpose.msra.mxu0 0.0
        %2317 = vmatprep.subr.mxu0 0.0
        %2318 = vmatpush1.xpose.msra.mxu0 0.0
        %2319 = vmatprep.subr.mxu0 0.0
        %2320 = vmatpush1.xpose.msra.mxu0 0.0
        %2321 = vmatprep.subr.mxu0 0.0
        %2322 = vmatpush1.xpose.msra.mxu0 0.0
        %2323 = vmatprep.subr.mxu0 0.0
        %2324 = vmatpush1.xpose.msra.mxu0 0.0
        %2325 = vmatprep.subr.mxu0 0.0
        %2326 = vmatpush1.xpose.msra.mxu0 0.0
        %2327 = vmatprep.subr.mxu0 0.0
        %2328 = vmatpush1.xpose.msra.mxu0 0.0
        %2329 = vmatprep.subr.mxu0 0.0
        %2330 = vmatpush1.xpose.msra.mxu0 0.0
        %2331 = vmatprep.subr.mxu0 0.0
        %2332 = vmatpush1.xpose.msra.mxu0 0.0
        %2333 = vmatprep.subr.mxu0 0.0
        %2334 = vmatpush1.xpose.msra.mxu0 0.0
        %2335 = vmatprep.subr.mxu0 0.0
        %2336 = vmatpush1.xpose.msra.mxu0 0.0
        %2337 = vmatprep.subr.mxu0 0.0
        %2338 = vmatpush1.xpose.msra.mxu0 0.0
        %2339 = vmatprep.subr.mxu0 0.0
        %2340 = vmatpush1.xpose.msra.mxu0 0.0
        %2341 = vmatprep.subr.mxu0 0.0
        %2342 = vmatpush1.xpose.msra.mxu0 0.0
        %2343 = vmatprep.subr.mxu0 0.0
        %2344 = vmatpush1.xpose.msra.mxu0 0.0
        %2345 = vmatprep.subr.mxu0 0.0
        %2346 = vmatpush1.xpose.msra.mxu0 0.0
        %2347 = vmatprep.subr.mxu0 0.0
        %2348 = vmatpush1.xpose.msra.mxu0 0.0
        %2349 = vmatprep.subr.mxu0 0.0
        %2350 = vmatpush1.xpose.msra.mxu0 0.0
        %2351 = vmatprep.subr.mxu0 0.0
        %2352 = vmatpush1.xpose.msra.mxu0 0.0
        %2353 = vmatprep.subr.mxu0 0.0
        %2354 = vmatpush1.xpose.msra.mxu0 0.0
        %2355 = vmatprep.mubr.f32.mxu0 0.0
        %2356 = vmatmul.mubr.f32.gmra.mrb[0].mxu0 %v2283
        %v2357 = vpop.f32.mrb[0].mxu0
        %v2358 = vadd.f32 0.0, %v2357
        %v2359 = vpop.f32.mrb[0].mxu0
        %2360 = vmatprep.mubr.f32.mxu0 0.0
        %2361 = vmatmul.mubr.f32.gmra.mrb[0].mxu0 %v2285
        %v2362 = vpop.f32.mrb[0].mxu0
        %v2363 = vadd.f32 0.0, %v2362
        %v2364 = vpop.f32.mrb[0].mxu0
        %2365 = vdwg.mxu0
        %v2366 = vmul.f32 %v2358, 0.35355338
        %v2367 = vmul.f32 %v2363, 0.35355338
        %v2368 = vsel %vm1509, %v2366, -inf
        %2369 = vmax.xlane.f32.xlu0 %v2368
        %v2370 = vpop.xlane.xlu0 %2369
        %v2371 = vsel %vm1513, %v2367, -inf
        %2372 = vmax.xlane.f32.xlu0 %v2371
        %v2373 = vpop.xlane.xlu0 %2372
        %v2374 = vsub.f32 %v2366, %v2370
        %v2375 = vsub.f32 %v2367, %v2373
        %v2376 = vmul.f32 %v2374, 1.442695
        %v2377 = vpow.pop %v2376
        %v2378 = vmul.f32 %v2375, 1.442695
        %v2379 = vpow.pop %v2378
        %v2380 = vsel %vm1509, %v2377, 0.0
        %2381 = vadd.xlane.f32.xlu0 %v2380
        %v2382 = vpop.xlane.xlu0 %2381
        %v2383 = vsel %vm1513, %v2379, 0.0
        %2384 = vadd.xlane.f32.xlu0 %v2383
        %v2385 = vpop.xlane.xlu0 %2384
        %v2386 = vrcp.pop %v2382
        %v2387 = vrcp.pop %v2385
        %v2388 = vmul.f32 %v2377, %v2386
        %v2389 = vmul.f32 %v2379, %v2387
        %2390 = vst.msk [vmem:[%s855 + $0x24] sm:$0xff] %vm1509, %v2388
        %2391 = vst.msk [vmem:[%s855 + $0x2c] sm:$0x1] %vm1513, %v2389
        %2392 = vrot.lane.b32.xlu0 %v1404, 96
        %v2393 = vpop.permute.xlu0 %2392
        %2394 = vrot.lane.b32.xlu0 %v1409, 96
        %v2395 = vpop.permute.xlu0 %2394
        %v2398 = vsel %vm1509, %v2388, 0
        %v2401 = vsel %vm1509, %v2389, 0
        %v2403 = vsel %vm1541, %v2395, 0
        %2405 = vmatprep.subr.mxu0 0.0
        %2406 = vmatpush1.msra.mxu0 %v2393
        %2407 = vmatprep.subr.mxu0 0.0
        %2408 = vmatpush1.msra.mxu0 %v2403
        %2409 = vmatprep.subr.mxu0 0.0
        %2410 = vmatpush1.msra.mxu0 0.0
        %2411 = vmatprep.subr.mxu0 0.0
        %2412 = vmatpush1.msra.mxu0 0.0
        %2413 = vmatprep.subr.mxu0 0.0
        %2414 = vmatpush1.msra.mxu0 0.0
        %2415 = vmatprep.subr.mxu0 0.0
        %2416 = vmatpush1.msra.mxu0 0.0
        %2417 = vmatprep.subr.mxu0 0.0
        %2418 = vmatpush1.msra.mxu0 0.0
        %2419 = vmatprep.subr.mxu0 0.0
        %2420 = vmatpush1.msra.mxu0 0.0
        %2421 = vmatprep.subr.mxu0 0.0
        %2422 = vmatpush1.msra.mxu0 0.0
        %2423 = vmatprep.subr.mxu0 0.0
        %2424 = vmatpush1.msra.mxu0 0.0
        %2425 = vmatprep.subr.mxu0 0.0
        %2426 = vmatpush1.msra.mxu0 0.0
        %2427 = vmatprep.subr.mxu0 0.0
        %2428 = vmatpush1.msra.mxu0 0.0
        %2429 = vmatprep.subr.mxu0 0.0
        %2430 = vmatpush1.msra.mxu0 0.0
        %2431 = vmatprep.subr.mxu0 0.0
        %2432 = vmatpush1.msra.mxu0 0.0
        %2433 = vmatprep.subr.mxu0 0.0
        %2434 = vmatpush1.msra.mxu0 0.0
        %2435 = vmatprep.subr.mxu0 0.0
        %2436 = vmatpush1.msra.mxu0 0.0
        %2437 = vmatprep.subr.mxu0 0.0
        %2438 = vmatpush1.msra.mxu0 0.0
        %2439 = vmatprep.subr.mxu0 0.0
        %2440 = vmatpush1.msra.mxu0 0.0
        %2441 = vmatprep.subr.mxu0 0.0
        %2442 = vmatpush1.msra.mxu0 0.0
        %2443 = vmatprep.subr.mxu0 0.0
        %2444 = vmatpush1.msra.mxu0 0.0
        %2445 = vmatprep.subr.mxu0 0.0
        %2446 = vmatpush1.msra.mxu0 0.0
        %2447 = vmatprep.subr.mxu0 0.0
        %2448 = vmatpush1.msra.mxu0 0.0
        %2449 = vmatprep.subr.mxu0 0.0
        %2450 = vmatpush1.msra.mxu0 0.0
        %2451 = vmatprep.subr.mxu0 0.0
        %2452 = vmatpush1.msra.mxu0 0.0
        %2453 = vmatprep.subr.mxu0 0.0
        %2454 = vmatpush1.msra.mxu0 0.0
        %2455 = vmatprep.subr.mxu0 0.0
        %2456 = vmatpush1.msra.mxu0 0.0
        %2457 = vmatprep.subr.mxu0 0.0
        %2458 = vmatpush1.msra.mxu0 0.0
        %2459 = vmatprep.subr.mxu0 0.0
        %2460 = vmatpush1.msra.mxu0 0.0
        %2461 = vmatprep.subr.mxu0 0.0
        %2462 = vmatpush1.msra.mxu0 0.0
        %2463 = vmatprep.subr.mxu0 0.0
        %2464 = vmatpush1.msra.mxu0 0.0
        %2465 = vmatprep.subr.mxu0 0.0
        %2466 = vmatpush1.msra.mxu0 0.0
        %2467 = vmatprep.subr.mxu0 0.0
        %2468 = vmatpush1.msra.mxu0 0.0
        %2469 = vmatprep.mubr.f32.mxu0 0.0
        %2470 = vmatmul.mubr.f32.gmra.mrb[0].mxu0 %v2398
        %v2471 = vpop.f32.mrb[0].mxu0
        %v2472 = vadd.f32 0.0, %v2471
        %v2473 = vpop.f32.mrb[0].mxu0
        %2474 = vmatprep.mubr.f32.mxu0 0.0
        %2475 = vmatmul.mubr.f32.gmra.mrb[0].mxu0 %v2401
        %v2476 = vpop.f32.mrb[0].mxu0
        %v2477 = vadd.f32 0.0, %v2476
        %v2478 = vpop.f32.mrb[0].mxu0
        %2479 = vdwg.mxu0
        %2482 = vrot.lane.b32.xlu0 %v2472, 32
        %v2483 = vpop.permute.xlu0 %2482
        %2484 = vrot.lane.b32.xlu0 %v2477, 32
        %v2485 = vpop.permute.xlu0 %2484
        %vm2488 = vcmask 326912
        %2489 = vst.msk [vmem:[#allocation2] sm:$0xff] %vm2488, %v2483
        %vm2490 = vcmask 319744
        %2491 = vst.msk [vmem:[#allocation2 + $0x8] sm:$0x1] %vm2490, %v2485
        %2492 = vrot.lane.b32.xlu0 %v1228, 88
        %v2493 = vpop.permute.xlu0 %2492
        %2494 = vrot.lane.b32.xlu0 %v1233, 88
        %v2495 = vpop.permute.xlu0 %2494
        %2496 = vrot.lane.b32.xlu0 %v1316, 88
        %v2497 = vpop.permute.xlu0 %2496
        %2498 = vrot.lane.b32.xlu0 %v1321, 88
        %v2499 = vpop.permute.xlu0 %2498
        %v2500 = vsel %vm1419, %v2493, 0
        %v2502 = vsel %vm1419, %v2495, 0
        %v2504 = vsel %vm1419, %v2497, 0
        %v2506 = vsel %vm1419, %v2499, 0
        %2508 = vmatprep.subr.mxu0 0.0
        %2509 = vmatpush1.xpose.msra.mxu0 %v2504
        %2510 = vmatprep.subr.mxu0 0.0
        %2511 = vmatpush1.xpose.msra.mxu0 %v2506
        %2512 = vmatprep.subr.mxu0 0.0
        %2513 = vmatpush1.xpose.msra.mxu0 0.0
        %2514 = vmatprep.subr.mxu0 0.0
        %2515 = vmatpush1.xpose.msra.mxu0 0.0
        %2516 = vmatprep.subr.mxu0 0.0
        %2517 = vmatpush1.xpose.msra.mxu0 0.0
        %2518 = vmatprep.subr.mxu0 0.0
        %2519 = vmatpush1.xpose.msra.mxu0 0.0
        %2520 = vmatprep.subr.mxu0 0.0
        %2521 = vmatpush1.xpose.msra.mxu0 0.0
        %2522 = vmatprep.subr.mxu0 0.0
        %2523 = vmatpush1.xpose.msra.mxu0 0.0
        %2524 = vmatprep.subr.mxu0 0.0
        %2525 = vmatpush1.xpose.msra.mxu0 0.0
        %2526 = vmatprep.subr.mxu0 0.0
        %2527 = vmatpush1.xpose.msra.mxu0 0.0
        %2528 = vmatprep.subr.mxu0 0.0
        %2529 = vmatpush1.xpose.msra.mxu0 0.0
        %2530 = vmatprep.subr.mxu0 0.0
        %2531 = vmatpush1.xpose.msra.mxu0 0.0
        %2532 = vmatprep.subr.mxu0 0.0
        %2533 = vmatpush1.xpose.msra.mxu0 0.0
        %2534 = vmatprep.subr.mxu0 0.0
        %2535 = vmatpush1.xpose.msra.mxu0 0.0
        %2536 = vmatprep.subr.mxu0 0.0
        %2537 = vmatpush1.xpose.msra.mxu0 0.0
        %2538 = vmatprep.subr.mxu0 0.0
        %2539 = vmatpush1.xpose.msra.mxu0 0.0
        %2540 = vmatprep.subr.mxu0 0.0
        %2541 = vmatpush1.xpose.msra.mxu0 0.0
        %2542 = vmatprep.subr.mxu0 0.0
        %2543 = vmatpush1.xpose.msra.mxu0 0.0
        %2544 = vmatprep.subr.mxu0 0.0
        %2545 = vmatpush1.xpose.msra.mxu0 0.0
        %2546 = vmatprep.subr.mxu0 0.0
        %2547 = vmatpush1.xpose.msra.mxu0 0.0
        %2548 = vmatprep.subr.mxu0 0.0
        %2549 = vmatpush1.xpose.msra.mxu0 0.0
        %2550 = vmatprep.subr.mxu0 0.0
        %2551 = vmatpush1.xpose.msra.mxu0 0.0
        %2552 = vmatprep.subr.mxu0 0.0
        %2553 = vmatpush1.xpose.msra.mxu0 0.0
        %2554 = vmatprep.subr.mxu0 0.0
        %2555 = vmatpush1.xpose.msra.mxu0 0.0
        %2556 = vmatprep.subr.mxu0 0.0
        %2557 = vmatpush1.xpose.msra.mxu0 0.0
        %2558 = vmatprep.subr.mxu0 0.0
        %2559 = vmatpush1.xpose.msra.mxu0 0.0
        %2560 = vmatprep.subr.mxu0 0.0
        %2561 = vmatpush1.xpose.msra.mxu0 0.0
        %2562 = vmatprep.subr.mxu0 0.0
        %2563 = vmatpush1.xpose.msra.mxu0 0.0
        %2564 = vmatprep.subr.mxu0 0.0
        %2565 = vmatpush1.xpose.msra.mxu0 0.0
        %2566 = vmatprep.subr.mxu0 0.0
        %2567 = vmatpush1.xpose.msra.mxu0 0.0
        %2568 = vmatprep.subr.mxu0 0.0
        %2569 = vmatpush1.xpose.msra.mxu0 0.0
        %2570 = vmatprep.subr.mxu0 0.0
        %2571 = vmatpush1.xpose.msra.mxu0 0.0
        %2572 = vmatprep.mubr.f32.mxu0 0.0
        %2573 = vmatmul.mubr.f32.gmra.mrb[0].mxu0 %v2500
        %v2574 = vpop.f32.mrb[0].mxu0
        %v2575 = vadd.f32 0.0, %v2574
        %v2576 = vpop.f32.mrb[0].mxu0
        %2577 = vmatprep.mubr.f32.mxu0 0.0
        %2578 = vmatmul.mubr.f32.gmra.mrb[0].mxu0 %v2502
        %v2579 = vpop.f32.mrb[0].mxu0
        %v2580 = vadd.f32 0.0, %v2579
        %v2581 = vpop.f32.mrb[0].mxu0
        %2582 = vdwg.mxu0
        %v2583 = vmul.f32 %v2575, 0.35355338
        %v2584 = vmul.f32 %v2580, 0.35355338
        %v2585 = vsel %vm1509, %v2583, -inf
        %2586 = vmax.xlane.f32.xlu0 %v2585
        %v2587 = vpop.xlane.xlu0 %2586
        %v2588 = vsel %vm1513, %v2584, -inf
        %2589 = vmax.xlane.f32.xlu0 %v2588
        %v2590 = vpop.xlane.xlu0 %2589
        %v2591 = vsub.f32 %v2583, %v2587
        %v2592 = vsub.f32 %v2584, %v2590
        %v2593 = vmul.f32 %v2591, 1.442695
        %v2594 = vpow.pop %v2593
        %v2595 = vmul.f32 %v2592, 1.442695
        %v2596 = vpow.pop %v2595
        %v2597 = vsel %vm1509, %v2594, 0.0
        %2598 = vadd.xlane.f32.xlu0 %v2597
        %v2599 = vpop.xlane.xlu0 %2598
        %v2600 = vsel %vm1513, %v2596, 0.0
        %2601 = vadd.xlane.f32.xlu0 %v2600
        %v2602 = vpop.xlane.xlu0 %2601
        %v2603 = vrcp.pop %v2599
        %v2604 = vrcp.pop %v2602
        %v2605 = vmul.f32 %v2594, %v2603
        %v2606 = vmul.f32 %v2596, %v2604
        %2607 = vst.msk [vmem:[%s855 + $0x2d] sm:$0xff] %vm1509, %v2605
        %2608 = vst.msk [vmem:[%s855 + $0x35] sm:$0x1] %vm1513, %v2606
        %2609 = vrot.lane.b32.xlu0 %v1404, 88
        %v2610 = vpop.permute.xlu0 %2609
        %2611 = vrot.lane.b32.xlu0 %v1409, 88
        %v2612 = vpop.permute.xlu0 %2611
        %v2615 = vsel %vm1509, %v2605, 0
        %v2618 = vsel %vm1509, %v2606, 0
        %v2620 = vsel %vm1541, %v2612, 0
        %2622 = vmatprep.subr.mxu0 0.0
        %2623 = vmatpush1.msra.mxu0 %v2610
        %2624 = vmatprep.subr.mxu0 0.0
        %2625 = vmatpush1.msra.mxu0 %v2620
        %2626 = vmatprep.subr.mxu0 0.0
        %2627 = vmatpush1.msra.mxu0 0.0
        %2628 = vmatprep.subr.mxu0 0.0
        %2629 = vmatpush1.msra.mxu0 0.0
        %2630 = vmatprep.subr.mxu0 0.0
        %2631 = vmatpush1.msra.mxu0 0.0
        %2632 = vmatprep.subr.mxu0 0.0
        %2633 = vmatpush1.msra.mxu0 0.0
        %2634 = vmatprep.subr.mxu0 0.0
        %2635 = vmatpush1.msra.mxu0 0.0
        %2636 = vmatprep.subr.mxu0 0.0
        %2637 = vmatpush1.msra.mxu0 0.0
        %2638 = vmatprep.subr.mxu0 0.0
        %2639 = vmatpush1.msra.mxu0 0.0
        %2640 = vmatprep.subr.mxu0 0.0
        %2641 = vmatpush1.msra.mxu0 0.0
        %2642 = vmatprep.subr.mxu0 0.0
        %2643 = vmatpush1.msra.mxu0 0.0
        %2644 = vmatprep.subr.mxu0 0.0
        %2645 = vmatpush1.msra.mxu0 0.0
        %2646 = vmatprep.subr.mxu0 0.0
        %2647 = vmatpush1.msra.mxu0 0.0
        %2648 = vmatprep.subr.mxu0 0.0
        %2649 = vmatpush1.msra.mxu0 0.0
        %2650 = vmatprep.subr.mxu0 0.0
        %2651 = vmatpush1.msra.mxu0 0.0
        %2652 = vmatprep.subr.mxu0 0.0
        %2653 = vmatpush1.msra.mxu0 0.0
        %2654 = vmatprep.subr.mxu0 0.0
        %2655 = vmatpush1.msra.mxu0 0.0
        %2656 = vmatprep.subr.mxu0 0.0
        %2657 = vmatpush1.msra.mxu0 0.0
        %2658 = vmatprep.subr.mxu0 0.0
        %2659 = vmatpush1.msra.mxu0 0.0
        %2660 = vmatprep.subr.mxu0 0.0
        %2661 = vmatpush1.msra.mxu0 0.0
        %2662 = vmatprep.subr.mxu0 0.0
        %2663 = vmatpush1.msra.mxu0 0.0
        %2664 = vmatprep.subr.mxu0 0.0
        %2665 = vmatpush1.msra.mxu0 0.0
        %2666 = vmatprep.subr.mxu0 0.0
        %2667 = vmatpush1.msra.mxu0 0.0
        %2668 = vmatprep.subr.mxu0 0.0
        %2669 = vmatpush1.msra.mxu0 0.0
        %2670 = vmatprep.subr.mxu0 0.0
        %2671 = vmatpush1.msra.mxu0 0.0
        %2672 = vmatprep.subr.mxu0 0.0
        %2673 = vmatpush1.msra.mxu0 0.0
        %2674 = vmatprep.subr.mxu0 0.0
        %2675 = vmatpush1.msra.mxu0 0.0
        %2676 = vmatprep.subr.mxu0 0.0
        %2677 = vmatpush1.msra.mxu0 0.0
        %2678 = vmatprep.subr.mxu0 0.0
        %2679 = vmatpush1.msra.mxu0 0.0
        %2680 = vmatprep.subr.mxu0 0.0
        %2681 = vmatpush1.msra.mxu0 0.0
        %2682 = vmatprep.subr.mxu0 0.0
        %2683 = vmatpush1.msra.mxu0 0.0
        %2684 = vmatprep.subr.mxu0 0.0
        %2685 = vmatpush1.msra.mxu0 0.0
        %2686 = vmatprep.mubr.f32.mxu0 0.0
        %2687 = vmatmul.mubr.f32.gmra.mrb[0].mxu0 %v2615
        %v2688 = vpop.f32.mrb[0].mxu0
        %v2689 = vadd.f32 0.0, %v2688
        %v2690 = vpop.f32.mrb[0].mxu0
        %2691 = vmatprep.mubr.f32.mxu0 0.0
        %2692 = vmatmul.mubr.f32.gmra.mrb[0].mxu0 %v2618
        %v2693 = vpop.f32.mrb[0].mxu0
        %v2694 = vadd.f32 0.0, %v2693
        %v2695 = vpop.f32.mrb[0].mxu0
        %2696 = vdwg.mxu0
        %2699 = vrot.lane.b32.xlu0 %v2689, 40
        %v2700 = vpop.permute.xlu0 %2699
        %2701 = vrot.lane.b32.xlu0 %v2694, 40
        %v2702 = vpop.permute.xlu0 %2701
        %vm2705 = vcmask 392512
        %2706 = vst.msk [vmem:[#allocation2] sm:$0xff] %vm2705, %v2700
        %vm2707 = vcmask 385344
        %2708 = vst.msk [vmem:[#allocation2 + $0x8] sm:$0x1] %vm2707, %v2702
        %v2709 = vld [vmem:[#allocation2] sm:$0xff]
        %v2710 = vld [vmem:[#allocation2 + $0x8] sm:$0x1]
        %v2711 = vld [vmem:[%s15] sm:$0xff]
        %v2712 = vld [vmem:[%s15 + $0x8] sm:$0xff]
        %v2713 = vld [vmem:[%s15 + $0x10] sm:$0xff]
        %v2714 = vld [vmem:[%s15 + $0x18] sm:$0xff]
        %v2715 = vld [vmem:[%s15 + $0x20] sm:$0xff]
        %v2716 = vld [vmem:[%s15 + $0x28] sm:$0xff]
        %v2718 = vsel %vm1095, %v2709, 0
        %v2721 = vsel %vm1095, %v2710, 0
        %2723 = vmatprep.subr.mxu0 0.0
        %2724 = vmatpush1.msra.mxu0 %v2711
        %2725 = vmatprep.subr.mxu0 0.0
        %2726 = vmatpush1.msra.mxu0 %v2712
        %2727 = vmatprep.subr.mxu0 0.0
        %2728 = vmatpush1.msra.mxu0 %v2713
        %2729 = vmatprep.subr.mxu0 0.0
        %2730 = vmatpush1.msra.mxu0 %v2714
        %2731 = vmatprep.subr.mxu0 0.0
        %2732 = vmatpush1.msra.mxu0 %v2715
        %2733 = vmatprep.subr.mxu0 0.0
        %2734 = vmatpush1.msra.mxu0 %v2716
        %2735 = vmatprep.subr.mxu0 0.0
        %2736 = vmatpush1.msra.mxu0 0.0
        %2737 = vmatprep.subr.mxu0 0.0
        %2738 = vmatpush1.msra.mxu0 0.0
        %2739 = vmatprep.subr.mxu0 0.0
        %2740 = vmatpush1.msra.mxu0 0.0
        %2741 = vmatprep.subr.mxu0 0.0
        %2742 = vmatpush1.msra.mxu0 0.0
        %2743 = vmatprep.subr.mxu0 0.0
        %2744 = vmatpush1.msra.mxu0 0.0
        %2745 = vmatprep.subr.mxu0 0.0
        %2746 = vmatpush1.msra.mxu0 0.0
        %2747 = vmatprep.subr.mxu0 0.0
        %2748 = vmatpush1.msra.mxu0 0.0
        %2749 = vmatprep.subr.mxu0 0.0
        %2750 = vmatpush1.msra.mxu0 0.0
        %2751 = vmatprep.subr.mxu0 0.0
        %2752 = vmatpush1.msra.mxu0 0.0
        %2753 = vmatprep.subr.mxu0 0.0
        %2754 = vmatpush1.msra.mxu0 0.0
        %2755 = vmatprep.subr.mxu0 0.0
        %2756 = vmatpush1.msra.mxu0 0.0
        %2757 = vmatprep.subr.mxu0 0.0
        %2758 = vmatpush1.msra.mxu0 0.0
        %2759 = vmatprep.subr.mxu0 0.0
        %2760 = vmatpush1.msra.mxu0 0.0
        %2761 = vmatprep.subr.mxu0 0.0
        %2762 = vmatpush1.msra.mxu0 0.0
        %2763 = vmatprep.subr.mxu0 0.0
        %2764 = vmatpush1.msra.mxu0 0.0
        %2765 = vmatprep.subr.mxu0 0.0
        %2766 = vmatpush1.msra.mxu0 0.0
        %2767 = vmatprep.subr.mxu0 0.0
        %2768 = vmatpush1.msra.mxu0 0.0
        %2769 = vmatprep.subr.mxu0 0.0
        %2770 = vmatpush1.msra.mxu0 0.0
        %2771 = vmatprep.subr.mxu0 0.0
        %2772 = vmatpush1.msra.mxu0 0.0
        %2773 = vmatprep.subr.mxu0 0.0
        %2774 = vmatpush1.msra.mxu0 0.0
        %2775 = vmatprep.subr.mxu0 0.0
        %2776 = vmatpush1.msra.mxu0 0.0
        %2777 = vmatprep.subr.mxu0 0.0
        %2778 = vmatpush1.msra.mxu0 0.0
        %2779 = vmatprep.subr.mxu0 0.0
        %2780 = vmatpush1.msra.mxu0 0.0
        %2781 = vmatprep.subr.mxu0 0.0
        %2782 = vmatpush1.msra.mxu0 0.0
        %2783 = vmatprep.subr.mxu0 0.0
        %2784 = vmatpush1.msra.mxu0 0.0
        %2785 = vmatprep.subr.mxu0 0.0
        %2786 = vmatpush1.msra.mxu0 0.0
        %2787 = vmatprep.mubr.f32.mxu0 0.0
        %2788 = vmatmul.mubr.f32.gmra.mrb[0].mxu0 %v2718
        %v2789 = vpop.f32.mrb[0].mxu0
        %v2790 = vadd.f32 0.0, %v2789
        %v2791 = vpop.f32.mrb[0].mxu0
        %2792 = vmatprep.mubr.f32.mxu0 0.0
        %2793 = vmatmul.mubr.f32.gmra.mrb[0].mxu0 %v2721
        %v2794 = vpop.f32.mrb[0].mxu0
        %v2795 = vadd.f32 0.0, %v2794
        %v2796 = vpop.f32.mrb[0].mxu0
        %2797 = vdwg.mxu0
        %v2798 = vadd.f32 %v1093, %v2790
        %v2799 = vadd.f32 %v1094, %v2795
        %v2800 = vld [vmem:[%s16] sm:$0x1]
        %v2802 = vlaneseq
        %v2803 = vshrl.u32 %v2802, 7
        %v2804 = vsub.s32 0, %v2803
        %v2805 = vrot.slane %v2800, %v2804
        %v2807 = vadd.f32 %v2798, %v2805
        %v2808 = vadd.f32 %v2799, %v2805
        %v2809 = vsel %vm1095, %v2807, 0.0
        %2810 = vadd.xlane.f32.xlu0 %v2809
        %v2811 = vpop.xlane.xlu0 %2810
        %v2812 = vsel %vm1099, %v2808, 0.0
        %2813 = vadd.xlane.f32.xlu0 %v2812
        %v2814 = vpop.xlane.xlu0 %2813
        %v2815 = vmul.f32 %v2811, %v1103
        %v2816 = vmul.f32 %v2814, %v1103
        %v2817 = vsub.f32 %v2807, %v2815
        %v2818 = vsub.f32 %v2808, %v2816
        %v2819 = vmul.f32 %v2817, %v2817
        %v2820 = vmul.f32 %v2818, %v2818
        %v2821 = vsel %vm1095, %v2819, 0.0
        %2822 = vadd.xlane.f32.xlu0 %v2821
        %v2823 = vpop.xlane.xlu0 %2822
        %v2824 = vsel %vm1099, %v2820, 0.0
        %2825 = vadd.xlane.f32.xlu0 %v2824
        %v2826 = vpop.xlane.xlu0 %2825
        %v2827 = vmul.f32 %v2823, %v1103
        %v2828 = vmul.f32 %v2826, %v1103
        %v2829 = vadd.f32 %v2827, 1e-05
        %v2830 = vadd.f32 %v2828, 1e-05
        %v2831 = vrsqrt.pop %v2829
        %v2832 = vrsqrt.pop %v2830
        %v2833 = vmul.f32 %v2817, %v2831
        %v2834 = vmul.f32 %v2818, %v2832
        %v2835 = vld [vmem:[%s17] sm:$0x1]
        %v2837 = vlaneseq
        %v2838 = vshrl.u32 %v2837, 7
        %v2839 = vsub.s32 0, %v2838
        %v2840 = vrot.slane %v2835, %v2839
        %v2842 = vmul.f32 %v2833, %v2840
        %v2843 = vmul.f32 %v2834, %v2840
        %v2844 = vld [vmem:[%s18] sm:$0x1]
        %v2846 = vlaneseq
        %v2847 = vshrl.u32 %v2846, 7
        %v2848 = vsub.s32 0, %v2847
        %v2849 = vrot.slane %v2844, %v2848
        %v2851 = vadd.f32 %v2842, %v2849
        %v2852 = vadd.f32 %v2843, %v2849
        %v2853 = vld [vmem:[%s19] sm:$0xff]
        %v2854 = vld [vmem:[%s19 + $0x8] sm:$0xff]
        %v2855 = vld [vmem:[%s19 + $0x10] sm:$0xff]
        %v2856 = vld [vmem:[%s19 + $0x18] sm:$0xff]
        %v2857 = vld [vmem:[%s19 + $0x20] sm:$0xff]
        %v2858 = vld [vmem:[%s19 + $0x28] sm:$0xff]
        %v2859 = vld [vmem:[%s19 + $0x30] sm:$0xff]
        %v2860 = vld [vmem:[%s19 + $0x38] sm:$0xff]
        %v2861 = vld [vmem:[%s19 + $0x40] sm:$0xff]
        %v2862 = vld [vmem:[%s19 + $0x48] sm:$0xff]
        %v2863 = vld [vmem:[%s19 + $0x50] sm:$0xff]
        %v2864 = vld [vmem:[%s19 + $0x58] sm:$0xff]
        %v2865 = vld [vmem:[%s20] sm:$0x3]
        %v2867 = vlaneseq
        %v2868 = vshrl.u32 %v2867, 7
        %v2869 = vsub.s32 0, %v2868
        %v2870 = vrot.slane %v2865, %v2869
        %v2871 = vlaneseq
        %v2872 = vshrl.u32 %v2871, 7
        %v2873 = vsub.s32 1, %v2872
        %v2874 = vrot.slane %v2865, %v2873
        %v2878 = vsel %vm1095, %v2851, 0
        %v2881 = vsel %vm1095, %v2852, 0
        %2883 = vmatprep.subr.mxu0 %v2854
        %2884 = vmatpush1.msra.mxu0 %v2853
        %2885 = vmatprep.subr.mxu0 %v2856
        %2886 = vmatpush1.msra.mxu0 %v2855
        %2887 = vmatprep.subr.mxu0 %v2858
        %2888 = vmatpush1.msra.mxu0 %v2857
        %2889 = vmatprep.subr.mxu0 %v2860
        %2890 = vmatpush1.msra.mxu0 %v2859
        %2891 = vmatprep.subr.mxu0 %v2862
        %2892 = vmatpush1.msra.mxu0 %v2861
        %2893 = vmatprep.subr.mxu0 %v2864
        %2894 = vmatpush1.msra.mxu0 %v2863
        %2895 = vmatprep.subr.mxu0 0.0
        %2896 = vmatpush1.msra.mxu0 0.0
        %2897 = vmatprep.subr.mxu0 0.0
        %2898 = vmatpush1.msra.mxu0 0.0
        %2899 = vmatprep.subr.mxu0 0.0
        %2900 = vmatpush1.msra.mxu0 0.0
        %2901 = vmatprep.subr.mxu0 0.0
        %2902 = vmatpush1.msra.mxu0 0.0
        %2903 = vmatprep.subr.mxu0 0.0
        %2904 = vmatpush1.msra.mxu0 0.0
        %2905 = vmatprep.subr.mxu0 0.0
        %2906 = vmatpush1.msra.mxu0 0.0
        %2907 = vmatprep.subr.mxu0 0.0
        %2908 = vmatpush1.msra.mxu0 0.0
        %2909 = vmatprep.subr.mxu0 0.0
        %2910 = vmatpush1.msra.mxu0 0.0
        %2911 = vmatprep.subr.mxu0 0.0
        %2912 = vmatpush1.msra.mxu0 0.0
        %2913 = vmatprep.subr.mxu0 0.0
        %2914 = vmatpush1.msra.mxu0 0.0
        %2915 = vmatprep.subr.mxu0 0.0
        %2916 = vmatpush1.msra.mxu0 0.0
        %2917 = vmatprep.subr.mxu0 0.0
        %2918 = vmatpush1.msra.mxu0 0.0
        %2919 = vmatprep.subr.mxu0 0.0
        %2920 = vmatpush1.msra.mxu0 0.0
        %2921 = vmatprep.subr.mxu0 0.0
        %2922 = vmatpush1.msra.mxu0 0.0
        %2923 = vmatprep.subr.mxu0 0.0
        %2924 = vmatpush1.msra.mxu0 0.0
        %2925 = vmatprep.subr.mxu0 0.0
        %2926 = vmatpush1.msra.mxu0 0.0
        %2927 = vmatprep.subr.mxu0 0.0
        %2928 = vmatpush1.msra.mxu0 0.0
        %2929 = vmatprep.subr.mxu0 0.0
        %2930 = vmatpush1.msra.mxu0 0.0
        %2931 = vmatprep.subr.mxu0 0.0
        %2932 = vmatpush1.msra.mxu0 0.0
        %2933 = vmatprep.subr.mxu0 0.0
        %2934 = vmatpush1.msra.mxu0 0.0
        %2935 = vmatprep.subr.mxu0 0.0
        %2936 = vmatpush1.msra.mxu0 0.0
        %2937 = vmatprep.subr.mxu0 0.0
        %2938 = vmatpush1.msra.mxu0 0.0
        %2939 = vmatprep.subr.mxu0 0.0
        %2940 = vmatpush1.msra.mxu0 0.0
        %2941 = vmatprep.subr.mxu0 0.0
        %2942 = vmatpush1.msra.mxu0 0.0
        %2943 = vmatprep.subr.mxu0 0.0
        %2944 = vmatpush1.msra.mxu0 0.0
        %2945 = vmatprep.subr.mxu0 0.0
        %2946 = vmatpush1.msra.mxu0 0.0
        %2947 = vmatprep.mubr.f32.mxu0 0.0
        %2948 = vmatmul.mubr.f32.gmra.mrb[0].mxu0 %v2878
        %v2949 = vpop.f32.mrb[0].mxu0
        %v2950 = vadd.f32 %v2870, %v2949
        %v2951 = vpop.f32.mrb[0].mxu0
        %v2952 = vadd.f32 %v2874, %v2951
        %2953 = vmatprep.mubr.f32.mxu0 0.0
        %2954 = vmatmul.mubr.f32.gmra.mrb[0].mxu0 %v2881
        %v2955 = vpop.f32.mrb[0].mxu0
        %v2956 = vadd.f32 %v2870, %v2955
        %v2957 = vpop.f32.mrb[0].mxu0
        %v2958 = vadd.f32 %v2874, %v2957
        %2959 = vdwg.mxu0
        %v2960 = vmul.f32 %v2950, %v2950
        %v2961 = vmul.f32 %v2952, %v2952
        %v2962 = vmul.f32 %v2956, %v2956
        %v2963 = vmul.f32 %v2958, %v2958
        %v2964 = vmul.f32 %v2950, %v2960
        %v2965 = vmul.f32 %v2952, %v2961
        %v2966 = vmul.f32 %v2956, %v2962
        %v2967 = vmul.f32 %v2958, %v2963
        %v2968 = vmul.f32 %v2964, 0.044715
        %v2969 = vmul.f32 %v2965, 0.044715
        %v2970 = vmul.f32 %v2966, 0.044715
        %v2971 = vmul.f32 %v2967, 0.044715
        %v2972 = vadd.f32 %v2950, %v2968
        %v2973 = vadd.f32 %v2952, %v2969
        %v2974 = vadd.f32 %v2956, %v2970
        %v2975 = vadd.f32 %v2958, %v2971
        %v2976 = vmul.f32 %v2972, 0.7978846
        %v2977 = vmul.f32 %v2973, 0.7978846
        %v2978 = vmul.f32 %v2974, 0.7978846
        %v2979 = vmul.f32 %v2975, 0.7978846
        %v2980 = vtanh.pop %v2976
        %v2981 = vtanh.pop %v2977
        %v2982 = vtanh.pop %v2978
        %v2983 = vtanh.pop %v2979
        %v2984 = vadd.f32 %v2980, 1.0
        %v2985 = vadd.f32 %v2981, 1.0
        %v2986 = vadd.f32 %v2982, 1.0
        %v2987 = vadd.f32 %v2983, 1.0
        %v2988 = vmul.f32 %v2984, 0.5
        %v2989 = vmul.f32 %v2985, 0.5
        %v2990 = vmul.f32 %v2986, 0.5
        %v2991 = vmul.f32 %v2987, 0.5
        %v2992 = vmul.f32 %v2950, %v2988
        %v2993 = vmul.f32 %v2952, %v2989
        %v2994 = vmul.f32 %v2956, %v2990
        %v2995 = vmul.f32 %v2958, %v2991
        %v2996 = vld [vmem:[%s21] sm:$0xff]
        %v2997 = vld [vmem:[%s21 + $0x8] sm:$0xff]
        %v2998 = vld [vmem:[%s21 + $0x10] sm:$0xff]
        %v2999 = vld [vmem:[%s21 + $0x18] sm:$0xff]
        %v3000 = vld [vmem:[%s21 + $0x20] sm:$0xff]
        %v3001 = vld [vmem:[%s21 + $0x28] sm:$0xff]
        %v3002 = vld [vmem:[%s21 + $0x30] sm:$0xff]
        %v3003 = vld [vmem:[%s21 + $0x38] sm:$0xff]
        %v3004 = vld [vmem:[%s21 + $0x40] sm:$0xff]
        %v3005 = vld [vmem:[%s21 + $0x48] sm:$0xff]
        %v3006 = vld [vmem:[%s21 + $0x50] sm:$0xff]
        %v3007 = vld [vmem:[%s21 + $0x58] sm:$0xff]
        %v3008 = vld [vmem:[%s21 + $0x60] sm:$0xff]
        %v3009 = vld [vmem:[%s21 + $0x68] sm:$0xff]
        %v3010 = vld [vmem:[%s21 + $0x70] sm:$0xff]
        %v3011 = vld [vmem:[%s21 + $0x78] sm:$0xff]
        %v3012 = vld [vmem:[%s21 + $0x80] sm:$0xff]
        %v3013 = vld [vmem:[%s21 + $0x88] sm:$0xff]
        %v3014 = vld [vmem:[%s21 + $0x90] sm:$0xff]
        %v3015 = vld [vmem:[%s21 + $0x98] sm:$0xff]
        %v3016 = vld [vmem:[%s21 + $0xa0] sm:$0xff]
        %v3017 = vld [vmem:[%s21 + $0xa8] sm:$0xff]
        %v3018 = vld [vmem:[%s21 + $0xb0] sm:$0xff]
        %v3019 = vld [vmem:[%s21 + $0xb8] sm:$0xff]
        %v3021 = vsel %vm891, %v2993, 0
        %v3024 = vsel %vm891, %v2995, 0
        %3026 = vmatprep.subr.mxu0 0.0
        %3027 = vmatpush1.msra.mxu0 %v2996
        %3028 = vmatprep.subr.mxu0 0.0
        %3029 = vmatpush1.msra.mxu0 %v2997
        %3030 = vmatprep.subr.mxu0 0.0
        %3031 = vmatpush1.msra.mxu0 %v2998
        %3032 = vmatprep.subr.mxu0 0.0
        %3033 = vmatpush1.msra.mxu0 %v2999
        %3034 = vmatprep.subr.mxu0 0.0
        %3035 = vmatpush1.msra.mxu0 %v3000
        %3036 = vmatprep.subr.mxu0 0.0
        %3037 = vmatpush1.msra.mxu0 %v3001
        %3038 = vmatprep.subr.mxu0 0.0
        %3039 = vmatpush1.msra.mxu0 %v3002
        %3040 = vmatprep.subr.mxu0 0.0
        %3041 = vmatpush1.msra.mxu0 %v3003
        %3042 = vmatprep.subr.mxu0 0.0
        %3043 = vmatpush1.msra.mxu0 %v3004
        %3044 = vmatprep.subr.mxu0 0.0
        %3045 = vmatpush1.msra.mxu0 %v3005
        %3046 = vmatprep.subr.mxu0 0.0
        %3047 = vmatpush1.msra.mxu0 %v3006
        %3048 = vmatprep.subr.mxu0 0.0
        %3049 = vmatpush1.msra.mxu0 %v3007
        %3050 = vmatprep.subr.mxu0 0.0
        %3051 = vmatpush1.msra.mxu0 %v3008
        %3052 = vmatprep.subr.mxu0 0.0
        %3053 = vmatpush1.msra.mxu0 %v3009
        %3054 = vmatprep.subr.mxu0 0.0
        %3055 = vmatpush1.msra.mxu0 %v3010
        %3056 = vmatprep.subr.mxu0 0.0
        %3057 = vmatpush1.msra.mxu0 %v3011
        %3058 = vmatprep.subr.mxu0 0.0
        %3059 = vmatpush1.msra.mxu0 %v3012
        %3060 = vmatprep.subr.mxu0 0.0
        %3061 = vmatpush1.msra.mxu0 %v3013
        %3062 = vmatprep.subr.mxu0 0.0
        %3063 = vmatpush1.msra.mxu0 %v3014
        %3064 = vmatprep.subr.mxu0 0.0
        %3065 = vmatpush1.msra.mxu0 %v3015
        %3066 = vmatprep.subr.mxu0 0.0
        %3067 = vmatpush1.msra.mxu0 %v3016
        %3068 = vmatprep.subr.mxu0 0.0
        %3069 = vmatpush1.msra.mxu0 %v3017
        %3070 = vmatprep.subr.mxu0 0.0
        %3071 = vmatpush1.msra.mxu0 %v3018
        %3072 = vmatprep.subr.mxu0 0.0
        %3073 = vmatpush1.msra.mxu0 %v3019
        %3074 = vmatprep.subr.mxu0 0.0
        %3075 = vmatpush1.msra.mxu0 0.0
        %3076 = vmatprep.subr.mxu0 0.0
        %3077 = vmatpush1.msra.mxu0 0.0
        %3078 = vmatprep.subr.mxu0 0.0
        %3079 = vmatpush1.msra.mxu0 0.0
        %3080 = vmatprep.subr.mxu0 0.0
        %3081 = vmatpush1.msra.mxu0 0.0
        %3082 = vmatprep.subr.mxu0 0.0
        %3083 = vmatpush1.msra.mxu0 0.0
        %3084 = vmatprep.subr.mxu0 0.0
        %3085 = vmatpush1.msra.mxu0 0.0
        %3086 = vmatprep.subr.mxu0 0.0
        %3087 = vmatpush1.msra.mxu0 0.0
        %3088 = vmatprep.subr.mxu0 0.0
        %3089 = vmatpush1.msra.mxu0 0.0
        %3090 = vmatprep.mubr.f32.mxu0 %v3021
        %3091 = vmatmul.mubr.f32.gmra.mrb[0].mxu0 %v2992
        %v3092 = vpop.f32.mrb[0].mxu0
        %v3093 = vadd.f32 0.0, %v3092
        %v3094 = vpop.f32.mrb[0].mxu0
        %3095 = vmatprep.mubr.f32.mxu0 %v3024
        %3096 = vmatmul.mubr.f32.gmra.mrb[0].mxu0 %v2994
        %v3097 = vpop.f32.mrb[0].mxu0
        %v3098 = vpop.f32.mrb[0].mxu0
        %3099 = vdwg.mxu0
        %v3100 = vadd.f32 %v2807, %v3093
        %v3101 = vld [vmem:[%s22] sm:$0x1]
        %v3103 = vlaneseq
        %v3104 = vshrl.u32 %v3103, 7
        %v3105 = vsub.s32 0, %v3104
        %v3106 = vrot.slane %v3101, %v3105
        %v3108 = vadd.f32 %v3100, %v3106
        %v3109 = vsel %vm1099, %v3108, 0.0
        %3110 = vadd.xlane.f32.xlu0 %v3109
        %v3111 = vpop.xlane.xlu0 %3110
        %v3112 = vmul.f32 %v3111, %v1103
        %v3113 = vsub.f32 %v3108, %v3112
        %v3114 = vmul.f32 %v3113, %v3113
        %v3115 = vsel %vm1099, %v3114, 0.0
        %3116 = vadd.xlane.f32.xlu0 %v3115
        %v3117 = vpop.xlane.xlu0 %3116
        %v3118 = vmul.f32 %v3117, %v1103
        %v3119 = vadd.f32 %v3118, 1e-05
        %v3120 = vrsqrt.pop %v3119
        %v3121 = vmul.f32 %v3113, %v3120
        %v3122 = vld [vmem:[%s23] sm:$0x1]
        %v3123 = vmul.f32 %v3121, %v3122
        %v3124 = vld [vmem:[%s24] sm:$0x1]
        %v3125 = vadd.f32 %v3123, %v3124
        %v3126 = vld [vmem:[%s25] sm:$0xff]
        %v3127 = vld [vmem:[%s25 + $0x8] sm:$0xff]
        %v3128 = vld [vmem:[%s25 + $0x10] sm:$0xff]
        %v3129 = vld [vmem:[%s25 + $0x18] sm:$0xff]
        %v3130 = vld [vmem:[%s25 + $0x20] sm:$0xff]
        %v3131 = vld [vmem:[%s25 + $0x28] sm:$0xff]
        %v3132 = vld [vmem:[%s26] sm:$0x1]
        %v3134 = vsel %vm1095, %v3125, 0
        %3136 = vmatprep.subr.mxu0 0.0
        %3137 = vmatpush1.msra.mxu0 %v3126
        %3138 = vmatprep.subr.mxu0 0.0
        %3139 = vmatpush1.msra.mxu0 %v3127
        %3140 = vmatprep.subr.mxu0 0.0
        %3141 = vmatpush1.msra.mxu0 %v3128
        %3142 = vmatprep.subr.mxu0 0.0
        %3143 = vmatpush1.msra.mxu0 %v3129
        %3144 = vmatprep.subr.mxu0 0.0
        %3145 = vmatpush1.msra.mxu0 %v3130
        %3146 = vmatprep.subr.mxu0 0.0
        %3147 = vmatpush1.msra.mxu0 %v3131
        %3148 = vmatprep.subr.mxu0 0.0
        %3149 = vmatpush1.msra.mxu0 0.0
        %3150 = vmatprep.subr.mxu0 0.0
        %3151 = vmatpush1.msra.mxu0 0.0
        %3152 = vmatprep.subr.mxu0 0.0
        %3153 = vmatpush1.msra.mxu0 0.0
        %3154 = vmatprep.subr.mxu0 0.0
        %3155 = vmatpush1.msra.mxu0 0.0
        %3156 = vmatprep.subr.mxu0 0.0
        %3157 = vmatpush1.msra.mxu0 0.0
        %3158 = vmatprep.subr.mxu0 0.0
        %3159 = vmatpush1.msra.mxu0 0.0
        %3160 = vmatprep.subr.mxu0 0.0
        %3161 = vmatpush1.msra.mxu0 0.0
        %3162 = vmatprep.subr.mxu0 0.0
        %3163 = vmatpush1.msra.mxu0 0.0
        %3164 = vmatprep.subr.mxu0 0.0
        %3165 = vmatpush1.msra.mxu0 0.0
        %3166 = vmatprep.subr.mxu0 0.0
        %3167 = vmatpush1.msra.mxu0 0.0
        %3168 = vmatprep.subr.mxu0 0.0
        %3169 = vmatpush1.msra.mxu0 0.0
        %3170 = vmatprep.subr.mxu0 0.0
        %3171 = vmatpush1.msra.mxu0 0.0
        %3172 = vmatprep.subr.mxu0 0.0
        %3173 = vmatpush1.msra.mxu0 0.0
        %3174 = vmatprep.subr.mxu0 0.0
        %3175 = vmatpush1.msra.mxu0 0.0
        %3176 = vmatprep.subr.mxu0 0.0
        %3177 = vmatpush1.msra.mxu0 0.0
        %3178 = vmatprep.subr.mxu0 0.0
        %3179 = vmatpush1.msra.mxu0 0.0
        %3180 = vmatprep.subr.mxu0 0.0
        %3181 = vmatpush1.msra.mxu0 0.0
        %3182 = vmatprep.subr.mxu0 0.0
        %3183 = vmatpush1.msra.mxu0 0.0
        %3184 = vmatprep.subr.mxu0 0.0
        %3185 = vmatpush1.msra.mxu0 0.0
        %3186 = vmatprep.subr.mxu0 0.0
        %3187 = vmatpush1.msra.mxu0 0.0
        %3188 = vmatprep.subr.mxu0 0.0
        %3189 = vmatpush1.msra.mxu0 0.0
        %3190 = vmatprep.subr.mxu0 0.0
        %3191 = vmatpush1.msra.mxu0 0.0
        %3192 = vmatprep.subr.mxu0 0.0
        %3193 = vmatpush1.msra.mxu0 0.0
        %3194 = vmatprep.subr.mxu0 0.0
        %3195 = vmatpush1.msra.mxu0 0.0
        %3196 = vmatprep.subr.mxu0 0.0
        %3197 = vmatpush1.msra.mxu0 0.0
        %3198 = vmatprep.subr.mxu0 0.0
        %3199 = vmatpush1.msra.mxu0 0.0
        %3200 = vmatprep.mubr.f32.mxu0 0.0
        %3201 = vmatmul.mubr.f32.gmra.mrb[0].mxu0 %v3134
        %v3202 = vpop.f32.mrb[0].mxu0
        %v3203 = vadd.f32 %v3132, %v3202
        %v3204 = vpop.f32.mrb[0].mxu0
        %3205 = vdwg.mxu0
        %3206 = vst [vmem:[%s838] sm:$0x1] %v3203
        %s3207 = sand.u32 %s623, 1
        %s3208 = scalar_lea.sflag [#allocation4], %s3207
        %s3209 = sand.u32 %s623, 1
        %s3210 = scalar_lea.vmem [#allocation3], %s3209
        %p3211 = scmp.lt.s32.totalorder %s43, 1
        %s3212 = scalar_select %p3211, %s43, 1
        %s3213 = smul.addr %s3212, 7
        %s3214 = smul.addr %s3213, 8
        %s3215 = scalar_lea.vmem %s28, %s3214
        // Predicated region
        $region129: #{transformer_mil_forward.1} parent=127 // pred_check
          %p3216 = pneg %p633
        $region130: #{transformer_mil_forward.1} parent=127 // pred_check_branch
          %3218 = sbr.rel (%p3216) target = $region132
        $region131: #{transformer_mil_forward.1} parent=127 // pred_region
          %s3220 = ssub.s32 16, 16
          %3221 = vsyncadd %s3208, %s3220
          %s3222 = smul.addr %s43, 16
          %s3223 = scalar_lea.hbm %s27, %s3222
          %s3225 = sshll.u32 %s3210, 4
          %s3226 = int_to_ptr.vmem [resolvable:$true] %s3225
          %3228 = dma.vmem_to_hbm [thread:$0]  %s3226, 16, %s3223, %s3208
        $region132: #{transformer_mil_forward.1} parent=127 // pred_fallthru
          _
        // Predicated region
        $region133: #{transformer_mil_forward.1} parent=127 // pred_check
          %p3229 = pneg %p659
        $region134: #{transformer_mil_forward.1} parent=127 // pred_check_branch
          %3231 = sbr.rel (%p3229) target = $region136
        $region135: #{transformer_mil_forward.1} parent=127 // pred_region
          _
        $region136: #{transformer_mil_forward.1} parent=127 // pred_fallthru
          _
      $region128: #{transformer_mil_forward.1} parent=5 // pred_fallthru
        _
      %p3232 = scmp.le.s32.totalorder 2, %s38
      // Predicated region
      $region137: #{transformer_mil_forward.1} parent=5 // pred_check
        %p3233 = pneg %p3232
      $region138: #{transformer_mil_forward.1} parent=5 // pred_check_branch
        %3235 = sbr.rel (%p3233) target = $region140
      $region139: #{transformer_mil_forward.1} parent=5 // pred_region
        %s3236 = ssub.s32 %s38, 2
        // Predicated region
        $region141: #{transformer_mil_forward.1} parent=139 // pred_check
          %p3237 = pneg %p639
        $region142: #{transformer_mil_forward.1} parent=139 // pred_check_branch
          %3239 = sbr.rel (%p3237) target = $region144
        $region143: #{transformer_mil_forward.1} parent=139 // pred_region
          %s3240 = sand.u32 %s624, 1
          %s3241 = scalar_lea.sflag [#allocation4], %s3240
          %s3242 = sand.u32 %s624, 1
          %s3243 = scalar_lea.vmem [#allocation3], %s3242
          %3244 = dma.done %s3241, 16
        $region144: #{transformer_mil_forward.1} parent=139 // pred_fallthru
          _
        // Predicated region
        $region145: #{transformer_mil_forward.1} parent=139 // pred_check
          %p3245 = pneg %p665
        $region146: #{transformer_mil_forward.1} parent=139 // pred_check_branch
          %3247 = sbr.rel (%p3245) target = $region148
        $region147: #{transformer_mil_forward.1} parent=139 // pred_region
          %p3248 = scmp.lt.s32.totalorder %s44, 1
          %s3249 = scalar_select %p3248, %s44, 1
          %s3250 = smul.addr %s3249, 7
          %s3251 = smul.addr %s3250, 8
          %s3252 = scalar_lea.vmem %s28, %s3251
        $region148: #{transformer_mil_forward.1} parent=139 // pred_fallthru
          _
      $region140: #{transformer_mil_forward.1} parent=5 // pred_fallthru
        _
    $region6: #{transformer_mil_forward.1} parent=1 // loop_footer
      %s42 = sadd.s32 1, %s38
    $region7: #{transformer_mil_forward.1} parent=1 // loop_footer_branch
      %37 = sbr.rel target = $region3
    $region8: #{transformer_mil_forward.1} parent=1 // loop_exit
      _
    %3253 = vsyncpa [#allocation4], 1
    %s3254 = scalar_lea.sflag [#allocation4], 1
    %3255 = vsyncpa %s3254, 1

</llo_original>
